<compile_context>
chip_gen: v7x
topology: tpu7x:2x2x1
jax: 0.10.0
libtpu: 0.0.40
codegen_flags: <defaults>
</compile_context>

<pallas_src>
import functools
import math

import jax
import jax.numpy as jnp
from jax.experimental import pallas as pl
from jax.experimental.pallas import tpu as pltpu


# ----------------------------- in-kernel helpers -----------------------------

def _layer_norm_f32(x, gamma, beta, eps):
    # Matches the PyTorch reference exactly: x.std(-1) is unbiased (ddof=1)
    # and eps is added to std (not to variance).
    d = x.shape[-1]
    mean = jnp.mean(x, axis=-1, keepdims=True)
    diff = x - mean
    var = jnp.sum(diff * diff, axis=-1, keepdims=True) / (d - 1)
    std = jnp.sqrt(var)
    return gamma * diff / (std + eps) + beta


# ------------------------------ fused layer kernel ----------------------------

def _decoder_layer_kernel(
    x_ref, mem_ref, tmask_ref, smask_ref,
    ln1_g_ref, ln1_b_ref, wqkv_ref, bqkv_ref, wo1_ref, bo1_ref,
    ln2_g_ref, ln2_b_ref, wq2_ref, bq2_ref, wkv2_ref, bkv2_ref, wo2_ref, bo2_ref,
    ln3_g_ref, ln3_b_ref, w1_ref, b1_ref, w2_ref, b2_ref,
    o_ref, *, n_heads, eps):
    f32 = jnp.float32
    bf16 = jnp.bfloat16

    x = x_ref[0].astype(f32)          # (S_t, D)   target activations
    mem = mem_ref[0].astype(f32)      # (S_s, D)   encoder memory
    tmask = tmask_ref[0]              # (S_t, S_t) causal/pad mask (1 keep, 0 drop)
    smask = smask_ref[0]              # (1, S_s)   source pad mask

    s_t, d_model = x.shape
    d_head = d_model // n_heads
    scale = 1.0 / math.sqrt(d_head)

    def matmul(a_f32, w_ref, b_ref):
        # bf16 operands on the MXU, f32 accumulation, f32 bias add.
        acc = jnp.dot(a_f32.astype(bf16), w_ref[...],
                      preferred_element_type=f32)
        return acc + b_ref[...]

    def attend(q2d, k2d, v2d, mask):
        # All heads in one kernel invocation; head split/merge are static lane
        # slices of the (S, D) slab, merged into a lane-dense (S_q, D) result.
        ctx = []
        for h in range(n_heads):
            sl = slice(h * d_head, (h + 1) * d_head)
            qh = (q2d[:, sl] * scale).astype(bf16)   # scale folded into Q
            kh = k2d[:, sl].astype(bf16)
            vh = v2d[:, sl].astype(bf16)
            s = jnp.dot(qh, kh.T, preferred_element_type=f32)   # (S_q, S_k) f32
            s = jnp.where(mask == 0.0, -1e9, s)                  # masked_fill
            s = s - jnp.max(s, axis=-1, keepdims=True)
            p = jnp.exp(s)
            denom = jnp.sum(p, axis=-1, keepdims=True)
            p = p * pl.reciprocal(denom, approx=True)            # EUP recip
            ctx.append(jnp.dot(p.astype(bf16), vh, preferred_element_type=f32))
        return jnp.concatenate(ctx, axis=-1)                     # (S_q, D)

    # --- sublayer 0: masked self-attention (fused QKV projection) -----------
    y = _layer_norm_f32(x, ln1_g_ref[...], ln1_b_ref[...], eps)
    qkv = matmul(y, wqkv_ref, bqkv_ref)                          # (S_t, 3D)
    ctx = attend(qkv[:, :d_model],
                 qkv[:, d_model:2 * d_model],
                 qkv[:, 2 * d_model:], tmask)
    x = x + matmul(ctx, wo1_ref, bo1_ref)

    # --- sublayer 1: cross-attention over encoder memory --------------------
    y = _layer_norm_f32(x, ln2_g_ref[...], ln2_b_ref[...], eps)
    q = matmul(y, wq2_ref, bq2_ref)                              # (S_t, D)
    kv = matmul(mem, wkv2_ref, bkv2_ref)                         # (S_s, 2D)
    ctx = attend(q, kv[:, :d_model], kv[:, d_model:], smask)
    x = x + matmul(ctx, wo2_ref, bo2_ref)

    # --- sublayer 2: position-wise feed-forward ------------------------------
    y = _layer_norm_f32(x, ln3_g_ref[...], ln3_b_ref[...], eps)
    h = jnp.maximum(matmul(y, w1_ref, b1_ref), 0.0)              # ReLU in f32
    x = x + matmul(h, w2_ref, b2_ref)

    o_ref[0] = x.astype(o_ref.dtype)


def _final_norm_kernel(x_ref, g_ref, b_ref, o_ref, *, eps):
    x = x_ref[0].astype(jnp.float32)
    y = _layer_norm_f32(x, g_ref[...], b_ref[...], eps)
    o_ref[0] = y.astype(o_ref.dtype)


# --------------------------------- wrappers ----------------------------------

def decoder_layer(x, memory, tgt_mask, src_mask, lp, *, n_heads, eps=1e-6):
    B, S_t, D = x.shape
    S_s = memory.shape[1]
    Dff = lp["w1"].shape[1]

    def full(shape):
        return pl.BlockSpec(shape, lambda b, _s=shape: (0,) * len(_s))

    in_specs = [
        pl.BlockSpec((1, S_t, D), lambda b: (b, 0, 0)),      # x
        pl.BlockSpec((1, S_s, D), lambda b: (b, 0, 0)),      # memory
        pl.BlockSpec((1, S_t, S_t), lambda b: (b, 0, 0)),    # target mask
        pl.BlockSpec((1, 1, S_s), lambda b: (b, 0, 0)),      # source mask
        full((1, D)), full((1, D)),                          # ln1 gamma/beta
        full((D, 3 * D)), full((1, 3 * D)),                  # fused QKV
        full((D, D)), full((1, D)),                          # self-attn out proj
        full((1, D)), full((1, D)),                          # ln2 gamma/beta
        full((D, D)), full((1, D)),                          # cross Q proj
        full((D, 2 * D)), full((1, 2 * D)),                  # cross fused KV
        full((D, D)), full((1, D)),                          # cross out proj
        full((1, D)), full((1, D)),                          # ln3 gamma/beta
        full((D, Dff)), full((1, Dff)),                      # ffn W1
        full((Dff, D)), full((1, D)),                        # ffn W2
    ]

    args = (x, memory, tgt_mask, src_mask,
            lp["ln1_g"], lp["ln1_b"], lp["w_qkv"], lp["b_qkv"],
            lp["w_o1"], lp["b_o1"],
            lp["ln2_g"], lp["ln2_b"], lp["w_q2"], lp["b_q2"],
            lp["w_kv2"], lp["b_kv2"], lp["w_o2"], lp["b_o2"],
            lp["ln3_g"], lp["ln3_b"], lp["w1"], lp["b1"], lp["w2"], lp["b2"])

    flops = B * (
        2 * S_t * D * (3 * D)        # fused QKV projection
        + 4 * S_t * S_t * D          # self-attention score + context
        + 2 * S_t * D * D            # self-attn output projection
        + 2 * S_t * D * D            # cross Q projection
        + 2 * S_s * D * (2 * D)      # cross fused KV projection
        + 4 * S_t * S_s * D          # cross-attention score + context
        + 2 * S_t * D * D            # cross output projection
        + 4 * S_t * D * Dff)         # FFN
    transcendentals = B * n_heads * (S_t * S_t + S_t * S_s)
    bytes_accessed = int(sum(a.size * a.dtype.itemsize for a in args)
                         + B * S_t * D * x.dtype.itemsize)

    return pl.pallas_call(
        functools.partial(_decoder_layer_kernel, n_heads=n_heads, eps=eps),
        out_shape=jax.ShapeDtypeStruct((B, S_t, D), x.dtype),
        grid=(B,),
        in_specs=in_specs,
        out_specs=pl.BlockSpec((1, S_t, D), lambda b: (b, 0, 0)),
        compiler_params=pltpu.CompilerParams(
            dimension_semantics=("parallel",)),
        cost_estimate=pl.CostEstimate(flops=int(flops),
                                      transcendentals=int(transcendentals),
                                      bytes_accessed=bytes_accessed),
    )(*args)


def final_layer_norm(x, gamma, beta, eps=1e-6):
    B, S, D = x.shape
    return pl.pallas_call(
        functools.partial(_final_norm_kernel, eps=eps),
        out_shape=jax.ShapeDtypeStruct((B, S, D), x.dtype),
        grid=(B,),
        in_specs=[pl.BlockSpec((1, S, D), lambda b: (b, 0, 0)),
                  pl.BlockSpec((1, D), lambda b: (0, 0)),
                  pl.BlockSpec((1, D), lambda b: (0, 0))],
        out_specs=pl.BlockSpec((1, S, D), lambda b: (b, 0, 0)),
        compiler_params=pltpu.CompilerParams(
            dimension_semantics=("parallel",)),
    )(x, gamma, beta)


def decoder_forward(x, memory, src_mask, tgt_mask, params):
    n_heads = params["n_heads"]
    for lp in params["layers"]:
        x = decoder_layer(x, memory, tgt_mask, src_mask, lp, n_heads=n_heads)
    return final_layer_norm(x, params["norm_g"], params["norm_b"])


# ---------------------------- deterministic params ---------------------------

def init_params(key, n_layers, d_model, n_heads, d_ff):
    def dense(k, din, dout):
        # Weights stored in bf16 (MXU operands / halved DMA); biases in f32.
        w = (jax.random.normal(k, (din, dout), jnp.float32) * 0.02
             ).astype(jnp.bfloat16)
        b = jnp.zeros((1, dout), jnp.float32)
        return w, b

    ones = lambda: jnp.ones((1, d_model), jnp.float32)
    zeros = lambda: jnp.zeros((1, d_model), jnp.float32)

    layers = []
    for _ in range(n_layers):
        keys = jax.random.split(key, 8)
        key = keys[0]
        w_qkv, b_qkv = dense(keys[1], d_model, 3 * d_model)   # fused Q|K|V
        w_o1, b_o1 = dense(keys[2], d_model, d_model)
        w_q2, b_q2 = dense(keys[3], d_model, d_model)
        w_kv2, b_kv2 = dense(keys[4], d_model, 2 * d_model)   # fused K|V (mem)
        w_o2, b_o2 = dense(keys[5], d_model, d_model)
        w1, b1 = dense(keys[6], d_model, d_ff)
        w2, b2 = dense(keys[7], d_ff, d_model)
        layers.append({
            "ln1_g": ones(), "ln1_b": zeros(),
            "w_qkv": w_qkv, "b_qkv": b_qkv, "w_o1": w_o1, "b_o1": b_o1,
            "ln2_g": ones(), "ln2_b": zeros(),
            "w_q2": w_q2, "b_q2": b_q2, "w_kv2": w_kv2, "b_kv2": b_kv2,
            "w_o2": w_o2, "b_o2": b_o2,
            "ln3_g": ones(), "ln3_b": zeros(),
            "w1": w1, "b1": b1, "w2": w2, "b2": b2,
        })
    return {
        "layers": layers,
        "n_heads": n_heads,
        "norm_g": ones(),    # final LayerNorm a_2
        "norm_b": zeros(),   # final LayerNorm b_2
    }


# ------------------------------------ main ------------------------------------

if __name__ == "__main__":
    B, S_T, S_S, D, H, DFF, N_LAYERS = 2, 8, 10, 32, 4, 64, 2

    key = jax.random.PRNGKey(0)
    k_x, k_m, k_p = jax.random.split(key, 3)

    x = jax.random.normal(k_x, (B, S_T, D), jnp.float32)          # target tokens
    memory = jax.random.normal(k_m, (B, S_S, D), jnp.float32)     # encoder memory

    # src pad mask (B, 1, S_S): 1 = attend, 0 = padded position.
    src_mask = jnp.ones((B, 1, S_S), jnp.float32).at[1, 0, 7:].set(0.0)
    # target mask (B, S_T, S_T): causal (subsequent-position) mask.
    tgt_mask = jnp.broadcast_to(
        jnp.tril(jnp.ones((S_T, S_T), jnp.float32)), (B, S_T, S_T))

    params = init_params(k_p, N_LAYERS, D, H, DFF)

    out = decoder_forward(x, memory, src_mask, tgt_mask, params)
    out = jax.block_until_ready(out)

    assert out.shape == (B, S_T, D) and out.dtype == jnp.float32
    assert bool(jnp.all(jnp.isfinite(out)))
    print("KERNEL_OK")
</pallas_src>

<mosaic_0001>
module attributes {stable_mosaic.version = 11 : i64} {
  func.func @_decoder_layer_kernel(%arg0: i32, %arg1: memref<1x8x32xf32, #tpu.memory_space<vmem>>, %arg2: memref<1x10x32xf32, #tpu.memory_space<vmem>>, %arg3: memref<1x8x8xf32, #tpu.memory_space<vmem>>, %arg4: memref<1x1x10xf32, #tpu.memory_space<vmem>>, %arg5: memref<1x32xf32, #tpu.memory_space<vmem>>, %arg6: memref<1x32xf32, #tpu.memory_space<vmem>>, %arg7: memref<32x96xbf16, #tpu.memory_space<vmem>>, %arg8: memref<1x96xf32, #tpu.memory_space<vmem>>, %arg9: memref<32x32xbf16, #tpu.memory_space<vmem>>, %arg10: memref<1x32xf32, #tpu.memory_space<vmem>>, %arg11: memref<1x32xf32, #tpu.memory_space<vmem>>, %arg12: memref<1x32xf32, #tpu.memory_space<vmem>>, %arg13: memref<32x32xbf16, #tpu.memory_space<vmem>>, %arg14: memref<1x32xf32, #tpu.memory_space<vmem>>, %arg15: memref<32x64xbf16, #tpu.memory_space<vmem>>, %arg16: memref<1x64xf32, #tpu.memory_space<vmem>>, %arg17: memref<32x32xbf16, #tpu.memory_space<vmem>>, %arg18: memref<1x32xf32, #tpu.memory_space<vmem>>, %arg19: memref<1x32xf32, #tpu.memory_space<vmem>>, %arg20: memref<1x32xf32, #tpu.memory_space<vmem>>, %arg21: memref<32x64xbf16, #tpu.memory_space<vmem>>, %arg22: memref<1x64xf32, #tpu.memory_space<vmem>>, %arg23: memref<64x32xbf16, #tpu.memory_space<vmem>>, %arg24: memref<1x32xf32, #tpu.memory_space<vmem>>, %arg25: memref<1x8x32xf32, #tpu.memory_space<vmem>>) attributes {dimension_semantics = [#tpu.dimension_semantics<parallel>], iteration_bounds = array<i64: 2>, scalar_prefetch = 0 : i64, scratch_operands = 0 : i64, tpu.core_type = #tpu.core_type<tc>, window_params = [{transform_indices = @transform_0, window_bounds = array<i64: 1, 8, 32>}, {transform_indices = @transform_1, window_bounds = array<i64: 1, 10, 32>}, {transform_indices = @transform_2, window_bounds = array<i64: 1, 8, 8>}, {transform_indices = @transform_3, window_bounds = array<i64: 1, 1, 10>}, {pipeline_mode = #tpu.pipeline_mode<synchronous>, transform_indices = @transform_4, window_bounds = array<i64: 1, 32>}, {pipeline_mode = #tpu.pipeline_mode<synchronous>, transform_indices = @transform_5, window_bounds = array<i64: 1, 32>}, {pipeline_mode = #tpu.pipeline_mode<synchronous>, transform_indices = @transform_6, window_bounds = array<i64: 32, 96>}, {pipeline_mode = #tpu.pipeline_mode<synchronous>, transform_indices = @transform_7, window_bounds = array<i64: 1, 96>}, {pipeline_mode = #tpu.pipeline_mode<synchronous>, transform_indices = @transform_8, window_bounds = array<i64: 32, 32>}, {pipeline_mode = #tpu.pipeline_mode<synchronous>, transform_indices = @transform_9, window_bounds = array<i64: 1, 32>}, {pipeline_mode = #tpu.pipeline_mode<synchronous>, transform_indices = @transform_10, window_bounds = array<i64: 1, 32>}, {pipeline_mode = #tpu.pipeline_mode<synchronous>, transform_indices = @transform_11, window_bounds = array<i64: 1, 32>}, {pipeline_mode = #tpu.pipeline_mode<synchronous>, transform_indices = @transform_12, window_bounds = array<i64: 32, 32>}, {pipeline_mode = #tpu.pipeline_mode<synchronous>, transform_indices = @transform_13, window_bounds = array<i64: 1, 32>}, {pipeline_mode = #tpu.pipeline_mode<synchronous>, transform_indices = @transform_14, window_bounds = array<i64: 32, 64>}, {pipeline_mode = #tpu.pipeline_mode<synchronous>, transform_indices = @transform_15, window_bounds = array<i64: 1, 64>}, {pipeline_mode = #tpu.pipeline_mode<synchronous>, transform_indices = @transform_16, window_bounds = array<i64: 32, 32>}, {pipeline_mode = #tpu.pipeline_mode<synchronous>, transform_indices = @transform_17, window_bounds = array<i64: 1, 32>}, {pipeline_mode = #tpu.pipeline_mode<synchronous>, transform_indices = @transform_18, window_bounds = array<i64: 1, 32>}, {pipeline_mode = #tpu.pipeline_mode<synchronous>, transform_indices = @transform_19, window_bounds = array<i64: 1, 32>}, {pipeline_mode = #tpu.pipeline_mode<synchronous>, transform_indices = @transform_20, window_bounds = array<i64: 32, 64>}, {pipeline_mode = #tpu.pipeline_mode<synchronous>, transform_indices = @transform_21, window_bounds = array<i64: 1, 64>}, {pipeline_mode = #tpu.pipeline_mode<synchronous>, transform_indices = @transform_22, window_bounds = array<i64: 64, 32>}, {pipeline_mode = #tpu.pipeline_mode<synchronous>, transform_indices = @transform_23, window_bounds = array<i64: 1, 32>}, {transform_indices = @transform_24, window_bounds = array<i64: 1, 8, 32>}]} {
    %c0 = arith.constant 0 : index
    %c0_0 = arith.constant 0 : index
    %c0_1 = arith.constant 0 : index
    %0 = vector.load %arg1[%c0, %c0_0, %c0_1] : memref<1x8x32xf32, #tpu.memory_space<vmem>>, vector<1x8x32xf32>
    %1 = vector.shape_cast %0 : vector<1x8x32xf32> to vector<8x32xf32>
    %c0_2 = arith.constant 0 : index
    %c0_3 = arith.constant 0 : index
    %c0_4 = arith.constant 0 : index
    %2 = vector.load %arg2[%c0_2, %c0_3, %c0_4] : memref<1x10x32xf32, #tpu.memory_space<vmem>>, vector<1x10x32xf32>
    %3 = vector.shape_cast %2 : vector<1x10x32xf32> to vector<10x32xf32>
    %c0_5 = arith.constant 0 : index
    %c0_6 = arith.constant 0 : index
    %c0_7 = arith.constant 0 : index
    %4 = vector.load %arg3[%c0_5, %c0_6, %c0_7] : memref<1x8x8xf32, #tpu.memory_space<vmem>>, vector<1x8x8xf32>
    %5 = vector.shape_cast %4 : vector<1x8x8xf32> to vector<8x8xf32>
    %c0_8 = arith.constant 0 : index
    %c0_9 = arith.constant 0 : index
    %c0_10 = arith.constant 0 : index
    %6 = vector.load %arg4[%c0_8, %c0_9, %c0_10] : memref<1x1x10xf32, #tpu.memory_space<vmem>>, vector<1x1x10xf32>
    %7 = vector.shape_cast %6 : vector<1x1x10xf32> to vector<1x10xf32>
    %c0_11 = arith.constant 0 : index
    %c0_12 = arith.constant 0 : index
    %8 = vector.load %arg5[%c0_11, %c0_12] : memref<1x32xf32, #tpu.memory_space<vmem>>, vector<1x32xf32>
    %c0_13 = arith.constant 0 : index
    %c0_14 = arith.constant 0 : index
    %9 = vector.load %arg6[%c0_13, %c0_14] : memref<1x32xf32, #tpu.memory_space<vmem>>, vector<1x32xf32>
    %cst = arith.constant dense<0.000000e+00> : vector<8xf32>
    %10 = vector.multi_reduction <add>, %1, %cst [1] : vector<8x32xf32> to vector<8xf32>
    %11 = vector.shape_cast %10 : vector<8xf32> to vector<8x1xf32>
    %cst_15 = arith.constant 3.200000e+01 : f32
    %12 = vector.broadcast %cst_15 : f32 to vector<8x1xf32>
    %13 = arith.divf %11, %12 : vector<8x1xf32>
    %14 = vector.broadcast %13 : vector<8x1xf32> to vector<8x32xf32>
    %15 = arith.subf %1, %14 : vector<8x32xf32>
    %16 = arith.mulf %15, %15 : vector<8x32xf32>
    %cst_16 = arith.constant dense<0.000000e+00> : vector<8xf32>
    %17 = vector.multi_reduction <add>, %16, %cst_16 [1] : vector<8x32xf32> to vector<8xf32>
    %18 = vector.shape_cast %17 : vector<8xf32> to vector<8x1xf32>
    %cst_17 = arith.constant 3.100000e+01 : f32
    %19 = vector.broadcast %cst_17 : f32 to vector<8x1xf32>
    %20 = arith.divf %18, %19 : vector<8x1xf32>
    %21 = math.sqrt %20 : vector<8x1xf32>
    %22 = vector.broadcast %8 : vector<1x32xf32> to vector<8x32xf32>
    %23 = arith.mulf %22, %15 : vector<8x32xf32>
    %cst_18 = arith.constant 9.99999997E-7 : f32
    %24 = vector.broadcast %cst_18 : f32 to vector<8x1xf32>
    %25 = arith.addf %21, %24 : vector<8x1xf32>
    %26 = vector.broadcast %25 : vector<8x1xf32> to vector<8x32xf32>
    %27 = arith.divf %23, %26 : vector<8x32xf32>
    %28 = vector.broadcast %9 : vector<1x32xf32> to vector<8x32xf32>
    %29 = arith.addf %27, %28 : vector<8x32xf32>
    %30 = arith.truncf %29 : vector<8x32xf32> to vector<8x32xbf16>
    %c0_19 = arith.constant 0 : index
    %c0_20 = arith.constant 0 : index
    %31 = vector.load %arg7[%c0_19, %c0_20] : memref<32x96xbf16, #tpu.memory_space<vmem>>, vector<32x96xbf16>
    %cst_21 = arith.constant dense<0.000000e+00> : vector<8x96xf32>
    %32 = tpu.matmul %30, %31, %cst_21 {dimension_numbers = #tpu.dot_dimension_numbers<[1], [0], [0], [1], [0, 0, 1, 1], [], []>} : vector<8x32xbf16>, vector<32x96xbf16>, vector<8x96xf32> -> vector<8x96xf32>
    %c0_22 = arith.constant 0 : index
    %c0_23 = arith.constant 0 : index
    %33 = vector.load %arg8[%c0_22, %c0_23] : memref<1x96xf32, #tpu.memory_space<vmem>>, vector<1x96xf32>
    %34 = vector.broadcast %33 : vector<1x96xf32> to vector<8x96xf32>
    %35 = arith.addf %32, %34 : vector<8x96xf32>
    %36 = vector.extract_strided_slice %35 {offsets = [0, 0], sizes = [8, 32], strides = [1, 1]} : vector<8x96xf32> to vector<8x32xf32>
    %37 = vector.extract_strided_slice %35 {offsets = [0, 32], sizes = [8, 32], strides = [1, 1]} : vector<8x96xf32> to vector<8x32xf32>
    %38 = vector.extract_strided_slice %35 {offsets = [0, 64], sizes = [8, 32], strides = [1, 1]} : vector<8x96xf32> to vector<8x32xf32>
    %39 = vector.extract_strided_slice %36 {offsets = [0, 0], sizes = [8, 8], strides = [1, 1]} : vector<8x32xf32> to vector<8x8xf32>
    %cst_24 = arith.constant 0.353553385 : f32
    %40 = vector.broadcast %cst_24 : f32 to vector<8x8xf32>
    %41 = arith.mulf %39, %40 : vector<8x8xf32>
    %42 = arith.truncf %41 : vector<8x8xf32> to vector<8x8xbf16>
    %43 = vector.extract_strided_slice %37 {offsets = [0, 0], sizes = [8, 8], strides = [1, 1]} : vector<8x32xf32> to vector<8x8xf32>
    %44 = arith.truncf %43 : vector<8x8xf32> to vector<8x8xbf16>
    %45 = vector.extract_strided_slice %38 {offsets = [0, 0], sizes = [8, 8], strides = [1, 1]} : vector<8x32xf32> to vector<8x8xf32>
    %46 = arith.truncf %45 : vector<8x8xf32> to vector<8x8xbf16>
    %47 = tpu.transpose %44, [1, 0] : vector<8x8xbf16> -> vector<8x8xbf16>
    %cst_25 = arith.constant dense<0.000000e+00> : vector<8x8xf32>
    %48 = tpu.matmul %42, %47, %cst_25 {dimension_numbers = #tpu.dot_dimension_numbers<[1], [0], [0], [1], [0, 0, 1, 1], [], []>} : vector<8x8xbf16>, vector<8x8xbf16>, vector<8x8xf32> -> vector<8x8xf32>
    %cst_26 = arith.constant 0.000000e+00 : f32
    %49 = vector.broadcast %cst_26 : f32 to vector<8x8xf32>
    %50 = arith.cmpf oeq, %5, %49 : vector<8x8xf32>
    %cst_27 = arith.constant -1.000000e+09 : f32
    %51 = vector.broadcast %cst_27 : f32 to vector<8x8xf32>
    %52 = arith.select %50, %51, %48 : vector<8x8xi1>, vector<8x8xf32>
    %cst_28 = arith.constant dense<0xFF800000> : vector<8xf32>
    %53 = vector.multi_reduction <maximumf>, %52, %cst_28 [1] : vector<8x8xf32> to vector<8xf32>
    %54 = vector.shape_cast %53 : vector<8xf32> to vector<8x1xf32>
    %55 = vector.broadcast %54 : vector<8x1xf32> to vector<8x8xf32>
    %56 = arith.subf %52, %55 : vector<8x8xf32>
    %57 = math.exp %56 : vector<8x8xf32>
    %cst_29 = arith.constant dense<0.000000e+00> : vector<8xf32>
    %58 = vector.multi_reduction <add>, %57, %cst_29 [1] : vector<8x8xf32> to vector<8xf32>
    %59 = vector.shape_cast %58 : vector<8xf32> to vector<8x1xf32>
    %60 = tpu.reciprocal %59 {approx = true} : vector<8x1xf32> -> vector<8x1xf32>
    %61 = vector.broadcast %60 : vector<8x1xf32> to vector<8x8xf32>
    %62 = arith.mulf %57, %61 : vector<8x8xf32>
    %63 = arith.truncf %62 : vector<8x8xf32> to vector<8x8xbf16>
    %cst_30 = arith.constant dense<0.000000e+00> : vector<8x8xf32>
    %64 = tpu.matmul %63, %46, %cst_30 {dimension_numbers = #tpu.dot_dimension_numbers<[1], [0], [0], [1], [0, 0, 1, 1], [], []>} : vector<8x8xbf16>, vector<8x8xbf16>, vector<8x8xf32> -> vector<8x8xf32>
    %65 = vector.extract_strided_slice %36 {offsets = [0, 8], sizes = [8, 8], strides = [1, 1]} : vector<8x32xf32> to vector<8x8xf32>
    %cst_31 = arith.constant 0.353553385 : f32
    %66 = vector.broadcast %cst_31 : f32 to vector<8x8xf32>
    %67 = arith.mulf %65, %66 : vector<8x8xf32>
    %68 = arith.truncf %67 : vector<8x8xf32> to vector<8x8xbf16>
    %69 = vector.extract_strided_slice %37 {offsets = [0, 8], sizes = [8, 8], strides = [1, 1]} : vector<8x32xf32> to vector<8x8xf32>
    %70 = arith.truncf %69 : vector<8x8xf32> to vector<8x8xbf16>
    %71 = vector.extract_strided_slice %38 {offsets = [0, 8], sizes = [8, 8], strides = [1, 1]} : vector<8x32xf32> to vector<8x8xf32>
    %72 = arith.truncf %71 : vector<8x8xf32> to vector<8x8xbf16>
    %73 = tpu.transpose %70, [1, 0] : vector<8x8xbf16> -> vector<8x8xbf16>
    %cst_32 = arith.constant dense<0.000000e+00> : vector<8x8xf32>
    %74 = tpu.matmul %68, %73, %cst_32 {dimension_numbers = #tpu.dot_dimension_numbers<[1], [0], [0], [1], [0, 0, 1, 1], [], []>} : vector<8x8xbf16>, vector<8x8xbf16>, vector<8x8xf32> -> vector<8x8xf32>
    %cst_33 = arith.constant 0.000000e+00 : f32
    %75 = vector.broadcast %cst_33 : f32 to vector<8x8xf32>
    %76 = arith.cmpf oeq, %5, %75 : vector<8x8xf32>
    %cst_34 = arith.constant -1.000000e+09 : f32
    %77 = vector.broadcast %cst_34 : f32 to vector<8x8xf32>
    %78 = arith.select %76, %77, %74 : vector<8x8xi1>, vector<8x8xf32>
    %cst_35 = arith.constant dense<0xFF800000> : vector<8xf32>
    %79 = vector.multi_reduction <maximumf>, %78, %cst_35 [1] : vector<8x8xf32> to vector<8xf32>
    %80 = vector.shape_cast %79 : vector<8xf32> to vector<8x1xf32>
    %81 = vector.broadcast %80 : vector<8x1xf32> to vector<8x8xf32>
    %82 = arith.subf %78, %81 : vector<8x8xf32>
    %83 = math.exp %82 : vector<8x8xf32>
    %cst_36 = arith.constant dense<0.000000e+00> : vector<8xf32>
    %84 = vector.multi_reduction <add>, %83, %cst_36 [1] : vector<8x8xf32> to vector<8xf32>
    %85 = vector.shape_cast %84 : vector<8xf32> to vector<8x1xf32>
    %86 = tpu.reciprocal %85 {approx = true} : vector<8x1xf32> -> vector<8x1xf32>
    %87 = vector.broadcast %86 : vector<8x1xf32> to vector<8x8xf32>
    %88 = arith.mulf %83, %87 : vector<8x8xf32>
    %89 = arith.truncf %88 : vector<8x8xf32> to vector<8x8xbf16>
    %cst_37 = arith.constant dense<0.000000e+00> : vector<8x8xf32>
    %90 = tpu.matmul %89, %72, %cst_37 {dimension_numbers = #tpu.dot_dimension_numbers<[1], [0], [0], [1], [0, 0, 1, 1], [], []>} : vector<8x8xbf16>, vector<8x8xbf16>, vector<8x8xf32> -> vector<8x8xf32>
    %91 = vector.extract_strided_slice %36 {offsets = [0, 16], sizes = [8, 8], strides = [1, 1]} : vector<8x32xf32> to vector<8x8xf32>
    %cst_38 = arith.constant 0.353553385 : f32
    %92 = vector.broadcast %cst_38 : f32 to vector<8x8xf32>
    %93 = arith.mulf %91, %92 : vector<8x8xf32>
    %94 = arith.truncf %93 : vector<8x8xf32> to vector<8x8xbf16>
    %95 = vector.extract_strided_slice %37 {offsets = [0, 16], sizes = [8, 8], strides = [1, 1]} : vector<8x32xf32> to vector<8x8xf32>
    %96 = arith.truncf %95 : vector<8x8xf32> to vector<8x8xbf16>
    %97 = vector.extract_strided_slice %38 {offsets = [0, 16], sizes = [8, 8], strides = [1, 1]} : vector<8x32xf32> to vector<8x8xf32>
    %98 = arith.truncf %97 : vector<8x8xf32> to vector<8x8xbf16>
    %99 = tpu.transpose %96, [1, 0] : vector<8x8xbf16> -> vector<8x8xbf16>
    %cst_39 = arith.constant dense<0.000000e+00> : vector<8x8xf32>
    %100 = tpu.matmul %94, %99, %cst_39 {dimension_numbers = #tpu.dot_dimension_numbers<[1], [0], [0], [1], [0, 0, 1, 1], [], []>} : vector<8x8xbf16>, vector<8x8xbf16>, vector<8x8xf32> -> vector<8x8xf32>
    %cst_40 = arith.constant 0.000000e+00 : f32
    %101 = vector.broadcast %cst_40 : f32 to vector<8x8xf32>
    %102 = arith.cmpf oeq, %5, %101 : vector<8x8xf32>
    %cst_41 = arith.constant -1.000000e+09 : f32
    %103 = vector.broadcast %cst_41 : f32 to vector<8x8xf32>
    %104 = arith.select %102, %103, %100 : vector<8x8xi1>, vector<8x8xf32>
    %cst_42 = arith.constant dense<0xFF800000> : vector<8xf32>
    %105 = vector.multi_reduction <maximumf>, %104, %cst_42 [1] : vector<8x8xf32> to vector<8xf32>
    %106 = vector.shape_cast %105 : vector<8xf32> to vector<8x1xf32>
    %107 = vector.broadcast %106 : vector<8x1xf32> to vector<8x8xf32>
    %108 = arith.subf %104, %107 : vector<8x8xf32>
    %109 = math.exp %108 : vector<8x8xf32>
    %cst_43 = arith.constant dense<0.000000e+00> : vector<8xf32>
    %110 = vector.multi_reduction <add>, %109, %cst_43 [1] : vector<8x8xf32> to vector<8xf32>
    %111 = vector.shape_cast %110 : vector<8xf32> to vector<8x1xf32>
    %112 = tpu.reciprocal %111 {approx = true} : vector<8x1xf32> -> vector<8x1xf32>
    %113 = vector.broadcast %112 : vector<8x1xf32> to vector<8x8xf32>
    %114 = arith.mulf %109, %113 : vector<8x8xf32>
    %115 = arith.truncf %114 : vector<8x8xf32> to vector<8x8xbf16>
    %cst_44 = arith.constant dense<0.000000e+00> : vector<8x8xf32>
    %116 = tpu.matmul %115, %98, %cst_44 {dimension_numbers = #tpu.dot_dimension_numbers<[1], [0], [0], [1], [0, 0, 1, 1], [], []>} : vector<8x8xbf16>, vector<8x8xbf16>, vector<8x8xf32> -> vector<8x8xf32>
    %117 = vector.extract_strided_slice %36 {offsets = [0, 24], sizes = [8, 8], strides = [1, 1]} : vector<8x32xf32> to vector<8x8xf32>
    %cst_45 = arith.constant 0.353553385 : f32
    %118 = vector.broadcast %cst_45 : f32 to vector<8x8xf32>
    %119 = arith.mulf %117, %118 : vector<8x8xf32>
    %120 = arith.truncf %119 : vector<8x8xf32> to vector<8x8xbf16>
    %121 = vector.extract_strided_slice %37 {offsets = [0, 24], sizes = [8, 8], strides = [1, 1]} : vector<8x32xf32> to vector<8x8xf32>
    %122 = arith.truncf %121 : vector<8x8xf32> to vector<8x8xbf16>
    %123 = vector.extract_strided_slice %38 {offsets = [0, 24], sizes = [8, 8], strides = [1, 1]} : vector<8x32xf32> to vector<8x8xf32>
    %124 = arith.truncf %123 : vector<8x8xf32> to vector<8x8xbf16>
    %125 = tpu.transpose %122, [1, 0] : vector<8x8xbf16> -> vector<8x8xbf16>
    %cst_46 = arith.constant dense<0.000000e+00> : vector<8x8xf32>
    %126 = tpu.matmul %120, %125, %cst_46 {dimension_numbers = #tpu.dot_dimension_numbers<[1], [0], [0], [1], [0, 0, 1, 1], [], []>} : vector<8x8xbf16>, vector<8x8xbf16>, vector<8x8xf32> -> vector<8x8xf32>
    %cst_47 = arith.constant 0.000000e+00 : f32
    %127 = vector.broadcast %cst_47 : f32 to vector<8x8xf32>
    %128 = arith.cmpf oeq, %5, %127 : vector<8x8xf32>
    %cst_48 = arith.constant -1.000000e+09 : f32
    %129 = vector.broadcast %cst_48 : f32 to vector<8x8xf32>
    %130 = arith.select %128, %129, %126 : vector<8x8xi1>, vector<8x8xf32>
    %cst_49 = arith.constant dense<0xFF800000> : vector<8xf32>
    %131 = vector.multi_reduction <maximumf>, %130, %cst_49 [1] : vector<8x8xf32> to vector<8xf32>
    %132 = vector.shape_cast %131 : vector<8xf32> to vector<8x1xf32>
    %133 = vector.broadcast %132 : vector<8x1xf32> to vector<8x8xf32>
    %134 = arith.subf %130, %133 : vector<8x8xf32>
    %135 = math.exp %134 : vector<8x8xf32>
    %cst_50 = arith.constant dense<0.000000e+00> : vector<8xf32>
    %136 = vector.multi_reduction <add>, %135, %cst_50 [1] : vector<8x8xf32> to vector<8xf32>
    %137 = vector.shape_cast %136 : vector<8xf32> to vector<8x1xf32>
    %138 = tpu.reciprocal %137 {approx = true} : vector<8x1xf32> -> vector<8x1xf32>
    %139 = vector.broadcast %138 : vector<8x1xf32> to vector<8x8xf32>
    %140 = arith.mulf %135, %139 : vector<8x8xf32>
    %141 = arith.truncf %140 : vector<8x8xf32> to vector<8x8xbf16>
    %cst_51 = arith.constant dense<0.000000e+00> : vector<8x8xf32>
    %142 = tpu.matmul %141, %124, %cst_51 {dimension_numbers = #tpu.dot_dimension_numbers<[1], [0], [0], [1], [0, 0, 1, 1], [], []>} : vector<8x8xbf16>, vector<8x8xbf16>, vector<8x8xf32> -> vector<8x8xf32>
    %143 = tpu.concatenate %64, %90, %116, %142 in 1 : vector<8x8xf32>, vector<8x8xf32>, vector<8x8xf32>, vector<8x8xf32> -> vector<8x32xf32>
    %144 = arith.truncf %143 : vector<8x32xf32> to vector<8x32xbf16>
    %c0_52 = arith.constant 0 : index
    %c0_53 = arith.constant 0 : index
    %145 = vector.load %arg9[%c0_52, %c0_53] : memref<32x32xbf16, #tpu.memory_space<vmem>>, vector<32x32xbf16>
    %cst_54 = arith.constant dense<0.000000e+00> : vector<8x32xf32>
    %146 = tpu.matmul %144, %145, %cst_54 {dimension_numbers = #tpu.dot_dimension_numbers<[1], [0], [0], [1], [0, 0, 1, 1], [], []>} : vector<8x32xbf16>, vector<32x32xbf16>, vector<8x32xf32> -> vector<8x32xf32>
    %c0_55 = arith.constant 0 : index
    %c0_56 = arith.constant 0 : index
    %147 = vector.load %arg10[%c0_55, %c0_56] : memref<1x32xf32, #tpu.memory_space<vmem>>, vector<1x32xf32>
    %148 = vector.broadcast %147 : vector<1x32xf32> to vector<8x32xf32>
    %149 = arith.addf %146, %148 : vector<8x32xf32>
    %150 = arith.addf %1, %149 : vector<8x32xf32>
    %c0_57 = arith.constant 0 : index
    %c0_58 = arith.constant 0 : index
    %151 = vector.load %arg11[%c0_57, %c0_58] : memref<1x32xf32, #tpu.memory_space<vmem>>, vector<1x32xf32>
    %c0_59 = arith.constant 0 : index
    %c0_60 = arith.constant 0 : index
    %152 = vector.load %arg12[%c0_59, %c0_60] : memref<1x32xf32, #tpu.memory_space<vmem>>, vector<1x32xf32>
    %cst_61 = arith.constant dense<0.000000e+00> : vector<8xf32>
    %153 = vector.multi_reduction <add>, %150, %cst_61 [1] : vector<8x32xf32> to vector<8xf32>
    %154 = vector.shape_cast %153 : vector<8xf32> to vector<8x1xf32>
    %cst_62 = arith.constant 3.200000e+01 : f32
    %155 = vector.broadcast %cst_62 : f32 to vector<8x1xf32>
    %156 = arith.divf %154, %155 : vector<8x1xf32>
    %157 = vector.broadcast %156 : vector<8x1xf32> to vector<8x32xf32>
    %158 = arith.subf %150, %157 : vector<8x32xf32>
    %159 = arith.mulf %158, %158 : vector<8x32xf32>
    %cst_63 = arith.constant dense<0.000000e+00> : vector<8xf32>
    %160 = vector.multi_reduction <add>, %159, %cst_63 [1] : vector<8x32xf32> to vector<8xf32>
    %161 = vector.shape_cast %160 : vector<8xf32> to vector<8x1xf32>
    %cst_64 = arith.constant 3.100000e+01 : f32
    %162 = vector.broadcast %cst_64 : f32 to vector<8x1xf32>
    %163 = arith.divf %161, %162 : vector<8x1xf32>
    %164 = math.sqrt %163 : vector<8x1xf32>
    %165 = vector.broadcast %151 : vector<1x32xf32> to vector<8x32xf32>
    %166 = arith.mulf %165, %158 : vector<8x32xf32>
    %cst_65 = arith.constant 9.99999997E-7 : f32
    %167 = vector.broadcast %cst_65 : f32 to vector<8x1xf32>
    %168 = arith.addf %164, %167 : vector<8x1xf32>
    %169 = vector.broadcast %168 : vector<8x1xf32> to vector<8x32xf32>
    %170 = arith.divf %166, %169 : vector<8x32xf32>
    %171 = vector.broadcast %152 : vector<1x32xf32> to vector<8x32xf32>
    %172 = arith.addf %170, %171 : vector<8x32xf32>
    %173 = arith.truncf %172 : vector<8x32xf32> to vector<8x32xbf16>
    %c0_66 = arith.constant 0 : index
    %c0_67 = arith.constant 0 : index
    %174 = vector.load %arg13[%c0_66, %c0_67] : memref<32x32xbf16, #tpu.memory_space<vmem>>, vector<32x32xbf16>
    %cst_68 = arith.constant dense<0.000000e+00> : vector<8x32xf32>
    %175 = tpu.matmul %173, %174, %cst_68 {dimension_numbers = #tpu.dot_dimension_numbers<[1], [0], [0], [1], [0, 0, 1, 1], [], []>} : vector<8x32xbf16>, vector<32x32xbf16>, vector<8x32xf32> -> vector<8x32xf32>
    %c0_69 = arith.constant 0 : index
    %c0_70 = arith.constant 0 : index
    %176 = vector.load %arg14[%c0_69, %c0_70] : memref<1x32xf32, #tpu.memory_space<vmem>>, vector<1x32xf32>
    %177 = vector.broadcast %176 : vector<1x32xf32> to vector<8x32xf32>
    %178 = arith.addf %175, %177 : vector<8x32xf32>
    %179 = arith.truncf %3 : vector<10x32xf32> to vector<10x32xbf16>
    %c0_71 = arith.constant 0 : index
    %c0_72 = arith.constant 0 : index
    %180 = vector.load %arg15[%c0_71, %c0_72] : memref<32x64xbf16, #tpu.memory_space<vmem>>, vector<32x64xbf16>
    %cst_73 = arith.constant dense<0.000000e+00> : vector<10x64xf32>
    %181 = tpu.matmul %179, %180, %cst_73 {dimension_numbers = #tpu.dot_dimension_numbers<[1], [0], [0], [1], [0, 0, 1, 1], [], []>} : vector<10x32xbf16>, vector<32x64xbf16>, vector<10x64xf32> -> vector<10x64xf32>
    %c0_74 = arith.constant 0 : index
    %c0_75 = arith.constant 0 : index
    %182 = vector.load %arg16[%c0_74, %c0_75] : memref<1x64xf32, #tpu.memory_space<vmem>>, vector<1x64xf32>
    %183 = vector.broadcast %182 : vector<1x64xf32> to vector<10x64xf32>
    %184 = arith.addf %181, %183 : vector<10x64xf32>
    %185 = vector.extract_strided_slice %184 {offsets = [0, 0], sizes = [10, 32], strides = [1, 1]} : vector<10x64xf32> to vector<10x32xf32>
    %186 = vector.extract_strided_slice %184 {offsets = [0, 32], sizes = [10, 32], strides = [1, 1]} : vector<10x64xf32> to vector<10x32xf32>
    %187 = vector.extract_strided_slice %178 {offsets = [0, 0], sizes = [8, 8], strides = [1, 1]} : vector<8x32xf32> to vector<8x8xf32>
    %cst_76 = arith.constant 0.353553385 : f32
    %188 = vector.broadcast %cst_76 : f32 to vector<8x8xf32>
    %189 = arith.mulf %187, %188 : vector<8x8xf32>
    %190 = arith.truncf %189 : vector<8x8xf32> to vector<8x8xbf16>
    %191 = vector.extract_strided_slice %185 {offsets = [0, 0], sizes = [10, 8], strides = [1, 1]} : vector<10x32xf32> to vector<10x8xf32>
    %192 = arith.truncf %191 : vector<10x8xf32> to vector<10x8xbf16>
    %193 = vector.extract_strided_slice %186 {offsets = [0, 0], sizes = [10, 8], strides = [1, 1]} : vector<10x32xf32> to vector<10x8xf32>
    %194 = arith.truncf %193 : vector<10x8xf32> to vector<10x8xbf16>
    %195 = tpu.transpose %192, [1, 0] : vector<10x8xbf16> -> vector<8x10xbf16>
    %cst_77 = arith.constant dense<0.000000e+00> : vector<8x10xf32>
    %196 = tpu.matmul %190, %195, %cst_77 {dimension_numbers = #tpu.dot_dimension_numbers<[1], [0], [0], [1], [0, 0, 1, 1], [], []>} : vector<8x8xbf16>, vector<8x10xbf16>, vector<8x10xf32> -> vector<8x10xf32>
    %cst_78 = arith.constant 0.000000e+00 : f32
    %197 = vector.broadcast %cst_78 : f32 to vector<1x10xf32>
    %198 = arith.cmpf oeq, %7, %197 : vector<1x10xf32>
    %cst_79 = arith.constant -1.000000e+09 : f32
    %199 = vector.shape_cast %198 : vector<1x10xi1> to vector<1x10xi1>
    %200 = vector.broadcast %199 : vector<1x10xi1> to vector<8x10xi1>
    %201 = vector.broadcast %cst_79 : f32 to vector<8x10xf32>
    %202 = arith.select %200, %201, %196 : vector<8x10xi1>, vector<8x10xf32>
    %cst_80 = arith.constant dense<0xFF800000> : vector<8xf32>
    %203 = vector.multi_reduction <maximumf>, %202, %cst_80 [1] : vector<8x10xf32> to vector<8xf32>
    %204 = vector.shape_cast %203 : vector<8xf32> to vector<8x1xf32>
    %205 = vector.broadcast %204 : vector<8x1xf32> to vector<8x10xf32>
    %206 = arith.subf %202, %205 : vector<8x10xf32>
    %207 = math.exp %206 : vector<8x10xf32>
    %cst_81 = arith.constant dense<0.000000e+00> : vector<8xf32>
    %208 = vector.multi_reduction <add>, %207, %cst_81 [1] : vector<8x10xf32> to vector<8xf32>
    %209 = vector.shape_cast %208 : vector<8xf32> to vector<8x1xf32>
    %210 = tpu.reciprocal %209 {approx = true} : vector<8x1xf32> -> vector<8x1xf32>
    %211 = vector.broadcast %210 : vector<8x1xf32> to vector<8x10xf32>
    %212 = arith.mulf %207, %211 : vector<8x10xf32>
    %213 = arith.truncf %212 : vector<8x10xf32> to vector<8x10xbf16>
    %cst_82 = arith.constant dense<0.000000e+00> : vector<8x8xf32>
    %214 = tpu.matmul %213, %194, %cst_82 {dimension_numbers = #tpu.dot_dimension_numbers<[1], [0], [0], [1], [0, 0, 1, 1], [], []>} : vector<8x10xbf16>, vector<10x8xbf16>, vector<8x8xf32> -> vector<8x8xf32>
    %215 = vector.extract_strided_slice %178 {offsets = [0, 8], sizes = [8, 8], strides = [1, 1]} : vector<8x32xf32> to vector<8x8xf32>
    %cst_83 = arith.constant 0.353553385 : f32
    %216 = vector.broadcast %cst_83 : f32 to vector<8x8xf32>
    %217 = arith.mulf %215, %216 : vector<8x8xf32>
    %218 = arith.truncf %217 : vector<8x8xf32> to vector<8x8xbf16>
    %219 = vector.extract_strided_slice %185 {offsets = [0, 8], sizes = [10, 8], strides = [1, 1]} : vector<10x32xf32> to vector<10x8xf32>
    %220 = arith.truncf %219 : vector<10x8xf32> to vector<10x8xbf16>
    %221 = vector.extract_strided_slice %186 {offsets = [0, 8], sizes = [10, 8], strides = [1, 1]} : vector<10x32xf32> to vector<10x8xf32>
    %222 = arith.truncf %221 : vector<10x8xf32> to vector<10x8xbf16>
    %223 = tpu.transpose %220, [1, 0] : vector<10x8xbf16> -> vector<8x10xbf16>
    %cst_84 = arith.constant dense<0.000000e+00> : vector<8x10xf32>
    %224 = tpu.matmul %218, %223, %cst_84 {dimension_numbers = #tpu.dot_dimension_numbers<[1], [0], [0], [1], [0, 0, 1, 1], [], []>} : vector<8x8xbf16>, vector<8x10xbf16>, vector<8x10xf32> -> vector<8x10xf32>
    %cst_85 = arith.constant 0.000000e+00 : f32
    %225 = vector.broadcast %cst_85 : f32 to vector<1x10xf32>
    %226 = arith.cmpf oeq, %7, %225 : vector<1x10xf32>
    %cst_86 = arith.constant -1.000000e+09 : f32
    %227 = vector.shape_cast %226 : vector<1x10xi1> to vector<1x10xi1>
    %228 = vector.broadcast %227 : vector<1x10xi1> to vector<8x10xi1>
    %229 = vector.broadcast %cst_86 : f32 to vector<8x10xf32>
    %230 = arith.select %228, %229, %224 : vector<8x10xi1>, vector<8x10xf32>
    %cst_87 = arith.constant dense<0xFF800000> : vector<8xf32>
    %231 = vector.multi_reduction <maximumf>, %230, %cst_87 [1] : vector<8x10xf32> to vector<8xf32>
    %232 = vector.shape_cast %231 : vector<8xf32> to vector<8x1xf32>
    %233 = vector.broadcast %232 : vector<8x1xf32> to vector<8x10xf32>
    %234 = arith.subf %230, %233 : vector<8x10xf32>
    %235 = math.exp %234 : vector<8x10xf32>
    %cst_88 = arith.constant dense<0.000000e+00> : vector<8xf32>
    %236 = vector.multi_reduction <add>, %235, %cst_88 [1] : vector<8x10xf32> to vector<8xf32>
    %237 = vector.shape_cast %236 : vector<8xf32> to vector<8x1xf32>
    %238 = tpu.reciprocal %237 {approx = true} : vector<8x1xf32> -> vector<8x1xf32>
    %239 = vector.broadcast %238 : vector<8x1xf32> to vector<8x10xf32>
    %240 = arith.mulf %235, %239 : vector<8x10xf32>
    %241 = arith.truncf %240 : vector<8x10xf32> to vector<8x10xbf16>
    %cst_89 = arith.constant dense<0.000000e+00> : vector<8x8xf32>
    %242 = tpu.matmul %241, %222, %cst_89 {dimension_numbers = #tpu.dot_dimension_numbers<[1], [0], [0], [1], [0, 0, 1, 1], [], []>} : vector<8x10xbf16>, vector<10x8xbf16>, vector<8x8xf32> -> vector<8x8xf32>
    %243 = vector.extract_strided_slice %178 {offsets = [0, 16], sizes = [8, 8], strides = [1, 1]} : vector<8x32xf32> to vector<8x8xf32>
    %cst_90 = arith.constant 0.353553385 : f32
    %244 = vector.broadcast %cst_90 : f32 to vector<8x8xf32>
    %245 = arith.mulf %243, %244 : vector<8x8xf32>
    %246 = arith.truncf %245 : vector<8x8xf32> to vector<8x8xbf16>
    %247 = vector.extract_strided_slice %185 {offsets = [0, 16], sizes = [10, 8], strides = [1, 1]} : vector<10x32xf32> to vector<10x8xf32>
    %248 = arith.truncf %247 : vector<10x8xf32> to vector<10x8xbf16>
    %249 = vector.extract_strided_slice %186 {offsets = [0, 16], sizes = [10, 8], strides = [1, 1]} : vector<10x32xf32> to vector<10x8xf32>
    %250 = arith.truncf %249 : vector<10x8xf32> to vector<10x8xbf16>
    %251 = tpu.transpose %248, [1, 0] : vector<10x8xbf16> -> vector<8x10xbf16>
    %cst_91 = arith.constant dense<0.000000e+00> : vector<8x10xf32>
    %252 = tpu.matmul %246, %251, %cst_91 {dimension_numbers = #tpu.dot_dimension_numbers<[1], [0], [0], [1], [0, 0, 1, 1], [], []>} : vector<8x8xbf16>, vector<8x10xbf16>, vector<8x10xf32> -> vector<8x10xf32>
    %cst_92 = arith.constant 0.000000e+00 : f32
    %253 = vector.broadcast %cst_92 : f32 to vector<1x10xf32>
    %254 = arith.cmpf oeq, %7, %253 : vector<1x10xf32>
    %cst_93 = arith.constant -1.000000e+09 : f32
    %255 = vector.shape_cast %254 : vector<1x10xi1> to vector<1x10xi1>
    %256 = vector.broadcast %255 : vector<1x10xi1> to vector<8x10xi1>
    %257 = vector.broadcast %cst_93 : f32 to vector<8x10xf32>
    %258 = arith.select %256, %257, %252 : vector<8x10xi1>, vector<8x10xf32>
    %cst_94 = arith.constant dense<0xFF800000> : vector<8xf32>
    %259 = vector.multi_reduction <maximumf>, %258, %cst_94 [1] : vector<8x10xf32> to vector<8xf32>
    %260 = vector.shape_cast %259 : vector<8xf32> to vector<8x1xf32>
    %261 = vector.broadcast %260 : vector<8x1xf32> to vector<8x10xf32>
    %262 = arith.subf %258, %261 : vector<8x10xf32>
    %263 = math.exp %262 : vector<8x10xf32>
    %cst_95 = arith.constant dense<0.000000e+00> : vector<8xf32>
    %264 = vector.multi_reduction <add>, %263, %cst_95 [1] : vector<8x10xf32> to vector<8xf32>
    %265 = vector.shape_cast %264 : vector<8xf32> to vector<8x1xf32>
    %266 = tpu.reciprocal %265 {approx = true} : vector<8x1xf32> -> vector<8x1xf32>
    %267 = vector.broadcast %266 : vector<8x1xf32> to vector<8x10xf32>
    %268 = arith.mulf %263, %267 : vector<8x10xf32>
    %269 = arith.truncf %268 : vector<8x10xf32> to vector<8x10xbf16>
    %cst_96 = arith.constant dense<0.000000e+00> : vector<8x8xf32>
    %270 = tpu.matmul %269, %250, %cst_96 {dimension_numbers = #tpu.dot_dimension_numbers<[1], [0], [0], [1], [0, 0, 1, 1], [], []>} : vector<8x10xbf16>, vector<10x8xbf16>, vector<8x8xf32> -> vector<8x8xf32>
    %271 = vector.extract_strided_slice %178 {offsets = [0, 24], sizes = [8, 8], strides = [1, 1]} : vector<8x32xf32> to vector<8x8xf32>
    %cst_97 = arith.constant 0.353553385 : f32
    %272 = vector.broadcast %cst_97 : f32 to vector<8x8xf32>
    %273 = arith.mulf %271, %272 : vector<8x8xf32>
    %274 = arith.truncf %273 : vector<8x8xf32> to vector<8x8xbf16>
    %275 = vector.extract_strided_slice %185 {offsets = [0, 24], sizes = [10, 8], strides = [1, 1]} : vector<10x32xf32> to vector<10x8xf32>
    %276 = arith.truncf %275 : vector<10x8xf32> to vector<10x8xbf16>
    %277 = vector.extract_strided_slice %186 {offsets = [0, 24], sizes = [10, 8], strides = [1, 1]} : vector<10x32xf32> to vector<10x8xf32>
    %278 = arith.truncf %277 : vector<10x8xf32> to vector<10x8xbf16>
    %279 = tpu.transpose %276, [1, 0] : vector<10x8xbf16> -> vector<8x10xbf16>
    %cst_98 = arith.constant dense<0.000000e+00> : vector<8x10xf32>
    %280 = tpu.matmul %274, %279, %cst_98 {dimension_numbers = #tpu.dot_dimension_numbers<[1], [0], [0], [1], [0, 0, 1, 1], [], []>} : vector<8x8xbf16>, vector<8x10xbf16>, vector<8x10xf32> -> vector<8x10xf32>
    %cst_99 = arith.constant 0.000000e+00 : f32
    %281 = vector.broadcast %cst_99 : f32 to vector<1x10xf32>
    %282 = arith.cmpf oeq, %7, %281 : vector<1x10xf32>
    %cst_100 = arith.constant -1.000000e+09 : f32
    %283 = vector.shape_cast %282 : vector<1x10xi1> to vector<1x10xi1>
    %284 = vector.broadcast %283 : vector<1x10xi1> to vector<8x10xi1>
    %285 = vector.broadcast %cst_100 : f32 to vector<8x10xf32>
    %286 = arith.select %284, %285, %280 : vector<8x10xi1>, vector<8x10xf32>
    %cst_101 = arith.constant dense<0xFF800000> : vector<8xf32>
    %287 = vector.multi_reduction <maximumf>, %286, %cst_101 [1] : vector<8x10xf32> to vector<8xf32>
    %288 = vector.shape_cast %287 : vector<8xf32> to vector<8x1xf32>
    %289 = vector.broadcast %288 : vector<8x1xf32> to vector<8x10xf32>
    %290 = arith.subf %286, %289 : vector<8x10xf32>
    %291 = math.exp %290 : vector<8x10xf32>
    %cst_102 = arith.constant dense<0.000000e+00> : vector<8xf32>
    %292 = vector.multi_reduction <add>, %291, %cst_102 [1] : vector<8x10xf32> to vector<8xf32>
    %293 = vector.shape_cast %292 : vector<8xf32> to vector<8x1xf32>
    %294 = tpu.reciprocal %293 {approx = true} : vector<8x1xf32> -> vector<8x1xf32>
    %295 = vector.broadcast %294 : vector<8x1xf32> to vector<8x10xf32>
    %296 = arith.mulf %291, %295 : vector<8x10xf32>
    %297 = arith.truncf %296 : vector<8x10xf32> to vector<8x10xbf16>
    %cst_103 = arith.constant dense<0.000000e+00> : vector<8x8xf32>
    %298 = tpu.matmul %297, %278, %cst_103 {dimension_numbers = #tpu.dot_dimension_numbers<[1], [0], [0], [1], [0, 0, 1, 1], [], []>} : vector<8x10xbf16>, vector<10x8xbf16>, vector<8x8xf32> -> vector<8x8xf32>
    %299 = tpu.concatenate %214, %242, %270, %298 in 1 : vector<8x8xf32>, vector<8x8xf32>, vector<8x8xf32>, vector<8x8xf32> -> vector<8x32xf32>
    %300 = arith.truncf %299 : vector<8x32xf32> to vector<8x32xbf16>
    %c0_104 = arith.constant 0 : index
    %c0_105 = arith.constant 0 : index
    %301 = vector.load %arg17[%c0_104, %c0_105] : memref<32x32xbf16, #tpu.memory_space<vmem>>, vector<32x32xbf16>
    %cst_106 = arith.constant dense<0.000000e+00> : vector<8x32xf32>
    %302 = tpu.matmul %300, %301, %cst_106 {dimension_numbers = #tpu.dot_dimension_numbers<[1], [0], [0], [1], [0, 0, 1, 1], [], []>} : vector<8x32xbf16>, vector<32x32xbf16>, vector<8x32xf32> -> vector<8x32xf32>
    %c0_107 = arith.constant 0 : index
    %c0_108 = arith.constant 0 : index
    %303 = vector.load %arg18[%c0_107, %c0_108] : memref<1x32xf32, #tpu.memory_space<vmem>>, vector<1x32xf32>
    %304 = vector.broadcast %303 : vector<1x32xf32> to vector<8x32xf32>
    %305 = arith.addf %302, %304 : vector<8x32xf32>
    %306 = arith.addf %150, %305 : vector<8x32xf32>
    %c0_109 = arith.constant 0 : index
    %c0_110 = arith.constant 0 : index
    %307 = vector.load %arg19[%c0_109, %c0_110] : memref<1x32xf32, #tpu.memory_space<vmem>>, vector<1x32xf32>
    %c0_111 = arith.constant 0 : index
    %c0_112 = arith.constant 0 : index
    %308 = vector.load %arg20[%c0_111, %c0_112] : memref<1x32xf32, #tpu.memory_space<vmem>>, vector<1x32xf32>
    %cst_113 = arith.constant dense<0.000000e+00> : vector<8xf32>
    %309 = vector.multi_reduction <add>, %306, %cst_113 [1] : vector<8x32xf32> to vector<8xf32>
    %310 = vector.shape_cast %309 : vector<8xf32> to vector<8x1xf32>
    %cst_114 = arith.constant 3.200000e+01 : f32
    %311 = vector.broadcast %cst_114 : f32 to vector<8x1xf32>
    %312 = arith.divf %310, %311 : vector<8x1xf32>
    %313 = vector.broadcast %312 : vector<8x1xf32> to vector<8x32xf32>
    %314 = arith.subf %306, %313 : vector<8x32xf32>
    %315 = arith.mulf %314, %314 : vector<8x32xf32>
    %cst_115 = arith.constant dense<0.000000e+00> : vector<8xf32>
    %316 = vector.multi_reduction <add>, %315, %cst_115 [1] : vector<8x32xf32> to vector<8xf32>
    %317 = vector.shape_cast %316 : vector<8xf32> to vector<8x1xf32>
    %cst_116 = arith.constant 3.100000e+01 : f32
    %318 = vector.broadcast %cst_116 : f32 to vector<8x1xf32>
    %319 = arith.divf %317, %318 : vector<8x1xf32>
    %320 = math.sqrt %319 : vector<8x1xf32>
    %321 = vector.broadcast %307 : vector<1x32xf32> to vector<8x32xf32>
    %322 = arith.mulf %321, %314 : vector<8x32xf32>
    %cst_117 = arith.constant 9.99999997E-7 : f32
    %323 = vector.broadcast %cst_117 : f32 to vector<8x1xf32>
    %324 = arith.addf %320, %323 : vector<8x1xf32>
    %325 = vector.broadcast %324 : vector<8x1xf32> to vector<8x32xf32>
    %326 = arith.divf %322, %325 : vector<8x32xf32>
    %327 = vector.broadcast %308 : vector<1x32xf32> to vector<8x32xf32>
    %328 = arith.addf %326, %327 : vector<8x32xf32>
    %329 = arith.truncf %328 : vector<8x32xf32> to vector<8x32xbf16>
    %c0_118 = arith.constant 0 : index
    %c0_119 = arith.constant 0 : index
    %330 = vector.load %arg21[%c0_118, %c0_119] : memref<32x64xbf16, #tpu.memory_space<vmem>>, vector<32x64xbf16>
    %cst_120 = arith.constant dense<0.000000e+00> : vector<8x64xf32>
    %331 = tpu.matmul %329, %330, %cst_120 {dimension_numbers = #tpu.dot_dimension_numbers<[1], [0], [0], [1], [0, 0, 1, 1], [], []>} : vector<8x32xbf16>, vector<32x64xbf16>, vector<8x64xf32> -> vector<8x64xf32>
    %c0_121 = arith.constant 0 : index
    %c0_122 = arith.constant 0 : index
    %332 = vector.load %arg22[%c0_121, %c0_122] : memref<1x64xf32, #tpu.memory_space<vmem>>, vector<1x64xf32>
    %333 = vector.broadcast %332 : vector<1x64xf32> to vector<8x64xf32>
    %334 = arith.addf %331, %333 : vector<8x64xf32>
    %cst_123 = arith.constant 0.000000e+00 : f32
    %335 = vector.broadcast %cst_123 : f32 to vector<8x64xf32>
    %336 = arith.maximumf %334, %335 : vector<8x64xf32>
    %337 = arith.truncf %336 : vector<8x64xf32> to vector<8x64xbf16>
    %c0_124 = arith.constant 0 : index
    %c0_125 = arith.constant 0 : index
    %338 = vector.load %arg23[%c0_124, %c0_125] : memref<64x32xbf16, #tpu.memory_space<vmem>>, vector<64x32xbf16>
    %cst_126 = arith.constant dense<0.000000e+00> : vector<8x32xf32>
    %339 = tpu.matmul %337, %338, %cst_126 {dimension_numbers = #tpu.dot_dimension_numbers<[1], [0], [0], [1], [0, 0, 1, 1], [], []>} : vector<8x64xbf16>, vector<64x32xbf16>, vector<8x32xf32> -> vector<8x32xf32>
    %c0_127 = arith.constant 0 : index
    %c0_128 = arith.constant 0 : index
    %340 = vector.load %arg24[%c0_127, %c0_128] : memref<1x32xf32, #tpu.memory_space<vmem>>, vector<1x32xf32>
    %341 = vector.broadcast %340 : vector<1x32xf32> to vector<8x32xf32>
    %342 = arith.addf %339, %341 : vector<8x32xf32>
    %343 = arith.addf %306, %342 : vector<8x32xf32>
    %c0_129 = arith.constant 0 : index
    %c0_130 = arith.constant 0 : index
    %c0_131 = arith.constant 0 : index
    %344 = vector.load %arg25[%c0_129, %c0_130, %c0_131] : memref<1x8x32xf32, #tpu.memory_space<vmem>>, vector<1x8x32xf32>
    %345 = vector.shape_cast %344 : vector<1x8x32xf32> to vector<8x32xf32>
    %346 = vector.shape_cast %343 : vector<8x32xf32> to vector<1x8x32xf32>
    tpu.vector_store %arg25[%c0_129, %c0_130, %c0_131], %346 {strides = array<i32>} : memref<1x8x32xf32, #tpu.memory_space<vmem>>, vector<1x8x32xf32>,
    return
  }
  func.func @transform_0(%arg0: i32) -> (i32, i32, i32) {
    %c0_i32 = arith.constant 0 : i32
    %c0_i32_0 = arith.constant 0 : i32
    %c0_i32_1 = arith.constant 0 : i32
    return %arg0, %c0_i32, %c0_i32_0 : i32, i32, i32
  }
  func.func @transform_1(%arg0: i32) -> (i32, i32, i32) {
    %c0_i32 = arith.constant 0 : i32
    %c0_i32_0 = arith.constant 0 : i32
    %c0_i32_1 = arith.constant 0 : i32
    return %arg0, %c0_i32, %c0_i32_0 : i32, i32, i32
  }
  func.func @transform_2(%arg0: i32) -> (i32, i32, i32) {
    %c0_i32 = arith.constant 0 : i32
    %c0_i32_0 = arith.constant 0 : i32
    %c0_i32_1 = arith.constant 0 : i32
    return %arg0, %c0_i32, %c0_i32_0 : i32, i32, i32
  }
  func.func @transform_3(%arg0: i32) -> (i32, i32, i32) {
    %c0_i32 = arith.constant 0 : i32
    %c0_i32_0 = arith.constant 0 : i32
    %c0_i32_1 = arith.constant 0 : i32
    return %arg0, %c0_i32, %c0_i32_0 : i32, i32, i32
  }
  func.func @transform_4(%arg0: i32) -> (i32, i32) {
    %c0_i32 = arith.constant 0 : i32
    %c0_i32_0 = arith.constant 0 : i32
    %c0_i32_1 = arith.constant 0 : i32
    return %c0_i32, %c0_i32_0 : i32, i32
  }
  func.func @transform_5(%arg0: i32) -> (i32, i32) {
    %c0_i32 = arith.constant 0 : i32
    %c0_i32_0 = arith.constant 0 : i32
    %c0_i32_1 = arith.constant 0 : i32
    return %c0_i32, %c0_i32_0 : i32, i32
  }
  func.func @transform_6(%arg0: i32) -> (i32, i32) {
    %c0_i32 = arith.constant 0 : i32
    %c0_i32_0 = arith.constant 0 : i32
    %c0_i32_1 = arith.constant 0 : i32
    return %c0_i32, %c0_i32_0 : i32, i32
  }
  func.func @transform_7(%arg0: i32) -> (i32, i32) {
    %c0_i32 = arith.constant 0 : i32
    %c0_i32_0 = arith.constant 0 : i32
    %c0_i32_1 = arith.constant 0 : i32
    return %c0_i32, %c0_i32_0 : i32, i32
  }
  func.func @transform_8(%arg0: i32) -> (i32, i32) {
    %c0_i32 = arith.constant 0 : i32
    %c0_i32_0 = arith.constant 0 : i32
    %c0_i32_1 = arith.constant 0 : i32
    return %c0_i32, %c0_i32_0 : i32, i32
  }
  func.func @transform_9(%arg0: i32) -> (i32, i32) {
    %c0_i32 = arith.constant 0 : i32
    %c0_i32_0 = arith.constant 0 : i32
    %c0_i32_1 = arith.constant 0 : i32
    return %c0_i32, %c0_i32_0 : i32, i32
  }
  func.func @transform_10(%arg0: i32) -> (i32, i32) {
    %c0_i32 = arith.constant 0 : i32
    %c0_i32_0 = arith.constant 0 : i32
    %c0_i32_1 = arith.constant 0 : i32
    return %c0_i32, %c0_i32_0 : i32, i32
  }
  func.func @transform_11(%arg0: i32) -> (i32, i32) {
    %c0_i32 = arith.constant 0 : i32
    %c0_i32_0 = arith.constant 0 : i32
    %c0_i32_1 = arith.constant 0 : i32
    return %c0_i32, %c0_i32_0 : i32, i32
  }
  func.func @transform_12(%arg0: i32) -> (i32, i32) {
    %c0_i32 = arith.constant 0 : i32
    %c0_i32_0 = arith.constant 0 : i32
    %c0_i32_1 = arith.constant 0 : i32
    return %c0_i32, %c0_i32_0 : i32, i32
  }
  func.func @transform_13(%arg0: i32) -> (i32, i32) {
    %c0_i32 = arith.constant 0 : i32
    %c0_i32_0 = arith.constant 0 : i32
    %c0_i32_1 = arith.constant 0 : i32
    return %c0_i32, %c0_i32_0 : i32, i32
  }
  func.func @transform_14(%arg0: i32) -> (i32, i32) {
    %c0_i32 = arith.constant 0 : i32
    %c0_i32_0 = arith.constant 0 : i32
    %c0_i32_1 = arith.constant 0 : i32
    return %c0_i32, %c0_i32_0 : i32, i32
  }
  func.func @transform_15(%arg0: i32) -> (i32, i32) {
    %c0_i32 = arith.constant 0 : i32
    %c0_i32_0 = arith.constant 0 : i32
    %c0_i32_1 = arith.constant 0 : i32
    return %c0_i32, %c0_i32_0 : i32, i32
  }
  func.func @transform_16(%arg0: i32) -> (i32, i32) {
    %c0_i32 = arith.constant 0 : i32
    %c0_i32_0 = arith.constant 0 : i32
    %c0_i32_1 = arith.constant 0 : i32
    return %c0_i32, %c0_i32_0 : i32, i32
  }
  func.func @transform_17(%arg0: i32) -> (i32, i32) {
    %c0_i32 = arith.constant 0 : i32
    %c0_i32_0 = arith.constant 0 : i32
    %c0_i32_1 = arith.constant 0 : i32
    return %c0_i32, %c0_i32_0 : i32, i32
  }
  func.func @transform_18(%arg0: i32) -> (i32, i32) {
    %c0_i32 = arith.constant 0 : i32
    %c0_i32_0 = arith.constant 0 : i32
    %c0_i32_1 = arith.constant 0 : i32
    return %c0_i32, %c0_i32_0 : i32, i32
  }
  func.func @transform_19(%arg0: i32) -> (i32, i32) {
    %c0_i32 = arith.constant 0 : i32
    %c0_i32_0 = arith.constant 0 : i32
    %c0_i32_1 = arith.constant 0 : i32
    return %c0_i32, %c0_i32_0 : i32, i32
  }
  func.func @transform_20(%arg0: i32) -> (i32, i32) {
    %c0_i32 = arith.constant 0 : i32
    %c0_i32_0 = arith.constant 0 : i32
    %c0_i32_1 = arith.constant 0 : i32
    return %c0_i32, %c0_i32_0 : i32, i32
  }
  func.func @transform_21(%arg0: i32) -> (i32, i32) {
    %c0_i32 = arith.constant 0 : i32
    %c0_i32_0 = arith.constant 0 : i32
    %c0_i32_1 = arith.constant 0 : i32
    return %c0_i32, %c0_i32_0 : i32, i32
  }
  func.func @transform_22(%arg0: i32) -> (i32, i32) {
    %c0_i32 = arith.constant 0 : i32
    %c0_i32_0 = arith.constant 0 : i32
    %c0_i32_1 = arith.constant 0 : i32
    return %c0_i32, %c0_i32_0 : i32, i32
  }
  func.func @transform_23(%arg0: i32) -> (i32, i32) {
    %c0_i32 = arith.constant 0 : i32
    %c0_i32_0 = arith.constant 0 : i32
    %c0_i32_1 = arith.constant 0 : i32
    return %c0_i32, %c0_i32_0 : i32, i32
  }
  func.func @transform_24(%arg0: i32) -> (i32, i32, i32) {
    %c0_i32 = arith.constant 0 : i32
    %c0_i32_0 = arith.constant 0 : i32
    %c0_i32_1 = arith.constant 0 : i32
    return %arg0, %c0_i32, %c0_i32_0 : i32, i32, i32
  }
}

</mosaic_0001>

<llo_original>
// kernel: tpu_custom_call.1
$region0: #{tpu_custom_call.1}
  #allocation0 [shape = 'u32[]', space=smem, size = 0x4, offset = 0x4, fixed_abs, tag = 'smem constant byte address 0x4 - core index']
  #allocation1 [shape = 'u32[144,128]{1,0:T(1,128)}', space=vmem, size = 0x12000, scoped, tag = 'internal scratch']
  %s0 = inlined_call_operand.vmem [shape: f32[2,8,32], index: 0, kind: input, shape index: {}]
  %s1 = inlined_call_operand.vmem [shape: f32[2,10,32], index: 1, kind: input, shape index: {}]
  %s2 = inlined_call_operand.vmem [shape: f32[2,8,8], index: 2, kind: input, shape index: {}]
  %s3 = inlined_call_operand.hbm [shape: f32[2,1,10], index: 3, kind: input, shape index: {}]
  %s4 = inlined_call_operand.vmem [shape: f32[1,32], index: 4, kind: input, shape index: {}]
  %s5 = inlined_call_operand.hbm [shape: f32[1,32], index: 5, kind: input, shape index: {}]
  %s6 = inlined_call_operand.vmem [shape: bf16[32,96], index: 6, kind: input, shape index: {}]
  %s7 = inlined_call_operand.hbm [shape: f32[1,96], index: 7, kind: input, shape index: {}]
  %s8 = inlined_call_operand.vmem [shape: bf16[32,32], index: 8, kind: input, shape index: {}]
  %s9 = inlined_call_operand.hbm [shape: f32[1,32], index: 9, kind: input, shape index: {}]
  %s10 = inlined_call_operand.hbm [shape: f32[1,32], index: 10, kind: input, shape index: {}]
  %s11 = inlined_call_operand.hbm [shape: f32[1,32], index: 11, kind: input, shape index: {}]
  %s12 = inlined_call_operand.vmem [shape: bf16[32,32], index: 12, kind: input, shape index: {}]
  %s13 = inlined_call_operand.vmem [shape: f32[1,32], index: 13, kind: input, shape index: {}]
  %s14 = inlined_call_operand.vmem [shape: bf16[32,64], index: 14, kind: input, shape index: {}]
  %s15 = inlined_call_operand.vmem [shape: f32[1,64], index: 15, kind: input, shape index: {}]
  %s16 = inlined_call_operand.vmem [shape: bf16[32,32], index: 16, kind: input, shape index: {}]
  %s17 = inlined_call_operand.vmem [shape: f32[1,32], index: 17, kind: input, shape index: {}]
  %s18 = inlined_call_operand.vmem [shape: f32[1,32], index: 18, kind: input, shape index: {}]
  %s19 = inlined_call_operand.vmem [shape: f32[1,32], index: 19, kind: input, shape index: {}]
  %s20 = inlined_call_operand.vmem [shape: bf16[32,64], index: 20, kind: input, shape index: {}]
  %s21 = inlined_call_operand.vmem [shape: f32[1,64], index: 21, kind: input, shape index: {}]
  %s22 = inlined_call_operand.vmem [shape: bf16[64,32], index: 22, kind: input, shape index: {}]
  %s23 = inlined_call_operand.vmem [shape: f32[1,32], index: 23, kind: input, shape index: {}]
  %s24 = inlined_call_operand.hbm [shape: f32[2,8,32], index: 24, kind: output, shape index: {}]
  %s25 = sld [smem:[#allocation0]]
  $region153: #{tpu_custom_call.1} parent=0
    _
  %s27 = ssub.s32 1, %s25
  %s28 = scalar_select 0, %s27, %s25
  $region1: #{tpu_custom_call.1} parent=0
    #allocation2 [shape = 'u8[1024]{0}', space=vmem, size = 0x400, scoped, tag = 'input window, operand 3']
    #allocation3 [shape = 's32[2]{0}', space=sflag, size = 0x8, scoped, tag = 'scoped memory for tpu_custom_call.1']
    #allocation4 [shape = 's32[2]{0}', space=sflag, size = 0x8, scoped, tag = 'scoped memory for tpu_custom_call.1']
    #allocation5 [shape = 'u8[512]{0}', space=vmem, size = 0x400, scoped, tag = 'input window, operand 5, single buffered']
    #allocation6 [shape = 's32[1]{0}', space=sflag, size = 0x4, scoped, tag = 'scoped memory for tpu_custom_call.1']
    #allocation7 [shape = 'u8[512]{0}', space=vmem, size = 0x400, scoped, tag = 'input window, operand 7, single buffered']
    #allocation8 [shape = 'u8[512]{0}', space=vmem, size = 0x400, scoped, tag = 'input window, operand 9, single buffered']
    #allocation9 [shape = 's32[1]{0}', space=sflag, size = 0x4, scoped, tag = 'scoped memory for tpu_custom_call.1']
    #allocation10 [shape = 'u8[512]{0}', space=vmem, size = 0x400, scoped, tag = 'input window, operand 10, single buffered']
    #allocation11 [shape = 'u8[512]{0}', space=vmem, size = 0x400, scoped, tag = 'input window, operand 11, single buffered']
    #allocation12 [shape = 's32[1]{0}', space=sflag, size = 0x4, scoped, tag = 'scoped memory for tpu_custom_call.1']
    #allocation13 [shape = 'u8[8192]{0}', space=vmem, size = 0x2000, scoped, tag = 'output window, operand 0']
    %29 = vsyncpa [#allocation3], 0
    %s30 = scalar_lea.sflag [#allocation3], 1
    %31 = vsyncpa %s30, 0
    %32 = vsyncpa [#allocation6], 0
    %33 = vsyncpa [#allocation9], 0
    %34 = vsyncpa [#allocation12], 0
    %35 = vsyncpa [#allocation4], 0
    %s36 = scalar_lea.sflag [#allocation4], 1
    %37 = vsyncpa %s36, 0
    loop: start=0, step=1, limit=4
    $region2: #{tpu_custom_call.1} parent=1 // loop_pre_header
      _
    $region3: #{tpu_custom_call.1} parent=1 // loop_header
      %s39 = sphi 0, %s43
      %p40 = scmp.ge.s32.totalorder %s39, 4
      %s49 = sphi 0, %s51
      %s52 = sphi 0, %s49
      %s53 = sphi 0, %s52
      %s69 = sphi 0, %s53
      %s75 = sphi 0, %s77
      %s78 = sphi 0, %s75
      %s79 = sphi 0, %s78
      %s95 = sphi 0, %s79
      %s101 = sphi 0, %s103
      %s104 = sphi 0, %s101
      %s105 = sphi 0, %s104
      %s121 = sphi 0, %s105
      %s127 = sphi 0, %s129
      %s130 = sphi 0, %s127
      %s131 = sphi 0, %s130
      %s147 = sphi 0, %s131
      %s151 = sphi 0, %s151
      %s153 = sphi 0, %s151
      %s154 = sphi 0, %s153
      %s168 = sphi 0, %s154
      %s172 = sphi 0, %s172
      %s174 = sphi 0, %s172
      %s175 = sphi 0, %s174
      %s189 = sphi 0, %s175
      %s193 = sphi 0, %s193
      %s195 = sphi 0, %s193
      %s196 = sphi 0, %s195
      %s210 = sphi 0, %s196
      %s214 = sphi 0, %s214
      %s216 = sphi 0, %s214
      %s217 = sphi 0, %s216
      %s231 = sphi 0, %s217
      %s235 = sphi 0, %s235
      %s237 = sphi 0, %s235
      %s238 = sphi 0, %s237
      %s252 = sphi 0, %s238
      %s256 = sphi 0, %s256
      %s258 = sphi 0, %s256
      %s259 = sphi 0, %s258
      %s273 = sphi 0, %s259
      %s277 = sphi 0, %s277
      %s279 = sphi 0, %s277
      %s280 = sphi 0, %s279
      %s294 = sphi 0, %s280
      %s298 = sphi 0, %s298
      %s300 = sphi 0, %s298
      %s301 = sphi 0, %s300
      %s315 = sphi 0, %s301
      %s319 = sphi 0, %s319
      %s321 = sphi 0, %s319
      %s322 = sphi 0, %s321
      %s336 = sphi 0, %s322
      %s340 = sphi 0, %s340
      %s342 = sphi 0, %s340
      %s343 = sphi 0, %s342
      %s357 = sphi 0, %s343
      %s361 = sphi 0, %s361
      %s363 = sphi 0, %s361
      %s364 = sphi 0, %s363
      %s378 = sphi 0, %s364
      %s382 = sphi 0, %s382
      %s384 = sphi 0, %s382
      %s385 = sphi 0, %s384
      %s399 = sphi 0, %s385
      %s403 = sphi 0, %s403
      %s405 = sphi 0, %s403
      %s406 = sphi 0, %s405
      %s420 = sphi 0, %s406
      %s424 = sphi 0, %s424
      %s426 = sphi 0, %s424
      %s427 = sphi 0, %s426
      %s441 = sphi 0, %s427
      %s445 = sphi 0, %s445
      %s447 = sphi 0, %s445
      %s448 = sphi 0, %s447
      %s462 = sphi 0, %s448
      %s466 = sphi 0, %s466
      %s468 = sphi 0, %s466
      %s469 = sphi 0, %s468
      %s483 = sphi 0, %s469
      %s487 = sphi 0, %s487
      %s489 = sphi 0, %s487
      %s490 = sphi 0, %s489
      %s504 = sphi 0, %s490
      %s508 = sphi 0, %s508
      %s510 = sphi 0, %s508
      %s511 = sphi 0, %s510
      %s525 = sphi 0, %s511
      %s529 = sphi 0, %s529
      %s531 = sphi 0, %s529
      %s532 = sphi 0, %s531
      %s546 = sphi 0, %s532
      %s550 = sphi 0, %s550
      %s552 = sphi 0, %s550
      %s553 = sphi 0, %s552
      %s567 = sphi 0, %s553
      %s573 = sphi 0, %s575
      %s576 = sphi 0, %s573
      %s577 = sphi 0, %s576
      %s593 = sphi 0, %s577
    $region4: #{tpu_custom_call.1} parent=1 // loop_header_branch
      %42 = sbr.rel (%p40) target = $region8
    $region5: #{tpu_custom_call.1} parent=1 // loop_body
      %s44 = ssub.s32 %s39, 1
      %s45 = ssub.s32 %s39, 2
      %s46 = sadd.s32 %s39, 1
      %s47 = ssub.s32 %s39, %s46
      %p48 = scmp.eq.s32.totalorder %s47, 0
      %s50 = sadd.s32 %s49, 1
      %s51 = scalar_select %p48, %s49, %s50
      %p54 = pneg %p48
      %p55 = scmp.eq.s32.totalorder %s39, 1
      %p56 = por %p54, %p55
      %p57 = scmp.ne.s32.totalorder %s49, %s52
      %p58 = scmp.eq.s32.totalorder %s39, 0
      %p59 = por %p57, %p58
      %p60 = scmp.ne.s32.totalorder %s49, %s52
      %p61 = scmp.eq.s32.totalorder %s44, 1
      %p62 = por %p60, %p61
      %p63 = scmp.ne.s32.totalorder %s52, %s53
      %p64 = scmp.eq.s32.totalorder %s44, 0
      %p65 = por %p63, %p64
      %p66 = scmp.ne.s32.totalorder %s52, %s53
      %p67 = scmp.eq.s32.totalorder %s45, 1
      %p68 = por %p66, %p67
      %p70 = scmp.ne.s32.totalorder %s53, %s69
      %p71 = scmp.eq.s32.totalorder %s45, 0
      %p72 = por %p70, %p71
      %s73 = ssub.s32 %s39, %s46
      %p74 = scmp.eq.s32.totalorder %s73, 0
      %s76 = sadd.s32 %s75, 1
      %s77 = scalar_select %p74, %s75, %s76
      %p80 = pneg %p74
      %p81 = scmp.eq.s32.totalorder %s39, 1
      %p82 = por %p80, %p81
      %p83 = scmp.ne.s32.totalorder %s75, %s78
      %p84 = scmp.eq.s32.totalorder %s39, 0
      %p85 = por %p83, %p84
      %p86 = scmp.ne.s32.totalorder %s75, %s78
      %p87 = scmp.eq.s32.totalorder %s44, 1
      %p88 = por %p86, %p87
      %p89 = scmp.ne.s32.totalorder %s78, %s79
      %p90 = scmp.eq.s32.totalorder %s44, 0
      %p91 = por %p89, %p90
      %p92 = scmp.ne.s32.totalorder %s78, %s79
      %p93 = scmp.eq.s32.totalorder %s45, 1
      %p94 = por %p92, %p93
      %p96 = scmp.ne.s32.totalorder %s79, %s95
      %p97 = scmp.eq.s32.totalorder %s45, 0
      %p98 = por %p96, %p97
      %s99 = ssub.s32 %s39, %s46
      %p100 = scmp.eq.s32.totalorder %s99, 0
      %s102 = sadd.s32 %s101, 1
      %s103 = scalar_select %p100, %s101, %s102
      %p106 = pneg %p100
      %p107 = scmp.eq.s32.totalorder %s39, 1
      %p108 = por %p106, %p107
      %p109 = scmp.ne.s32.totalorder %s101, %s104
      %p110 = scmp.eq.s32.totalorder %s39, 0
      %p111 = por %p109, %p110
      %p112 = scmp.ne.s32.totalorder %s101, %s104
      %p113 = scmp.eq.s32.totalorder %s44, 1
      %p114 = por %p112, %p113
      %p115 = scmp.ne.s32.totalorder %s104, %s105
      %p116 = scmp.eq.s32.totalorder %s44, 0
      %p117 = por %p115, %p116
      %p118 = scmp.ne.s32.totalorder %s104, %s105
      %p119 = scmp.eq.s32.totalorder %s45, 1
      %p120 = por %p118, %p119
      %p122 = scmp.ne.s32.totalorder %s105, %s121
      %p123 = scmp.eq.s32.totalorder %s45, 0
      %p124 = por %p122, %p123
      %s125 = ssub.s32 %s39, %s46
      %p126 = scmp.eq.s32.totalorder %s125, 0
      %s128 = sadd.s32 %s127, 1
      %s129 = scalar_select %p126, %s127, %s128
      %p132 = pneg %p126
      %p133 = scmp.eq.s32.totalorder %s39, 1
      %p134 = por %p132, %p133
      %p135 = scmp.ne.s32.totalorder %s127, %s130
      %p136 = scmp.eq.s32.totalorder %s39, 0
      %p137 = por %p135, %p136
      %p138 = scmp.ne.s32.totalorder %s127, %s130
      %p139 = scmp.eq.s32.totalorder %s44, 1
      %p140 = por %p138, %p139
      %p141 = scmp.ne.s32.totalorder %s130, %s131
      %p142 = scmp.eq.s32.totalorder %s44, 0
      %p143 = por %p141, %p142
      %p144 = scmp.ne.s32.totalorder %s130, %s131
      %p145 = scmp.eq.s32.totalorder %s45, 1
      %p146 = por %p144, %p145
      %p148 = scmp.ne.s32.totalorder %s131, %s147
      %p149 = scmp.eq.s32.totalorder %s45, 0
      %p150 = por %p148, %p149
      %s152 = sadd.s32 %s151, 1
      %p155 = scmp.eq.s32.totalorder %s39, 1
      %p156 = scmp.ne.s32.totalorder %s151, %s153
      %p157 = scmp.eq.s32.totalorder %s39, 0
      %p158 = por %p156, %p157
      %p159 = scmp.ne.s32.totalorder %s151, %s153
      %p160 = scmp.eq.s32.totalorder %s44, 1
      %p161 = por %p159, %p160
      %p162 = scmp.ne.s32.totalorder %s153, %s154
      %p163 = scmp.eq.s32.totalorder %s44, 0
      %p164 = por %p162, %p163
      %p165 = scmp.ne.s32.totalorder %s153, %s154
      %p166 = scmp.eq.s32.totalorder %s45, 1
      %p167 = por %p165, %p166
      %p169 = scmp.ne.s32.totalorder %s154, %s168
      %p170 = scmp.eq.s32.totalorder %s45, 0
      %p171 = por %p169, %p170
      %s173 = sadd.s32 %s172, 1
      %p176 = scmp.eq.s32.totalorder %s39, 1
      %p177 = scmp.ne.s32.totalorder %s172, %s174
      %p178 = scmp.eq.s32.totalorder %s39, 0
      %p179 = por %p177, %p178
      %p180 = scmp.ne.s32.totalorder %s172, %s174
      %p181 = scmp.eq.s32.totalorder %s44, 1
      %p182 = por %p180, %p181
      %p183 = scmp.ne.s32.totalorder %s174, %s175
      %p184 = scmp.eq.s32.totalorder %s44, 0
      %p185 = por %p183, %p184
      %p186 = scmp.ne.s32.totalorder %s174, %s175
      %p187 = scmp.eq.s32.totalorder %s45, 1
      %p188 = por %p186, %p187
      %p190 = scmp.ne.s32.totalorder %s175, %s189
      %p191 = scmp.eq.s32.totalorder %s45, 0
      %p192 = por %p190, %p191
      %s194 = sadd.s32 %s193, 1
      %p197 = scmp.eq.s32.totalorder %s39, 1
      %p198 = scmp.ne.s32.totalorder %s193, %s195
      %p199 = scmp.eq.s32.totalorder %s39, 0
      %p200 = por %p198, %p199
      %p201 = scmp.ne.s32.totalorder %s193, %s195
      %p202 = scmp.eq.s32.totalorder %s44, 1
      %p203 = por %p201, %p202
      %p204 = scmp.ne.s32.totalorder %s195, %s196
      %p205 = scmp.eq.s32.totalorder %s44, 0
      %p206 = por %p204, %p205
      %p207 = scmp.ne.s32.totalorder %s195, %s196
      %p208 = scmp.eq.s32.totalorder %s45, 1
      %p209 = por %p207, %p208
      %p211 = scmp.ne.s32.totalorder %s196, %s210
      %p212 = scmp.eq.s32.totalorder %s45, 0
      %p213 = por %p211, %p212
      %s215 = sadd.s32 %s214, 1
      %p218 = scmp.eq.s32.totalorder %s39, 1
      %p219 = scmp.ne.s32.totalorder %s214, %s216
      %p220 = scmp.eq.s32.totalorder %s39, 0
      %p221 = por %p219, %p220
      %p222 = scmp.ne.s32.totalorder %s214, %s216
      %p223 = scmp.eq.s32.totalorder %s44, 1
      %p224 = por %p222, %p223
      %p225 = scmp.ne.s32.totalorder %s216, %s217
      %p226 = scmp.eq.s32.totalorder %s44, 0
      %p227 = por %p225, %p226
      %p228 = scmp.ne.s32.totalorder %s216, %s217
      %p229 = scmp.eq.s32.totalorder %s45, 1
      %p230 = por %p228, %p229
      %p232 = scmp.ne.s32.totalorder %s217, %s231
      %p233 = scmp.eq.s32.totalorder %s45, 0
      %p234 = por %p232, %p233
      %s236 = sadd.s32 %s235, 1
      %p239 = scmp.eq.s32.totalorder %s39, 1
      %p240 = scmp.ne.s32.totalorder %s235, %s237
      %p241 = scmp.eq.s32.totalorder %s39, 0
      %p242 = por %p240, %p241
      %p243 = scmp.ne.s32.totalorder %s235, %s237
      %p244 = scmp.eq.s32.totalorder %s44, 1
      %p245 = por %p243, %p244
      %p246 = scmp.ne.s32.totalorder %s237, %s238
      %p247 = scmp.eq.s32.totalorder %s44, 0
      %p248 = por %p246, %p247
      %p249 = scmp.ne.s32.totalorder %s237, %s238
      %p250 = scmp.eq.s32.totalorder %s45, 1
      %p251 = por %p249, %p250
      %p253 = scmp.ne.s32.totalorder %s238, %s252
      %p254 = scmp.eq.s32.totalorder %s45, 0
      %p255 = por %p253, %p254
      %s257 = sadd.s32 %s256, 1
      %p260 = scmp.eq.s32.totalorder %s39, 1
      %p261 = scmp.ne.s32.totalorder %s256, %s258
      %p262 = scmp.eq.s32.totalorder %s39, 0
      %p263 = por %p261, %p262
      %p264 = scmp.ne.s32.totalorder %s256, %s258
      %p265 = scmp.eq.s32.totalorder %s44, 1
      %p266 = por %p264, %p265
      %p267 = scmp.ne.s32.totalorder %s258, %s259
      %p268 = scmp.eq.s32.totalorder %s44, 0
      %p269 = por %p267, %p268
      %p270 = scmp.ne.s32.totalorder %s258, %s259
      %p271 = scmp.eq.s32.totalorder %s45, 1
      %p272 = por %p270, %p271
      %p274 = scmp.ne.s32.totalorder %s259, %s273
      %p275 = scmp.eq.s32.totalorder %s45, 0
      %p276 = por %p274, %p275
      %s278 = sadd.s32 %s277, 1
      %p281 = scmp.eq.s32.totalorder %s39, 1
      %p282 = scmp.ne.s32.totalorder %s277, %s279
      %p283 = scmp.eq.s32.totalorder %s39, 0
      %p284 = por %p282, %p283
      %p285 = scmp.ne.s32.totalorder %s277, %s279
      %p286 = scmp.eq.s32.totalorder %s44, 1
      %p287 = por %p285, %p286
      %p288 = scmp.ne.s32.totalorder %s279, %s280
      %p289 = scmp.eq.s32.totalorder %s44, 0
      %p290 = por %p288, %p289
      %p291 = scmp.ne.s32.totalorder %s279, %s280
      %p292 = scmp.eq.s32.totalorder %s45, 1
      %p293 = por %p291, %p292
      %p295 = scmp.ne.s32.totalorder %s280, %s294
      %p296 = scmp.eq.s32.totalorder %s45, 0
      %p297 = por %p295, %p296
      %s299 = sadd.s32 %s298, 1
      %p302 = scmp.eq.s32.totalorder %s39, 1
      %p303 = scmp.ne.s32.totalorder %s298, %s300
      %p304 = scmp.eq.s32.totalorder %s39, 0
      %p305 = por %p303, %p304
      %p306 = scmp.ne.s32.totalorder %s298, %s300
      %p307 = scmp.eq.s32.totalorder %s44, 1
      %p308 = por %p306, %p307
      %p309 = scmp.ne.s32.totalorder %s300, %s301
      %p310 = scmp.eq.s32.totalorder %s44, 0
      %p311 = por %p309, %p310
      %p312 = scmp.ne.s32.totalorder %s300, %s301
      %p313 = scmp.eq.s32.totalorder %s45, 1
      %p314 = por %p312, %p313
      %p316 = scmp.ne.s32.totalorder %s301, %s315
      %p317 = scmp.eq.s32.totalorder %s45, 0
      %p318 = por %p316, %p317
      %s320 = sadd.s32 %s319, 1
      %p323 = scmp.eq.s32.totalorder %s39, 1
      %p324 = scmp.ne.s32.totalorder %s319, %s321
      %p325 = scmp.eq.s32.totalorder %s39, 0
      %p326 = por %p324, %p325
      %p327 = scmp.ne.s32.totalorder %s319, %s321
      %p328 = scmp.eq.s32.totalorder %s44, 1
      %p329 = por %p327, %p328
      %p330 = scmp.ne.s32.totalorder %s321, %s322
      %p331 = scmp.eq.s32.totalorder %s44, 0
      %p332 = por %p330, %p331
      %p333 = scmp.ne.s32.totalorder %s321, %s322
      %p334 = scmp.eq.s32.totalorder %s45, 1
      %p335 = por %p333, %p334
      %p337 = scmp.ne.s32.totalorder %s322, %s336
      %p338 = scmp.eq.s32.totalorder %s45, 0
      %p339 = por %p337, %p338
      %s341 = sadd.s32 %s340, 1
      %p344 = scmp.eq.s32.totalorder %s39, 1
      %p345 = scmp.ne.s32.totalorder %s340, %s342
      %p346 = scmp.eq.s32.totalorder %s39, 0
      %p347 = por %p345, %p346
      %p348 = scmp.ne.s32.totalorder %s340, %s342
      %p349 = scmp.eq.s32.totalorder %s44, 1
      %p350 = por %p348, %p349
      %p351 = scmp.ne.s32.totalorder %s342, %s343
      %p352 = scmp.eq.s32.totalorder %s44, 0
      %p353 = por %p351, %p352
      %p354 = scmp.ne.s32.totalorder %s342, %s343
      %p355 = scmp.eq.s32.totalorder %s45, 1
      %p356 = por %p354, %p355
      %p358 = scmp.ne.s32.totalorder %s343, %s357
      %p359 = scmp.eq.s32.totalorder %s45, 0
      %p360 = por %p358, %p359
      %s362 = sadd.s32 %s361, 1
      %p365 = scmp.eq.s32.totalorder %s39, 1
      %p366 = scmp.ne.s32.totalorder %s361, %s363
      %p367 = scmp.eq.s32.totalorder %s39, 0
      %p368 = por %p366, %p367
      %p369 = scmp.ne.s32.totalorder %s361, %s363
      %p370 = scmp.eq.s32.totalorder %s44, 1
      %p371 = por %p369, %p370
      %p372 = scmp.ne.s32.totalorder %s363, %s364
      %p373 = scmp.eq.s32.totalorder %s44, 0
      %p374 = por %p372, %p373
      %p375 = scmp.ne.s32.totalorder %s363, %s364
      %p376 = scmp.eq.s32.totalorder %s45, 1
      %p377 = por %p375, %p376
      %p379 = scmp.ne.s32.totalorder %s364, %s378
      %p380 = scmp.eq.s32.totalorder %s45, 0
      %p381 = por %p379, %p380
      %s383 = sadd.s32 %s382, 1
      %p386 = scmp.eq.s32.totalorder %s39, 1
      %p387 = scmp.ne.s32.totalorder %s382, %s384
      %p388 = scmp.eq.s32.totalorder %s39, 0
      %p389 = por %p387, %p388
      %p390 = scmp.ne.s32.totalorder %s382, %s384
      %p391 = scmp.eq.s32.totalorder %s44, 1
      %p392 = por %p390, %p391
      %p393 = scmp.ne.s32.totalorder %s384, %s385
      %p394 = scmp.eq.s32.totalorder %s44, 0
      %p395 = por %p393, %p394
      %p396 = scmp.ne.s32.totalorder %s384, %s385
      %p397 = scmp.eq.s32.totalorder %s45, 1
      %p398 = por %p396, %p397
      %p400 = scmp.ne.s32.totalorder %s385, %s399
      %p401 = scmp.eq.s32.totalorder %s45, 0
      %p402 = por %p400, %p401
      %s404 = sadd.s32 %s403, 1
      %p407 = scmp.eq.s32.totalorder %s39, 1
      %p408 = scmp.ne.s32.totalorder %s403, %s405
      %p409 = scmp.eq.s32.totalorder %s39, 0
      %p410 = por %p408, %p409
      %p411 = scmp.ne.s32.totalorder %s403, %s405
      %p412 = scmp.eq.s32.totalorder %s44, 1
      %p413 = por %p411, %p412
      %p414 = scmp.ne.s32.totalorder %s405, %s406
      %p415 = scmp.eq.s32.totalorder %s44, 0
      %p416 = por %p414, %p415
      %p417 = scmp.ne.s32.totalorder %s405, %s406
      %p418 = scmp.eq.s32.totalorder %s45, 1
      %p419 = por %p417, %p418
      %p421 = scmp.ne.s32.totalorder %s406, %s420
      %p422 = scmp.eq.s32.totalorder %s45, 0
      %p423 = por %p421, %p422
      %s425 = sadd.s32 %s424, 1
      %p428 = scmp.eq.s32.totalorder %s39, 1
      %p429 = scmp.ne.s32.totalorder %s424, %s426
      %p430 = scmp.eq.s32.totalorder %s39, 0
      %p431 = por %p429, %p430
      %p432 = scmp.ne.s32.totalorder %s424, %s426
      %p433 = scmp.eq.s32.totalorder %s44, 1
      %p434 = por %p432, %p433
      %p435 = scmp.ne.s32.totalorder %s426, %s427
      %p436 = scmp.eq.s32.totalorder %s44, 0
      %p437 = por %p435, %p436
      %p438 = scmp.ne.s32.totalorder %s426, %s427
      %p439 = scmp.eq.s32.totalorder %s45, 1
      %p440 = por %p438, %p439
      %p442 = scmp.ne.s32.totalorder %s427, %s441
      %p443 = scmp.eq.s32.totalorder %s45, 0
      %p444 = por %p442, %p443
      %s446 = sadd.s32 %s445, 1
      %p449 = scmp.eq.s32.totalorder %s39, 1
      %p450 = scmp.ne.s32.totalorder %s445, %s447
      %p451 = scmp.eq.s32.totalorder %s39, 0
      %p452 = por %p450, %p451
      %p453 = scmp.ne.s32.totalorder %s445, %s447
      %p454 = scmp.eq.s32.totalorder %s44, 1
      %p455 = por %p453, %p454
      %p456 = scmp.ne.s32.totalorder %s447, %s448
      %p457 = scmp.eq.s32.totalorder %s44, 0
      %p458 = por %p456, %p457
      %p459 = scmp.ne.s32.totalorder %s447, %s448
      %p460 = scmp.eq.s32.totalorder %s45, 1
      %p461 = por %p459, %p460
      %p463 = scmp.ne.s32.totalorder %s448, %s462
      %p464 = scmp.eq.s32.totalorder %s45, 0
      %p465 = por %p463, %p464
      %s467 = sadd.s32 %s466, 1
      %p470 = scmp.eq.s32.totalorder %s39, 1
      %p471 = scmp.ne.s32.totalorder %s466, %s468
      %p472 = scmp.eq.s32.totalorder %s39, 0
      %p473 = por %p471, %p472
      %p474 = scmp.ne.s32.totalorder %s466, %s468
      %p475 = scmp.eq.s32.totalorder %s44, 1
      %p476 = por %p474, %p475
      %p477 = scmp.ne.s32.totalorder %s468, %s469
      %p478 = scmp.eq.s32.totalorder %s44, 0
      %p479 = por %p477, %p478
      %p480 = scmp.ne.s32.totalorder %s468, %s469
      %p481 = scmp.eq.s32.totalorder %s45, 1
      %p482 = por %p480, %p481
      %p484 = scmp.ne.s32.totalorder %s469, %s483
      %p485 = scmp.eq.s32.totalorder %s45, 0
      %p486 = por %p484, %p485
      %s488 = sadd.s32 %s487, 1
      %p491 = scmp.eq.s32.totalorder %s39, 1
      %p492 = scmp.ne.s32.totalorder %s487, %s489
      %p493 = scmp.eq.s32.totalorder %s39, 0
      %p494 = por %p492, %p493
      %p495 = scmp.ne.s32.totalorder %s487, %s489
      %p496 = scmp.eq.s32.totalorder %s44, 1
      %p497 = por %p495, %p496
      %p498 = scmp.ne.s32.totalorder %s489, %s490
      %p499 = scmp.eq.s32.totalorder %s44, 0
      %p500 = por %p498, %p499
      %p501 = scmp.ne.s32.totalorder %s489, %s490
      %p502 = scmp.eq.s32.totalorder %s45, 1
      %p503 = por %p501, %p502
      %p505 = scmp.ne.s32.totalorder %s490, %s504
      %p506 = scmp.eq.s32.totalorder %s45, 0
      %p507 = por %p505, %p506
      %s509 = sadd.s32 %s508, 1
      %p512 = scmp.eq.s32.totalorder %s39, 1
      %p513 = scmp.ne.s32.totalorder %s508, %s510
      %p514 = scmp.eq.s32.totalorder %s39, 0
      %p515 = por %p513, %p514
      %p516 = scmp.ne.s32.totalorder %s508, %s510
      %p517 = scmp.eq.s32.totalorder %s44, 1
      %p518 = por %p516, %p517
      %p519 = scmp.ne.s32.totalorder %s510, %s511
      %p520 = scmp.eq.s32.totalorder %s44, 0
      %p521 = por %p519, %p520
      %p522 = scmp.ne.s32.totalorder %s510, %s511
      %p523 = scmp.eq.s32.totalorder %s45, 1
      %p524 = por %p522, %p523
      %p526 = scmp.ne.s32.totalorder %s511, %s525
      %p527 = scmp.eq.s32.totalorder %s45, 0
      %p528 = por %p526, %p527
      %s530 = sadd.s32 %s529, 1
      %p533 = scmp.eq.s32.totalorder %s39, 1
      %p534 = scmp.ne.s32.totalorder %s529, %s531
      %p535 = scmp.eq.s32.totalorder %s39, 0
      %p536 = por %p534, %p535
      %p537 = scmp.ne.s32.totalorder %s529, %s531
      %p538 = scmp.eq.s32.totalorder %s44, 1
      %p539 = por %p537, %p538
      %p540 = scmp.ne.s32.totalorder %s531, %s532
      %p541 = scmp.eq.s32.totalorder %s44, 0
      %p542 = por %p540, %p541
      %p543 = scmp.ne.s32.totalorder %s531, %s532
      %p544 = scmp.eq.s32.totalorder %s45, 1
      %p545 = por %p543, %p544
      %p547 = scmp.ne.s32.totalorder %s532, %s546
      %p548 = scmp.eq.s32.totalorder %s45, 0
      %p549 = por %p547, %p548
      %s551 = sadd.s32 %s550, 1
      %p554 = scmp.eq.s32.totalorder %s39, 1
      %p555 = scmp.ne.s32.totalorder %s550, %s552
      %p556 = scmp.eq.s32.totalorder %s39, 0
      %p557 = por %p555, %p556
      %p558 = scmp.ne.s32.totalorder %s550, %s552
      %p559 = scmp.eq.s32.totalorder %s44, 1
      %p560 = por %p558, %p559
      %p561 = scmp.ne.s32.totalorder %s552, %s553
      %p562 = scmp.eq.s32.totalorder %s44, 0
      %p563 = por %p561, %p562
      %p564 = scmp.ne.s32.totalorder %s552, %s553
      %p565 = scmp.eq.s32.totalorder %s45, 1
      %p566 = por %p564, %p565
      %p568 = scmp.ne.s32.totalorder %s553, %s567
      %p569 = scmp.eq.s32.totalorder %s45, 0
      %p570 = por %p568, %p569
      %s571 = ssub.s32 %s39, %s46
      %p572 = scmp.eq.s32.totalorder %s571, 0
      %s574 = sadd.s32 %s573, 1
      %s575 = scalar_select %p572, %s573, %s574
      %p578 = pneg %p572
      %p579 = scmp.eq.s32.totalorder %s39, 1
      %p580 = por %p578, %p579
      %p581 = scmp.ne.s32.totalorder %s573, %s576
      %p582 = scmp.eq.s32.totalorder %s39, 0
      %p583 = por %p581, %p582
      %p584 = scmp.ne.s32.totalorder %s573, %s576
      %p585 = scmp.eq.s32.totalorder %s44, 1
      %p586 = por %p584, %p585
      %p587 = scmp.ne.s32.totalorder %s576, %s577
      %p588 = scmp.eq.s32.totalorder %s44, 0
      %p589 = por %p587, %p588
      %p590 = scmp.ne.s32.totalorder %s576, %s577
      %p591 = scmp.eq.s32.totalorder %s45, 1
      %p592 = por %p590, %p591
      %p594 = scmp.ne.s32.totalorder %s577, %s593
      %p595 = scmp.eq.s32.totalorder %s45, 0
      %p596 = por %p594, %p595
      %p597 = scmp.le.s32.totalorder 1, %s39
      %p598 = scmp.lt.s32.totalorder %s39, 3
      %p599 = pnand %p597, %p598
      %p600 = pneg %p599
      // Predicated region
      $region9: #{tpu_custom_call.1} parent=5 // pred_check
        _
      $region10: #{tpu_custom_call.1} parent=5 // pred_check_branch
        %602 = sbr.rel (%p599) target = $region12
      $region11: #{tpu_custom_call.1} parent=5 // pred_region
        %s603 = ssub.s32 %s39, 1
        // Predicated region
        $region13: #{tpu_custom_call.1} parent=11 // pred_check
          %p604 = pneg %p164
        $region14: #{tpu_custom_call.1} parent=11 // pred_check_branch
          %606 = sbr.rel (%p604) target = $region16
        $region15: #{tpu_custom_call.1} parent=11 // pred_region
          _
        $region16: #{tpu_custom_call.1} parent=11 // pred_fallthru
          _
        // Predicated region
        $region17: #{tpu_custom_call.1} parent=11 // pred_check
          %p607 = pneg %p185
        $region18: #{tpu_custom_call.1} parent=11 // pred_check_branch
          %609 = sbr.rel (%p607) target = $region20
        $region19: #{tpu_custom_call.1} parent=11 // pred_region
          %s611 = ssub.s32 16, 16
          %612 = vsyncadd [#allocation6], %s611
          %s614 = sshll.u32 [#allocation5], 4
          %s615 = int_to_ptr.vmem [resolvable:$true] %s614
          %617 = dma.hbm_to_vmem [thread:$0]  %s5, 16, %s615, [#allocation6]
        $region20: #{tpu_custom_call.1} parent=11 // pred_fallthru
          _
        // Predicated region
        $region21: #{tpu_custom_call.1} parent=11 // pred_check
          %p618 = pneg %p206
        $region22: #{tpu_custom_call.1} parent=11 // pred_check_branch
          %620 = sbr.rel (%p618) target = $region24
        $region23: #{tpu_custom_call.1} parent=11 // pred_region
          _
        $region24: #{tpu_custom_call.1} parent=11 // pred_fallthru
          _
        // Predicated region
        $region25: #{tpu_custom_call.1} parent=11 // pred_check
          %p621 = pneg %p227
        $region26: #{tpu_custom_call.1} parent=11 // pred_check_branch
          %623 = sbr.rel (%p621) target = $region28
        $region27: #{tpu_custom_call.1} parent=11 // pred_region
          %s625 = ssub.s32 16, 16
          %626 = vsyncadd [#allocation6], %s625
          %s628 = sshll.u32 [#allocation7], 4
          %s629 = int_to_ptr.vmem [resolvable:$true] %s628
          %631 = dma.hbm_to_vmem [thread:$0]  %s7, 16, %s629, [#allocation6]
        $region28: #{tpu_custom_call.1} parent=11 // pred_fallthru
          _
        // Predicated region
        $region29: #{tpu_custom_call.1} parent=11 // pred_check
          %p632 = pneg %p248
        $region30: #{tpu_custom_call.1} parent=11 // pred_check_branch
          %634 = sbr.rel (%p632) target = $region32
        $region31: #{tpu_custom_call.1} parent=11 // pred_region
          _
        $region32: #{tpu_custom_call.1} parent=11 // pred_fallthru
          _
        // Predicated region
        $region33: #{tpu_custom_call.1} parent=11 // pred_check
          %p635 = pneg %p269
        $region34: #{tpu_custom_call.1} parent=11 // pred_check_branch
          %637 = sbr.rel (%p635) target = $region36
        $region35: #{tpu_custom_call.1} parent=11 // pred_region
          %s639 = ssub.s32 16, 16
          %640 = vsyncadd [#allocation9], %s639
          %s642 = sshll.u32 [#allocation8], 4
          %s643 = int_to_ptr.vmem [resolvable:$true] %s642
          %645 = dma.hbm_to_vmem [thread:$0]  %s9, 16, %s643, [#allocation9]
        $region36: #{tpu_custom_call.1} parent=11 // pred_fallthru
          _
        // Predicated region
        $region37: #{tpu_custom_call.1} parent=11 // pred_check
          %p646 = pneg %p290
        $region38: #{tpu_custom_call.1} parent=11 // pred_check_branch
          %648 = sbr.rel (%p646) target = $region40
        $region39: #{tpu_custom_call.1} parent=11 // pred_region
          %s650 = ssub.s32 16, 16
          %651 = vsyncadd [#allocation9], %s650
          %s653 = sshll.u32 [#allocation10], 4
          %s654 = int_to_ptr.vmem [resolvable:$true] %s653
          %656 = dma.hbm_to_vmem [thread:$0]  %s10, 16, %s654, [#allocation9]
        $region40: #{tpu_custom_call.1} parent=11 // pred_fallthru
          _
        // Predicated region
        $region41: #{tpu_custom_call.1} parent=11 // pred_check
          %p657 = pneg %p311
        $region42: #{tpu_custom_call.1} parent=11 // pred_check_branch
          %659 = sbr.rel (%p657) target = $region44
        $region43: #{tpu_custom_call.1} parent=11 // pred_region
          %s661 = ssub.s32 16, 16
          %662 = vsyncadd [#allocation12], %s661
          %s664 = sshll.u32 [#allocation11], 4
          %s665 = int_to_ptr.vmem [resolvable:$true] %s664
          %667 = dma.hbm_to_vmem [thread:$0]  %s11, 16, %s665, [#allocation12]
        $region44: #{tpu_custom_call.1} parent=11 // pred_fallthru
          _
        // Predicated region
        $region45: #{tpu_custom_call.1} parent=11 // pred_check
          %p668 = pneg %p332
        $region46: #{tpu_custom_call.1} parent=11 // pred_check_branch
          %670 = sbr.rel (%p668) target = $region48
        $region47: #{tpu_custom_call.1} parent=11 // pred_region
          _
        $region48: #{tpu_custom_call.1} parent=11 // pred_fallthru
          _
        // Predicated region
        $region49: #{tpu_custom_call.1} parent=11 // pred_check
          %p671 = pneg %p353
        $region50: #{tpu_custom_call.1} parent=11 // pred_check_branch
          %673 = sbr.rel (%p671) target = $region52
        $region51: #{tpu_custom_call.1} parent=11 // pred_region
          _
        $region52: #{tpu_custom_call.1} parent=11 // pred_fallthru
          _
        // Predicated region
        $region53: #{tpu_custom_call.1} parent=11 // pred_check
          %p674 = pneg %p374
        $region54: #{tpu_custom_call.1} parent=11 // pred_check_branch
          %676 = sbr.rel (%p674) target = $region56
        $region55: #{tpu_custom_call.1} parent=11 // pred_region
          _
        $region56: #{tpu_custom_call.1} parent=11 // pred_fallthru
          _
        // Predicated region
        $region57: #{tpu_custom_call.1} parent=11 // pred_check
          %p677 = pneg %p395
        $region58: #{tpu_custom_call.1} parent=11 // pred_check_branch
          %679 = sbr.rel (%p677) target = $region60
        $region59: #{tpu_custom_call.1} parent=11 // pred_region
          _
        $region60: #{tpu_custom_call.1} parent=11 // pred_fallthru
          _
        // Predicated region
        $region61: #{tpu_custom_call.1} parent=11 // pred_check
          %p680 = pneg %p416
        $region62: #{tpu_custom_call.1} parent=11 // pred_check_branch
          %682 = sbr.rel (%p680) target = $region64
        $region63: #{tpu_custom_call.1} parent=11 // pred_region
          _
        $region64: #{tpu_custom_call.1} parent=11 // pred_fallthru
          _
        // Predicated region
        $region65: #{tpu_custom_call.1} parent=11 // pred_check
          %p683 = pneg %p437
        $region66: #{tpu_custom_call.1} parent=11 // pred_check_branch
          %685 = sbr.rel (%p683) target = $region68
        $region67: #{tpu_custom_call.1} parent=11 // pred_region
          _
        $region68: #{tpu_custom_call.1} parent=11 // pred_fallthru
          _
        // Predicated region
        $region69: #{tpu_custom_call.1} parent=11 // pred_check
          %p686 = pneg %p458
        $region70: #{tpu_custom_call.1} parent=11 // pred_check_branch
          %688 = sbr.rel (%p686) target = $region72
        $region71: #{tpu_custom_call.1} parent=11 // pred_region
          _
        $region72: #{tpu_custom_call.1} parent=11 // pred_fallthru
          _
        // Predicated region
        $region73: #{tpu_custom_call.1} parent=11 // pred_check
          %p689 = pneg %p479
        $region74: #{tpu_custom_call.1} parent=11 // pred_check_branch
          %691 = sbr.rel (%p689) target = $region76
        $region75: #{tpu_custom_call.1} parent=11 // pred_region
          _
        $region76: #{tpu_custom_call.1} parent=11 // pred_fallthru
          _
        // Predicated region
        $region77: #{tpu_custom_call.1} parent=11 // pred_check
          %p692 = pneg %p500
        $region78: #{tpu_custom_call.1} parent=11 // pred_check_branch
          %694 = sbr.rel (%p692) target = $region80
        $region79: #{tpu_custom_call.1} parent=11 // pred_region
          _
        $region80: #{tpu_custom_call.1} parent=11 // pred_fallthru
          _
        // Predicated region
        $region81: #{tpu_custom_call.1} parent=11 // pred_check
          %p695 = pneg %p521
        $region82: #{tpu_custom_call.1} parent=11 // pred_check_branch
          %697 = sbr.rel (%p695) target = $region84
        $region83: #{tpu_custom_call.1} parent=11 // pred_region
          _
        $region84: #{tpu_custom_call.1} parent=11 // pred_fallthru
          _
        // Predicated region
        $region85: #{tpu_custom_call.1} parent=11 // pred_check
          %p698 = pneg %p542
        $region86: #{tpu_custom_call.1} parent=11 // pred_check_branch
          %700 = sbr.rel (%p698) target = $region88
        $region87: #{tpu_custom_call.1} parent=11 // pred_region
          _
        $region88: #{tpu_custom_call.1} parent=11 // pred_fallthru
          _
        // Predicated region
        $region89: #{tpu_custom_call.1} parent=11 // pred_check
          %p701 = pneg %p563
        $region90: #{tpu_custom_call.1} parent=11 // pred_check_branch
          %703 = sbr.rel (%p701) target = $region92
        $region91: #{tpu_custom_call.1} parent=11 // pred_region
          _
        $region92: #{tpu_custom_call.1} parent=11 // pred_fallthru
          _
      $region12: #{tpu_custom_call.1} parent=5 // pred_fallthru
        _
      %p704 = scmp.lt.s32.totalorder %s39, 2
      // Predicated region
      $region93: #{tpu_custom_call.1} parent=5 // pred_check
        %p705 = pneg %p704
      $region94: #{tpu_custom_call.1} parent=5 // pred_check_branch
        %707 = sbr.rel (%p705) target = $region96
      $region95: #{tpu_custom_call.1} parent=5 // pred_region
        // Predicated region
        $region97: #{tpu_custom_call.1} parent=95 // pred_check
          %p708 = pneg %p59
        $region98: #{tpu_custom_call.1} parent=95 // pred_check_branch
          %710 = sbr.rel (%p708) target = $region100
        $region99: #{tpu_custom_call.1} parent=95 // pred_region
          %p711 = scmp.lt.s32.totalorder %s39, 1
          %s712 = scalar_select %p711, %s39, 1
          %s713 = smul.addr %s712, 8
          %s714 = scalar_lea.vmem %s0, %s713
        $region100: #{tpu_custom_call.1} parent=95 // pred_fallthru
          _
        // Predicated region
        $region101: #{tpu_custom_call.1} parent=95 // pred_check
          %p715 = pneg %p85
        $region102: #{tpu_custom_call.1} parent=95 // pred_check_branch
          %717 = sbr.rel (%p715) target = $region104
        $region103: #{tpu_custom_call.1} parent=95 // pred_region
          %p718 = scmp.lt.s32.totalorder %s39, 1
          %s719 = scalar_select %p718, %s39, 1
          %s720 = smul.addr %s719, 2
          %s721 = smul.addr %s720, 8
          %s722 = scalar_lea.vmem %s1, %s721
        $region104: #{tpu_custom_call.1} parent=95 // pred_fallthru
          _
        // Predicated region
        $region105: #{tpu_custom_call.1} parent=95 // pred_check
          %p723 = pneg %p111
        $region106: #{tpu_custom_call.1} parent=95 // pred_check_branch
          %725 = sbr.rel (%p723) target = $region108
        $region107: #{tpu_custom_call.1} parent=95 // pred_region
          %p726 = scmp.lt.s32.totalorder %s39, 1
          %s727 = scalar_select %p726, %s39, 1
          %s728 = smul.addr %s727, 8
          %s729 = scalar_lea.vmem %s2, %s728
        $region108: #{tpu_custom_call.1} parent=95 // pred_fallthru
          _
        // Predicated region
        $region109: #{tpu_custom_call.1} parent=95 // pred_check
          %p730 = pneg %p137
        $region110: #{tpu_custom_call.1} parent=95 // pred_check_branch
          %732 = sbr.rel (%p730) target = $region112
        $region111: #{tpu_custom_call.1} parent=95 // pred_region
          %s733 = sand.u32 %s127, 1
          %s734 = scalar_lea.sflag [#allocation3], %s733
          %s735 = sand.u32 %s127, 1
          %s736 = scalar_lea.vmem [#allocation2], %s735
          %s738 = ssub.s32 16, 16
          %739 = vsyncadd %s734, %s738
          %s740 = smul.addr %s39, 16
          %s741 = scalar_lea.hbm %s3, %s740
          %s743 = sshll.u32 %s736, 4
          %s744 = int_to_ptr.vmem [resolvable:$true] %s743
          %746 = dma.hbm_to_vmem [thread:$0]  %s741, 16, %s744, %s734
        $region112: #{tpu_custom_call.1} parent=95 // pred_fallthru
          _
      $region96: #{tpu_custom_call.1} parent=5 // pred_fallthru
        _
      %p747 = scmp.le.s32.totalorder 1, %s39
      %p748 = scmp.lt.s32.totalorder %s39, 3
      %p749 = pnand %p747, %p748
      %p750 = pneg %p749
      // Predicated region
      $region113: #{tpu_custom_call.1} parent=5 // pred_check
        _
      $region114: #{tpu_custom_call.1} parent=5 // pred_check_branch
        %752 = sbr.rel (%p749) target = $region116
      $region115: #{tpu_custom_call.1} parent=5 // pred_region
        %s753 = ssub.s32 %s39, 1
        %s754 = sand.u32 %s130, 1
        %s755 = scalar_lea.sflag [#allocation3], %s754
        %s756 = sand.u32 %s130, 1
        %s757 = scalar_lea.vmem [#allocation2], %s756
        // Predicated region
        $region117: #{tpu_custom_call.1} parent=115 // pred_check
          %p758 = pneg %p143
        $region118: #{tpu_custom_call.1} parent=115 // pred_check_branch
          %760 = sbr.rel (%p758) target = $region120
        $region119: #{tpu_custom_call.1} parent=115 // pred_region
          %761 = dma.done %s755, 16
        $region120: #{tpu_custom_call.1} parent=115 // pred_fallthru
          _
        // Predicated region
        $region121: #{tpu_custom_call.1} parent=115 // pred_check
          %p762 = pneg %p185
        $region122: #{tpu_custom_call.1} parent=115 // pred_check_branch
          %764 = sbr.rel (%p762) target = $region124
        $region123: #{tpu_custom_call.1} parent=115 // pred_region
          %765 = dma.done [#allocation6], 16
        $region124: #{tpu_custom_call.1} parent=115 // pred_fallthru
          _
        // Predicated region
        $region125: #{tpu_custom_call.1} parent=115 // pred_check
          %p766 = pneg %p227
        $region126: #{tpu_custom_call.1} parent=115 // pred_check_branch
          %768 = sbr.rel (%p766) target = $region128
        $region127: #{tpu_custom_call.1} parent=115 // pred_region
          %769 = dma.done [#allocation6], 16
        $region128: #{tpu_custom_call.1} parent=115 // pred_fallthru
          _
        // Predicated region
        $region129: #{tpu_custom_call.1} parent=115 // pred_check
          %p770 = pneg %p269
        $region130: #{tpu_custom_call.1} parent=115 // pred_check_branch
          %772 = sbr.rel (%p770) target = $region132
        $region131: #{tpu_custom_call.1} parent=115 // pred_region
          %773 = dma.done [#allocation9], 16
        $region132: #{tpu_custom_call.1} parent=115 // pred_fallthru
          _
        // Predicated region
        $region133: #{tpu_custom_call.1} parent=115 // pred_check
          %p774 = pneg %p290
        $region134: #{tpu_custom_call.1} parent=115 // pred_check_branch
          %776 = sbr.rel (%p774) target = $region136
        $region135: #{tpu_custom_call.1} parent=115 // pred_region
          %777 = dma.done [#allocation9], 16
        $region136: #{tpu_custom_call.1} parent=115 // pred_fallthru
          _
        // Predicated region
        $region137: #{tpu_custom_call.1} parent=115 // pred_check
          %p778 = pneg %p311
        $region138: #{tpu_custom_call.1} parent=115 // pred_check_branch
          %780 = sbr.rel (%p778) target = $region140
        $region139: #{tpu_custom_call.1} parent=115 // pred_region
          %781 = dma.done [#allocation12], 16
        $region140: #{tpu_custom_call.1} parent=115 // pred_fallthru
          _
        %p782 = scmp.lt.s32.totalorder %s44, 1
        %s783 = scalar_select %p782, %s44, 1
        %s784 = smul.addr %s783, 8
        %s785 = scalar_lea.vmem %s0, %s784
        %p786 = pneg %p65
        %p787 = pneg %p62
        %p788 = scmp.lt.s32.totalorder %s44, 1
        %s789 = scalar_select %p788, %s44, 1
        %s790 = smul.addr %s789, 2
        %s791 = smul.addr %s790, 8
        %s792 = scalar_lea.vmem %s1, %s791
        %p793 = pneg %p91
        %p794 = pneg %p88
        %p795 = scmp.lt.s32.totalorder %s44, 1
        %s796 = scalar_select %p795, %s44, 1
        %s797 = smul.addr %s796, 8
        %s798 = scalar_lea.vmem %s2, %s797
        %p799 = pneg %p117
        %p800 = pneg %p114
        %s801 = sand.u32 %s130, 1
        %s802 = scalar_lea.sflag [#allocation3], %s801
        %s803 = sand.u32 %s130, 1
        %s804 = scalar_lea.vmem [#allocation2], %s803
        %p805 = pneg %p143
        %p806 = pneg %p140
        %p807 = pneg %p164
        %p808 = pneg %p161
        %p809 = pneg %p185
        %p810 = pneg %p182
        %p811 = pneg %p206
        %p812 = pneg %p203
        %p813 = pneg %p227
        %p814 = pneg %p224
        %p815 = pneg %p248
        %p816 = pneg %p245
        %p817 = pneg %p269
        %p818 = pneg %p266
        %p819 = pneg %p290
        %p820 = pneg %p287
        %p821 = pneg %p311
        %p822 = pneg %p308
        %p823 = pneg %p332
        %p824 = pneg %p329
        %p825 = pneg %p353
        %p826 = pneg %p350
        %p827 = pneg %p374
        %p828 = pneg %p371
        %p829 = pneg %p395
        %p830 = pneg %p392
        %p831 = pneg %p416
        %p832 = pneg %p413
        %p833 = pneg %p437
        %p834 = pneg %p434
        %p835 = pneg %p458
        %p836 = pneg %p455
        %p837 = pneg %p479
        %p838 = pneg %p476
        %p839 = pneg %p500
        %p840 = pneg %p497
        %p841 = pneg %p521
        %p842 = pneg %p518
        %p843 = pneg %p542
        %p844 = pneg %p539
        %p845 = pneg %p563
        %p846 = pneg %p560
        %p847 = pneg %p589
        %p848 = pneg %p586
        %s849 = sand.u32 %s576, 1
        %s850 = scalar_lea.sflag [#allocation4], %s849
        %s851 = sand.u32 %s576, 1
        %s852 = smul.addr %s851, 8
        %s853 = scalar_lea.vmem [#allocation13], %s852
        %p854 = scmp.lt.s32.totalorder %s44, 1
        %s855 = scalar_select %p854, %s44, 1
        %s856 = smul.addr %s855, 8
        %s857 = scalar_lea.vmem %s0, %s856
        %p858 = scmp.lt.s32.totalorder %s44, 1
        %s859 = scalar_select %p858, %s44, 1
        %s860 = smul.addr %s859, 2
        %s861 = smul.addr %s860, 8
        %s862 = scalar_lea.vmem %s1, %s861
        %p863 = scmp.lt.s32.totalorder %s44, 1
        %s864 = scalar_select %p863, %s44, 1
        %s865 = smul.addr %s864, 8
        %s866 = scalar_lea.vmem %s2, %s865
        %v868 = vld [vmem:[%s857] sm:$0xff]
        %v869 = vld [vmem:[%s862] sm:$0xff]
        %v870 = vld [vmem:[%s862 + $0x8] sm:$0x3]
        %v871 = vld [vmem:[%s866] sm:$0xff]
        %v872 = vld [vmem:[%s757] sm:$0x1]
        %v873 = vld [vmem:[%s4] sm:$0x1]
        %v874 = vld [vmem:[#allocation5] sm:$0x1]
        %vm875 = vcmask 261120
        %v876 = vsel %vm875, %v868, 0.0
        %877 = vadd.xlane.f32.xlu0 %v876
        %v878 = vpop.xlane.xlu0 %877
        %v879 = vrcp.pop 32.0
        %v880 = vmul.f32 %v878, %v879
        %v881 = vsub.f32 %v868, %v880
        %v882 = vmul.f32 %v881, %v881
        %v883 = vsel %vm875, %v882, 0.0
        %884 = vadd.xlane.f32.xlu0 %v883
        %v885 = vpop.xlane.xlu0 %884
        %v886 = vrcp.pop 31.0
        %v887 = vmul.f32 %v885, %v886
        %v888 = vrsqrt.pop %v887
        %v889 = vmul.f32 %v887, %v888
        %vm890 = vcmp.eq.f32.partialorder %v887, inf
        %v891 = vsel %vm890, %v887, %v889
        %vm892 = vcmp.eq.f32.partialorder %v887, 0.0
        %v893 = vand.u32 %v887, 2147483648
        %v894 = vsel %vm892, %v893, %v891
        %v896 = vlaneseq
        %v897 = vshrl.u32 %v896, 7
        %v898 = vsub.s32 0, %v897
        %v899 = vrot.slane %v873, %v898
        %v901 = vmul.f32 %v899, %v881
        %v902 = vadd.f32 %v894, 1e-06
        %v903 = vrcp.pop %v902
        %v904 = vmul.f32 %v901, %v903
        %v906 = vlaneseq
        %v907 = vshrl.u32 %v906, 7
        %v908 = vsub.s32 0, %v907
        %v909 = vrot.slane %v874, %v908
        %v911 = vadd.f32 %v904, %v909
        %v912 = vpack.c.bf16 %v911, %v911
        %v913 = vld [vmem:[%s6] sm:$0xf]
        %v914 = vld [vmem:[%s6 + $0x4] sm:$0xf]
        %v915 = vld [vmem:[%s6 + $0x8] sm:$0xf]
        %v916 = vld [vmem:[%s6 + $0xc] sm:$0xf]
        %v917 = vld [vmem:[#allocation7] sm:$0x1]
        %v919 = vlaneseq
        %v920 = vshrl.u32 %v919, 7
        %v921 = vsub.s32 0, %v920
        %v922 = vrot.slane %v917, %v921
        %v928 = vunpack.c.l.b16 %v913
        %v929 = vunpack.c.l.b16 %v914
        %v930 = vunpack.c.l.b16 %v915
        %v931 = vunpack.c.l.b16 %v916
        %v932 = vpack.c.b16 %v929, %v928
        %v933 = vpack.c.b16 %v931, %v930
        %v937 = vsel %vm875, %v912, 0
        %939 = vmatprep.subr.bf16.mxu0 0
        %940 = vmatpush1.bf16.msra.mxu0 %v932
        %941 = vmatprep.subr.bf16.mxu0 0
        %942 = vmatpush1.bf16.msra.mxu0 %v933
        %943 = vmatprep.subr.bf16.mxu0 0
        %944 = vmatpush1.bf16.msra.mxu0 0
        %945 = vmatprep.subr.bf16.mxu0 0
        %946 = vmatpush1.bf16.msra.mxu0 0
        %947 = vmatprep.subr.bf16.mxu0 0
        %948 = vmatpush1.bf16.msra.mxu0 0
        %949 = vmatprep.subr.bf16.mxu0 0
        %950 = vmatpush1.bf16.msra.mxu0 0
        %951 = vmatprep.subr.bf16.mxu0 0
        %952 = vmatpush1.bf16.msra.mxu0 0
        %953 = vmatprep.subr.bf16.mxu0 0
        %954 = vmatpush1.bf16.msra.mxu0 0
        %955 = vmatprep.subr.bf16.mxu0 0
        %956 = vmatpush1.bf16.msra.mxu0 0
        %957 = vmatprep.subr.bf16.mxu0 0
        %958 = vmatpush1.bf16.msra.mxu0 0
        %959 = vmatprep.subr.bf16.mxu0 0
        %960 = vmatpush1.bf16.msra.mxu0 0
        %961 = vmatprep.subr.bf16.mxu0 0
        %962 = vmatpush1.bf16.msra.mxu0 0
        %963 = vmatprep.subr.bf16.mxu0 0
        %964 = vmatpush1.bf16.msra.mxu0 0
        %965 = vmatprep.subr.bf16.mxu0 0
        %966 = vmatpush1.bf16.msra.mxu0 0
        %967 = vmatprep.subr.bf16.mxu0 0
        %968 = vmatpush1.bf16.msra.mxu0 0
        %969 = vmatprep.subr.bf16.mxu0 0
        %970 = vmatpush1.bf16.msra.mxu0 0
        %971 = vmatprep.mubr.bf16.mxu0 0
        %972 = vmatmul.mubr.bf16.gmra.mrb[0].mxu0 %v937
        %v973 = vpop.f32.mrb[0].mxu0
        %v974 = vadd.f32 %v922, %v973
        %v975 = vpop.f32.mrb[0].mxu0
        %v976 = vpop.f32.mrb[0].mxu0
        %v977 = vpop.f32.mrb[0].mxu0
        %978 = vdwg.mxu0
        %v979 = vmul.f32 %v974, 0.35355338
        %v980 = vpack.c.bf16 %v979, %v979
        %v981 = vpack.c.bf16 %v974, %v974
        %983 = vrot.lane.b32.xlu0 %v981, 96
        %v984 = vpop.permute.xlu0 %983
        %vm985 = vcmask 64512
        %v987 = vsel %vm985, %v980, 0
        %v990 = vsel %vm985, %v984, 0
        %992 = vmatprep.subr.bf16.mxu0 0
        %993 = vmatpush1.bf16.xpose.msra.mxu0 %v990
        %994 = vmatprep.subr.bf16.mxu0 0
        %995 = vmatpush1.bf16.xpose.msra.mxu0 0
        %996 = vmatprep.subr.bf16.mxu0 0
        %997 = vmatpush1.bf16.xpose.msra.mxu0 0
        %998 = vmatprep.subr.bf16.mxu0 0
        %999 = vmatpush1.bf16.xpose.msra.mxu0 0
        %1000 = vmatprep.subr.bf16.mxu0 0
        %1001 = vmatpush1.bf16.xpose.msra.mxu0 0
        %1002 = vmatprep.subr.bf16.mxu0 0
        %1003 = vmatpush1.bf16.xpose.msra.mxu0 0
        %1004 = vmatprep.subr.bf16.mxu0 0
        %1005 = vmatpush1.bf16.xpose.msra.mxu0 0
        %1006 = vmatprep.subr.bf16.mxu0 0
        %1007 = vmatpush1.bf16.xpose.msra.mxu0 0
        %1008 = vmatprep.subr.bf16.mxu0 0
        %1009 = vmatpush1.bf16.xpose.msra.mxu0 0
        %1010 = vmatprep.subr.bf16.mxu0 0
        %1011 = vmatpush1.bf16.xpose.msra.mxu0 0
        %1012 = vmatprep.subr.bf16.mxu0 0
        %1013 = vmatpush1.bf16.xpose.msra.mxu0 0
        %1014 = vmatprep.subr.bf16.mxu0 0
        %1015 = vmatpush1.bf16.xpose.msra.mxu0 0
        %1016 = vmatprep.subr.bf16.mxu0 0
        %1017 = vmatpush1.bf16.xpose.msra.mxu0 0
        %1018 = vmatprep.subr.bf16.mxu0 0
        %1019 = vmatpush1.bf16.xpose.msra.mxu0 0
        %1020 = vmatprep.subr.bf16.mxu0 0
        %1021 = vmatpush1.bf16.xpose.msra.mxu0 0
        %1022 = vmatprep.subr.bf16.mxu0 0
        %1023 = vmatpush1.bf16.xpose.msra.mxu0 0
        %1024 = vmatprep.mubr.bf16.mxu0 0
        %1025 = vmatmul.mubr.bf16.gmra.mrb[0].mxu0 %v987
        %v1026 = vpop.f32.mrb[0].mxu0
        %v1027 = vadd.f32 0.0, %v1026
        %v1028 = vpop.f32.mrb[0].mxu0
        %v1029 = vpop.f32.mrb[0].mxu0
        %v1030 = vpop.f32.mrb[0].mxu0
        %1031 = vdwg.mxu0
        %vm1032 = vcmp.eq.f32.partialorder %v871, 0.0
        %v1033 = vsel %vm1032, -1e+09, %v1027
        %v1034 = vsel %vm985, %v1033, -inf
        %1035 = vmax.xlane.f32.xlu0 %v1034
        %v1036 = vpop.xlane.xlu0 %1035
        %v1037 = vsub.f32 %v1033, %v1036
        %v1038 = vmul.f32 %v1037, 1.442695
        %v1039 = vpow.pop %v1038
        %v1040 = vsel %vm985, %v1039, 0.0
        %1041 = vadd.xlane.f32.xlu0 %v1040
        %v1042 = vpop.xlane.xlu0 %1041
        %v1043 = vrcp.pop %v1042
        %v1044 = vmul.f32 %v1039, %v1043
        %v1045 = vpack.c.bf16 %v1044, %v1044
        %1046 = vrot.lane.b32.xlu0 %v981, 64
        %v1047 = vpop.permute.xlu0 %1046
        %v1049 = vsel %vm985, %v1045, 0
        %vm1051 = vcmask 1043456
        %v1053 = vsel %vm1051, %v1047, 0
        %1055 = vmatprep.subr.bf16.mxu0 0
        %1056 = vmatpush1.bf16.msra.mxu0 %v1053
        %1057 = vmatprep.subr.bf16.mxu0 0
        %1058 = vmatpush1.bf16.msra.mxu0 0
        %1059 = vmatprep.subr.bf16.mxu0 0
        %1060 = vmatpush1.bf16.msra.mxu0 0
        %1061 = vmatprep.subr.bf16.mxu0 0
        %1062 = vmatpush1.bf16.msra.mxu0 0
        %1063 = vmatprep.subr.bf16.mxu0 0
        %1064 = vmatpush1.bf16.msra.mxu0 0
        %1065 = vmatprep.subr.bf16.mxu0 0
        %1066 = vmatpush1.bf16.msra.mxu0 0
        %1067 = vmatprep.subr.bf16.mxu0 0
        %1068 = vmatpush1.bf16.msra.mxu0 0
        %1069 = vmatprep.subr.bf16.mxu0 0
        %1070 = vmatpush1.bf16.msra.mxu0 0
        %1071 = vmatprep.subr.bf16.mxu0 0
        %1072 = vmatpush1.bf16.msra.mxu0 0
        %1073 = vmatprep.subr.bf16.mxu0 0
        %1074 = vmatpush1.bf16.msra.mxu0 0
        %1075 = vmatprep.subr.bf16.mxu0 0
        %1076 = vmatpush1.bf16.msra.mxu0 0
        %1077 = vmatprep.subr.bf16.mxu0 0
        %1078 = vmatpush1.bf16.msra.mxu0 0
        %1079 = vmatprep.subr.bf16.mxu0 0
        %1080 = vmatpush1.bf16.msra.mxu0 0
        %1081 = vmatprep.subr.bf16.mxu0 0
        %1082 = vmatpush1.bf16.msra.mxu0 0
        %1083 = vmatprep.subr.bf16.mxu0 0
        %1084 = vmatpush1.bf16.msra.mxu0 0
        %1085 = vmatprep.subr.bf16.mxu0 0
        %1086 = vmatpush1.bf16.msra.mxu0 0
        %1087 = vmatprep.mubr.bf16.mxu0 0
        %1088 = vmatmul.mubr.bf16.gmra.mrb[0].mxu0 %v1049
        %v1089 = vpop.f32.mrb[0].mxu0
        %v1090 = vadd.f32 0.0, %v1089
        %v1091 = vpop.f32.mrb[0].mxu0
        %v1092 = vpop.f32.mrb[0].mxu0
        %v1093 = vpop.f32.mrb[0].mxu0
        %1094 = vdwg.mxu0
        %1096 = vrot.lane.b32.xlu0 %v980, 120
        %v1097 = vpop.permute.xlu0 %1096
        %1098 = vrot.lane.b32.xlu0 %v981, 88
        %v1099 = vpop.permute.xlu0 %1098
        %v1101 = vsel %vm985, %v1097, 0
        %v1104 = vsel %vm985, %v1099, 0
        %1106 = vmatprep.subr.bf16.mxu0 0
        %1107 = vmatpush1.bf16.xpose.msra.mxu0 %v1104
        %1108 = vmatprep.subr.bf16.mxu0 0
        %1109 = vmatpush1.bf16.xpose.msra.mxu0 0
        %1110 = vmatprep.subr.bf16.mxu0 0
        %1111 = vmatpush1.bf16.xpose.msra.mxu0 0
        %1112 = vmatprep.subr.bf16.mxu0 0
        %1113 = vmatpush1.bf16.xpose.msra.mxu0 0
        %1114 = vmatprep.subr.bf16.mxu0 0
        %1115 = vmatpush1.bf16.xpose.msra.mxu0 0
        %1116 = vmatprep.subr.bf16.mxu0 0
        %1117 = vmatpush1.bf16.xpose.msra.mxu0 0
        %1118 = vmatprep.subr.bf16.mxu0 0
        %1119 = vmatpush1.bf16.xpose.msra.mxu0 0
        %1120 = vmatprep.subr.bf16.mxu0 0
        %1121 = vmatpush1.bf16.xpose.msra.mxu0 0
        %1122 = vmatprep.subr.bf16.mxu0 0
        %1123 = vmatpush1.bf16.xpose.msra.mxu0 0
        %1124 = vmatprep.subr.bf16.mxu0 0
        %1125 = vmatpush1.bf16.xpose.msra.mxu0 0
        %1126 = vmatprep.subr.bf16.mxu0 0
        %1127 = vmatpush1.bf16.xpose.msra.mxu0 0
        %1128 = vmatprep.subr.bf16.mxu0 0
        %1129 = vmatpush1.bf16.xpose.msra.mxu0 0
        %1130 = vmatprep.subr.bf16.mxu0 0
        %1131 = vmatpush1.bf16.xpose.msra.mxu0 0
        %1132 = vmatprep.subr.bf16.mxu0 0
        %1133 = vmatpush1.bf16.xpose.msra.mxu0 0
        %1134 = vmatprep.subr.bf16.mxu0 0
        %1135 = vmatpush1.bf16.xpose.msra.mxu0 0
        %1136 = vmatprep.subr.bf16.mxu0 0
        %1137 = vmatpush1.bf16.xpose.msra.mxu0 0
        %1138 = vmatprep.mubr.bf16.mxu0 0
        %1139 = vmatmul.mubr.bf16.gmra.mrb[0].mxu0 %v1101
        %v1140 = vpop.f32.mrb[0].mxu0
        %v1141 = vadd.f32 0.0, %v1140
        %v1142 = vpop.f32.mrb[0].mxu0
        %v1143 = vpop.f32.mrb[0].mxu0
        %v1144 = vpop.f32.mrb[0].mxu0
        %1145 = vdwg.mxu0
        %v1146 = vsel %vm1032, -1e+09, %v1141
        %v1147 = vsel %vm985, %v1146, -inf
        %1148 = vmax.xlane.f32.xlu0 %v1147
        %v1149 = vpop.xlane.xlu0 %1148
        %v1150 = vsub.f32 %v1146, %v1149
        %v1151 = vmul.f32 %v1150, 1.442695
        %v1152 = vpow.pop %v1151
        %v1153 = vsel %vm985, %v1152, 0.0
        %1154 = vadd.xlane.f32.xlu0 %v1153
        %v1155 = vpop.xlane.xlu0 %1154
        %v1156 = vrcp.pop %v1155
        %v1157 = vmul.f32 %v1152, %v1156
        %v1158 = vpack.c.bf16 %v1157, %v1157
        %1159 = vrot.lane.b32.xlu0 %v981, 56
        %v1160 = vpop.permute.xlu0 %1159
        %v1162 = vsel %vm985, %v1158, 0
        %v1165 = vsel %vm1051, %v1160, 0
        %1167 = vmatprep.subr.bf16.mxu0 0
        %1168 = vmatpush1.bf16.msra.mxu0 %v1165
        %1169 = vmatprep.subr.bf16.mxu0 0
        %1170 = vmatpush1.bf16.msra.mxu0 0
        %1171 = vmatprep.subr.bf16.mxu0 0
        %1172 = vmatpush1.bf16.msra.mxu0 0
        %1173 = vmatprep.subr.bf16.mxu0 0
        %1174 = vmatpush1.bf16.msra.mxu0 0
        %1175 = vmatprep.subr.bf16.mxu0 0
        %1176 = vmatpush1.bf16.msra.mxu0 0
        %1177 = vmatprep.subr.bf16.mxu0 0
        %1178 = vmatpush1.bf16.msra.mxu0 0
        %1179 = vmatprep.subr.bf16.mxu0 0
        %1180 = vmatpush1.bf16.msra.mxu0 0
        %1181 = vmatprep.subr.bf16.mxu0 0
        %1182 = vmatpush1.bf16.msra.mxu0 0
        %1183 = vmatprep.subr.bf16.mxu0 0
        %1184 = vmatpush1.bf16.msra.mxu0 0
        %1185 = vmatprep.subr.bf16.mxu0 0
        %1186 = vmatpush1.bf16.msra.mxu0 0
        %1187 = vmatprep.subr.bf16.mxu0 0
        %1188 = vmatpush1.bf16.msra.mxu0 0
        %1189 = vmatprep.subr.bf16.mxu0 0
        %1190 = vmatpush1.bf16.msra.mxu0 0
        %1191 = vmatprep.subr.bf16.mxu0 0
        %1192 = vmatpush1.bf16.msra.mxu0 0
        %1193 = vmatprep.subr.bf16.mxu0 0
        %1194 = vmatpush1.bf16.msra.mxu0 0
        %1195 = vmatprep.subr.bf16.mxu0 0
        %1196 = vmatpush1.bf16.msra.mxu0 0
        %1197 = vmatprep.subr.bf16.mxu0 0
        %1198 = vmatpush1.bf16.msra.mxu0 0
        %1199 = vmatprep.mubr.bf16.mxu0 0
        %1200 = vmatmul.mubr.bf16.gmra.mrb[0].mxu0 %v1162
        %v1201 = vpop.f32.mrb[0].mxu0
        %v1202 = vadd.f32 0.0, %v1201
        %v1203 = vpop.f32.mrb[0].mxu0
        %v1204 = vpop.f32.mrb[0].mxu0
        %v1205 = vpop.f32.mrb[0].mxu0
        %1206 = vdwg.mxu0
        %1207 = vrot.lane.b32.xlu0 %v980, 112
        %v1208 = vpop.permute.xlu0 %1207
        %1209 = vrot.lane.b32.xlu0 %v981, 80
        %v1210 = vpop.permute.xlu0 %1209
        %v1212 = vsel %vm985, %v1208, 0
        %v1215 = vsel %vm985, %v1210, 0
        %1217 = vmatprep.subr.bf16.mxu0 0
        %1218 = vmatpush1.bf16.xpose.msra.mxu0 %v1215
        %1219 = vmatprep.subr.bf16.mxu0 0
        %1220 = vmatpush1.bf16.xpose.msra.mxu0 0
        %1221 = vmatprep.subr.bf16.mxu0 0
        %1222 = vmatpush1.bf16.xpose.msra.mxu0 0
        %1223 = vmatprep.subr.bf16.mxu0 0
        %1224 = vmatpush1.bf16.xpose.msra.mxu0 0
        %1225 = vmatprep.subr.bf16.mxu0 0
        %1226 = vmatpush1.bf16.xpose.msra.mxu0 0
        %1227 = vmatprep.subr.bf16.mxu0 0
        %1228 = vmatpush1.bf16.xpose.msra.mxu0 0
        %1229 = vmatprep.subr.bf16.mxu0 0
        %1230 = vmatpush1.bf16.xpose.msra.mxu0 0
        %1231 = vmatprep.subr.bf16.mxu0 0
        %1232 = vmatpush1.bf16.xpose.msra.mxu0 0
        %1233 = vmatprep.subr.bf16.mxu0 0
        %1234 = vmatpush1.bf16.xpose.msra.mxu0 0
        %1235 = vmatprep.subr.bf16.mxu0 0
        %1236 = vmatpush1.bf16.xpose.msra.mxu0 0
        %1237 = vmatprep.subr.bf16.mxu0 0
        %1238 = vmatpush1.bf16.xpose.msra.mxu0 0
        %1239 = vmatprep.subr.bf16.mxu0 0
        %1240 = vmatpush1.bf16.xpose.msra.mxu0 0
        %1241 = vmatprep.subr.bf16.mxu0 0
        %1242 = vmatpush1.bf16.xpose.msra.mxu0 0
        %1243 = vmatprep.subr.bf16.mxu0 0
        %1244 = vmatpush1.bf16.xpose.msra.mxu0 0
        %1245 = vmatprep.subr.bf16.mxu0 0
        %1246 = vmatpush1.bf16.xpose.msra.mxu0 0
        %1247 = vmatprep.subr.bf16.mxu0 0
        %1248 = vmatpush1.bf16.xpose.msra.mxu0 0
        %1249 = vmatprep.mubr.bf16.mxu0 0
        %1250 = vmatmul.mubr.bf16.gmra.mrb[0].mxu0 %v1212
        %v1251 = vpop.f32.mrb[0].mxu0
        %v1252 = vadd.f32 0.0, %v1251
        %v1253 = vpop.f32.mrb[0].mxu0
        %v1254 = vpop.f32.mrb[0].mxu0
        %v1255 = vpop.f32.mrb[0].mxu0
        %1256 = vdwg.mxu0
        %v1257 = vsel %vm1032, -1e+09, %v1252
        %v1258 = vsel %vm985, %v1257, -inf
        %1259 = vmax.xlane.f32.xlu0 %v1258
        %v1260 = vpop.xlane.xlu0 %1259
        %v1261 = vsub.f32 %v1257, %v1260
        %v1262 = vmul.f32 %v1261, 1.442695
        %v1263 = vpow.pop %v1262
        %v1264 = vsel %vm985, %v1263, 0.0
        %1265 = vadd.xlane.f32.xlu0 %v1264
        %v1266 = vpop.xlane.xlu0 %1265
        %v1267 = vrcp.pop %v1266
        %v1268 = vmul.f32 %v1263, %v1267
        %v1269 = vpack.c.bf16 %v1268, %v1268
        %1270 = vrot.lane.b32.xlu0 %v981, 48
        %v1271 = vpop.permute.xlu0 %1270
        %v1273 = vsel %vm985, %v1269, 0
        %v1276 = vsel %vm1051, %v1271, 0
        %1278 = vmatprep.subr.bf16.mxu0 0
        %1279 = vmatpush1.bf16.msra.mxu0 %v1276
        %1280 = vmatprep.subr.bf16.mxu0 0
        %1281 = vmatpush1.bf16.msra.mxu0 0
        %1282 = vmatprep.subr.bf16.mxu0 0
        %1283 = vmatpush1.bf16.msra.mxu0 0
        %1284 = vmatprep.subr.bf16.mxu0 0
        %1285 = vmatpush1.bf16.msra.mxu0 0
        %1286 = vmatprep.subr.bf16.mxu0 0
        %1287 = vmatpush1.bf16.msra.mxu0 0
        %1288 = vmatprep.subr.bf16.mxu0 0
        %1289 = vmatpush1.bf16.msra.mxu0 0
        %1290 = vmatprep.subr.bf16.mxu0 0
        %1291 = vmatpush1.bf16.msra.mxu0 0
        %1292 = vmatprep.subr.bf16.mxu0 0
        %1293 = vmatpush1.bf16.msra.mxu0 0
        %1294 = vmatprep.subr.bf16.mxu0 0
        %1295 = vmatpush1.bf16.msra.mxu0 0
        %1296 = vmatprep.subr.bf16.mxu0 0
        %1297 = vmatpush1.bf16.msra.mxu0 0
        %1298 = vmatprep.subr.bf16.mxu0 0
        %1299 = vmatpush1.bf16.msra.mxu0 0
        %1300 = vmatprep.subr.bf16.mxu0 0
        %1301 = vmatpush1.bf16.msra.mxu0 0
        %1302 = vmatprep.subr.bf16.mxu0 0
        %1303 = vmatpush1.bf16.msra.mxu0 0
        %1304 = vmatprep.subr.bf16.mxu0 0
        %1305 = vmatpush1.bf16.msra.mxu0 0
        %1306 = vmatprep.subr.bf16.mxu0 0
        %1307 = vmatpush1.bf16.msra.mxu0 0
        %1308 = vmatprep.subr.bf16.mxu0 0
        %1309 = vmatpush1.bf16.msra.mxu0 0
        %1310 = vmatprep.mubr.bf16.mxu0 0
        %1311 = vmatmul.mubr.bf16.gmra.mrb[0].mxu0 %v1273
        %v1312 = vpop.f32.mrb[0].mxu0
        %v1313 = vadd.f32 0.0, %v1312
        %v1314 = vpop.f32.mrb[0].mxu0
        %v1315 = vpop.f32.mrb[0].mxu0
        %v1316 = vpop.f32.mrb[0].mxu0
        %1317 = vdwg.mxu0
        %1318 = vrot.lane.b32.xlu0 %v980, 104
        %v1319 = vpop.permute.xlu0 %1318
        %1320 = vrot.lane.b32.xlu0 %v981, 72
        %v1321 = vpop.permute.xlu0 %1320
        %v1323 = vsel %vm985, %v1319, 0
        %v1326 = vsel %vm985, %v1321, 0
        %1328 = vmatprep.subr.bf16.mxu0 0
        %1329 = vmatpush1.bf16.xpose.msra.mxu0 %v1326
        %1330 = vmatprep.subr.bf16.mxu0 0
        %1331 = vmatpush1.bf16.xpose.msra.mxu0 0
        %1332 = vmatprep.subr.bf16.mxu0 0
        %1333 = vmatpush1.bf16.xpose.msra.mxu0 0
        %1334 = vmatprep.subr.bf16.mxu0 0
        %1335 = vmatpush1.bf16.xpose.msra.mxu0 0
        %1336 = vmatprep.subr.bf16.mxu0 0
        %1337 = vmatpush1.bf16.xpose.msra.mxu0 0
        %1338 = vmatprep.subr.bf16.mxu0 0
        %1339 = vmatpush1.bf16.xpose.msra.mxu0 0
        %1340 = vmatprep.subr.bf16.mxu0 0
        %1341 = vmatpush1.bf16.xpose.msra.mxu0 0
        %1342 = vmatprep.subr.bf16.mxu0 0
        %1343 = vmatpush1.bf16.xpose.msra.mxu0 0
        %1344 = vmatprep.subr.bf16.mxu0 0
        %1345 = vmatpush1.bf16.xpose.msra.mxu0 0
        %1346 = vmatprep.subr.bf16.mxu0 0
        %1347 = vmatpush1.bf16.xpose.msra.mxu0 0
        %1348 = vmatprep.subr.bf16.mxu0 0
        %1349 = vmatpush1.bf16.xpose.msra.mxu0 0
        %1350 = vmatprep.subr.bf16.mxu0 0
        %1351 = vmatpush1.bf16.xpose.msra.mxu0 0
        %1352 = vmatprep.subr.bf16.mxu0 0
        %1353 = vmatpush1.bf16.xpose.msra.mxu0 0
        %1354 = vmatprep.subr.bf16.mxu0 0
        %1355 = vmatpush1.bf16.xpose.msra.mxu0 0
        %1356 = vmatprep.subr.bf16.mxu0 0
        %1357 = vmatpush1.bf16.xpose.msra.mxu0 0
        %1358 = vmatprep.subr.bf16.mxu0 0
        %1359 = vmatpush1.bf16.xpose.msra.mxu0 0
        %1360 = vmatprep.mubr.bf16.mxu0 0
        %1361 = vmatmul.mubr.bf16.gmra.mrb[0].mxu0 %v1323
        %v1362 = vpop.f32.mrb[0].mxu0
        %v1363 = vadd.f32 0.0, %v1362
        %v1364 = vpop.f32.mrb[0].mxu0
        %v1365 = vpop.f32.mrb[0].mxu0
        %v1366 = vpop.f32.mrb[0].mxu0
        %1367 = vdwg.mxu0
        %v1368 = vsel %vm1032, -1e+09, %v1363
        %v1369 = vsel %vm985, %v1368, -inf
        %1370 = vmax.xlane.f32.xlu0 %v1369
        %v1371 = vpop.xlane.xlu0 %1370
        %v1372 = vsub.f32 %v1368, %v1371
        %v1373 = vmul.f32 %v1372, 1.442695
        %v1374 = vpow.pop %v1373
        %v1375 = vsel %vm985, %v1374, 0.0
        %1376 = vadd.xlane.f32.xlu0 %v1375
        %v1377 = vpop.xlane.xlu0 %1376
        %v1378 = vrcp.pop %v1377
        %v1379 = vmul.f32 %v1374, %v1378
        %v1380 = vpack.c.bf16 %v1379, %v1379
        %1381 = vrot.lane.b32.xlu0 %v981, 40
        %v1382 = vpop.permute.xlu0 %1381
        %v1384 = vsel %vm985, %v1380, 0
        %v1387 = vsel %vm1051, %v1382, 0
        %1389 = vmatprep.subr.bf16.mxu0 0
        %1390 = vmatpush1.bf16.msra.mxu0 %v1387
        %1391 = vmatprep.subr.bf16.mxu0 0
        %1392 = vmatpush1.bf16.msra.mxu0 0
        %1393 = vmatprep.subr.bf16.mxu0 0
        %1394 = vmatpush1.bf16.msra.mxu0 0
        %1395 = vmatprep.subr.bf16.mxu0 0
        %1396 = vmatpush1.bf16.msra.mxu0 0
        %1397 = vmatprep.subr.bf16.mxu0 0
        %1398 = vmatpush1.bf16.msra.mxu0 0
        %1399 = vmatprep.subr.bf16.mxu0 0
        %1400 = vmatpush1.bf16.msra.mxu0 0
        %1401 = vmatprep.subr.bf16.mxu0 0
        %1402 = vmatpush1.bf16.msra.mxu0 0
        %1403 = vmatprep.subr.bf16.mxu0 0
        %1404 = vmatpush1.bf16.msra.mxu0 0
        %1405 = vmatprep.subr.bf16.mxu0 0
        %1406 = vmatpush1.bf16.msra.mxu0 0
        %1407 = vmatprep.subr.bf16.mxu0 0
        %1408 = vmatpush1.bf16.msra.mxu0 0
        %1409 = vmatprep.subr.bf16.mxu0 0
        %1410 = vmatpush1.bf16.msra.mxu0 0
        %1411 = vmatprep.subr.bf16.mxu0 0
        %1412 = vmatpush1.bf16.msra.mxu0 0
        %1413 = vmatprep.subr.bf16.mxu0 0
        %1414 = vmatpush1.bf16.msra.mxu0 0
        %1415 = vmatprep.subr.bf16.mxu0 0
        %1416 = vmatpush1.bf16.msra.mxu0 0
        %1417 = vmatprep.subr.bf16.mxu0 0
        %1418 = vmatpush1.bf16.msra.mxu0 0
        %1419 = vmatprep.subr.bf16.mxu0 0
        %1420 = vmatpush1.bf16.msra.mxu0 0
        %1421 = vmatprep.mubr.bf16.mxu0 0
        %1422 = vmatmul.mubr.bf16.gmra.mrb[0].mxu0 %v1384
        %v1423 = vpop.f32.mrb[0].mxu0
        %v1424 = vadd.f32 0.0, %v1423
        %v1425 = vpop.f32.mrb[0].mxu0
        %v1426 = vpop.f32.mrb[0].mxu0
        %v1427 = vpop.f32.mrb[0].mxu0
        %1428 = vdwg.mxu0
        %1430 = vrot.lane.b32.xlu0 %v1202, 8
        %v1431 = vpop.permute.xlu0 %1430
        %1434 = vrot.lane.b32.xlu0 %v1313, 16
        %v1435 = vpop.permute.xlu0 %1434
        %1438 = vrot.lane.b32.xlu0 %v1424, 24
        %v1439 = vpop.permute.xlu0 %1438
        %v1441 = vsel %vm985, %v1090, %v1431
        %vm1442 = vcmask 130048
        %v1443 = vsel %vm1442, %v1441, %v1435
        %vm1444 = vcmask 195584
        %v1445 = vsel %vm1444, %v1443, %v1439
        %v1446 = vpack.c.bf16 %v1445, %v1445
        %v1447 = vld [vmem:[%s8] sm:$0xf]
        %v1448 = vld [vmem:[%s8 + $0x4] sm:$0xf]
        %v1449 = vld [vmem:[%s8 + $0x8] sm:$0xf]
        %v1450 = vld [vmem:[%s8 + $0xc] sm:$0xf]
        %v1451 = vld [vmem:[#allocation8] sm:$0x1]
        %v1453 = vlaneseq
        %v1454 = vshrl.u32 %v1453, 7
        %v1455 = vsub.s32 0, %v1454
        %v1456 = vrot.slane %v1451, %v1455
        %v1462 = vunpack.c.l.b16 %v1447
        %v1463 = vunpack.c.l.b16 %v1448
        %v1464 = vunpack.c.l.b16 %v1449
        %v1465 = vunpack.c.l.b16 %v1450
        %v1466 = vpack.c.b16 %v1463, %v1462
        %v1467 = vpack.c.b16 %v1465, %v1464
        %v1471 = vsel %vm875, %v1446, 0
        %1473 = vmatprep.subr.bf16.mxu0 0
        %1474 = vmatpush1.bf16.msra.mxu0 %v1466
        %1475 = vmatprep.subr.bf16.mxu0 0
        %1476 = vmatpush1.bf16.msra.mxu0 %v1467
        %1477 = vmatprep.subr.bf16.mxu0 0
        %1478 = vmatpush1.bf16.msra.mxu0 0
        %1479 = vmatprep.subr.bf16.mxu0 0
        %1480 = vmatpush1.bf16.msra.mxu0 0
        %1481 = vmatprep.subr.bf16.mxu0 0
        %1482 = vmatpush1.bf16.msra.mxu0 0
        %1483 = vmatprep.subr.bf16.mxu0 0
        %1484 = vmatpush1.bf16.msra.mxu0 0
        %1485 = vmatprep.subr.bf16.mxu0 0
        %1486 = vmatpush1.bf16.msra.mxu0 0
        %1487 = vmatprep.subr.bf16.mxu0 0
        %1488 = vmatpush1.bf16.msra.mxu0 0
        %1489 = vmatprep.subr.bf16.mxu0 0
        %1490 = vmatpush1.bf16.msra.mxu0 0
        %1491 = vmatprep.subr.bf16.mxu0 0
        %1492 = vmatpush1.bf16.msra.mxu0 0
        %1493 = vmatprep.subr.bf16.mxu0 0
        %1494 = vmatpush1.bf16.msra.mxu0 0
        %1495 = vmatprep.subr.bf16.mxu0 0
        %1496 = vmatpush1.bf16.msra.mxu0 0
        %1497 = vmatprep.subr.bf16.mxu0 0
        %1498 = vmatpush1.bf16.msra.mxu0 0
        %1499 = vmatprep.subr.bf16.mxu0 0
        %1500 = vmatpush1.bf16.msra.mxu0 0
        %1501 = vmatprep.subr.bf16.mxu0 0
        %1502 = vmatpush1.bf16.msra.mxu0 0
        %1503 = vmatprep.subr.bf16.mxu0 0
        %1504 = vmatpush1.bf16.msra.mxu0 0
        %1505 = vmatprep.mubr.bf16.mxu0 0
        %1506 = vmatmul.mubr.bf16.gmra.mrb[0].mxu0 %v1471
        %v1507 = vpop.f32.mrb[0].mxu0
        %v1508 = vadd.f32 %v1456, %v1507
        %v1509 = vpop.f32.mrb[0].mxu0
        %v1510 = vpop.f32.mrb[0].mxu0
        %v1511 = vpop.f32.mrb[0].mxu0
        %1512 = vdwg.mxu0
        %v1513 = vadd.f32 %v868, %v1508
        %v1514 = vld [vmem:[#allocation10] sm:$0x1]
        %v1515 = vld [vmem:[#allocation11] sm:$0x1]
        %v1516 = vsel %vm875, %v1513, 0.0
        %1517 = vadd.xlane.f32.xlu0 %v1516
        %v1518 = vpop.xlane.xlu0 %1517
        %v1519 = vmul.f32 %v1518, %v879
        %v1520 = vsub.f32 %v1513, %v1519
        %v1521 = vmul.f32 %v1520, %v1520
        %v1522 = vsel %vm875, %v1521, 0.0
        %1523 = vadd.xlane.f32.xlu0 %v1522
        %v1524 = vpop.xlane.xlu0 %1523
        %v1525 = vmul.f32 %v1524, %v886
        %v1526 = vrsqrt.pop %v1525
        %v1527 = vmul.f32 %v1525, %v1526
        %vm1528 = vcmp.eq.f32.partialorder %v1525, inf
        %v1529 = vsel %vm1528, %v1525, %v1527
        %vm1530 = vcmp.eq.f32.partialorder %v1525, 0.0
        %v1531 = vand.u32 %v1525, 2147483648
        %v1532 = vsel %vm1530, %v1531, %v1529
        %v1534 = vlaneseq
        %v1535 = vshrl.u32 %v1534, 7
        %v1536 = vsub.s32 0, %v1535
        %v1537 = vrot.slane %v1514, %v1536
        %v1539 = vmul.f32 %v1537, %v1520
        %v1540 = vadd.f32 %v1532, 1e-06
        %v1541 = vrcp.pop %v1540
        %v1542 = vmul.f32 %v1539, %v1541
        %v1544 = vlaneseq
        %v1545 = vshrl.u32 %v1544, 7
        %v1546 = vsub.s32 0, %v1545
        %v1547 = vrot.slane %v1515, %v1546
        %v1549 = vadd.f32 %v1542, %v1547
        %v1550 = vpack.c.bf16 %v1549, %v1549
        %v1551 = vld [vmem:[%s12] sm:$0xf]
        %v1552 = vld [vmem:[%s12 + $0x4] sm:$0xf]
        %v1553 = vld [vmem:[%s12 + $0x8] sm:$0xf]
        %v1554 = vld [vmem:[%s12 + $0xc] sm:$0xf]
        %v1555 = vld [vmem:[%s13] sm:$0x1]
        %v1557 = vlaneseq
        %v1558 = vshrl.u32 %v1557, 7
        %v1559 = vsub.s32 0, %v1558
        %v1560 = vrot.slane %v1555, %v1559
        %v1566 = vunpack.c.l.b16 %v1551
        %v1567 = vunpack.c.l.b16 %v1552
        %v1568 = vunpack.c.l.b16 %v1553
        %v1569 = vunpack.c.l.b16 %v1554
        %v1570 = vpack.c.b16 %v1567, %v1566
        %v1571 = vpack.c.b16 %v1569, %v1568
        %v1575 = vsel %vm875, %v1550, 0
        %1577 = vmatprep.subr.bf16.mxu0 0
        %1578 = vmatpush1.bf16.msra.mxu0 %v1570
        %1579 = vmatprep.subr.bf16.mxu0 0
        %1580 = vmatpush1.bf16.msra.mxu0 %v1571
        %1581 = vmatprep.subr.bf16.mxu0 0
        %1582 = vmatpush1.bf16.msra.mxu0 0
        %1583 = vmatprep.subr.bf16.mxu0 0
        %1584 = vmatpush1.bf16.msra.mxu0 0
        %1585 = vmatprep.subr.bf16.mxu0 0
        %1586 = vmatpush1.bf16.msra.mxu0 0
        %1587 = vmatprep.subr.bf16.mxu0 0
        %1588 = vmatpush1.bf16.msra.mxu0 0
        %1589 = vmatprep.subr.bf16.mxu0 0
        %1590 = vmatpush1.bf16.msra.mxu0 0
        %1591 = vmatprep.subr.bf16.mxu0 0
        %1592 = vmatpush1.bf16.msra.mxu0 0
        %1593 = vmatprep.subr.bf16.mxu0 0
        %1594 = vmatpush1.bf16.msra.mxu0 0
        %1595 = vmatprep.subr.bf16.mxu0 0
        %1596 = vmatpush1.bf16.msra.mxu0 0
        %1597 = vmatprep.subr.bf16.mxu0 0
        %1598 = vmatpush1.bf16.msra.mxu0 0
        %1599 = vmatprep.subr.bf16.mxu0 0
        %1600 = vmatpush1.bf16.msra.mxu0 0
        %1601 = vmatprep.subr.bf16.mxu0 0
        %1602 = vmatpush1.bf16.msra.mxu0 0
        %1603 = vmatprep.subr.bf16.mxu0 0
        %1604 = vmatpush1.bf16.msra.mxu0 0
        %1605 = vmatprep.subr.bf16.mxu0 0
        %1606 = vmatpush1.bf16.msra.mxu0 0
        %1607 = vmatprep.subr.bf16.mxu0 0
        %1608 = vmatpush1.bf16.msra.mxu0 0
        %1609 = vmatprep.mubr.bf16.mxu0 0
        %1610 = vmatmul.mubr.bf16.gmra.mrb[0].mxu0 %v1575
        %v1611 = vpop.f32.mrb[0].mxu0
        %v1612 = vadd.f32 %v1560, %v1611
        %v1613 = vpop.f32.mrb[0].mxu0
        %v1614 = vpop.f32.mrb[0].mxu0
        %v1615 = vpop.f32.mrb[0].mxu0
        %1616 = vdwg.mxu0
        %v1617 = vpack.c.bf16 %v870, %v869
        %v1618 = vld [vmem:[%s14] sm:$0xf]
        %v1619 = vld [vmem:[%s14 + $0x4] sm:$0xf]
        %v1620 = vld [vmem:[%s14 + $0x8] sm:$0xf]
        %v1621 = vld [vmem:[%s14 + $0xc] sm:$0xf]
        %v1622 = vld [vmem:[%s15] sm:$0x1]
        %v1624 = vlaneseq
        %v1625 = vshrl.u32 %v1624, 7
        %v1626 = vsub.s32 0, %v1625
        %v1627 = vrot.slane %v1622, %v1626
        %v1633 = vunpack.c.l.b16 %v1618
        %v1634 = vunpack.c.l.b16 %v1619
        %v1635 = vunpack.c.l.b16 %v1620
        %v1636 = vunpack.c.l.b16 %v1621
        %v1637 = vpack.c.b16 %v1634, %v1633
        %v1638 = vpack.c.b16 %v1636, %v1635
        %v1642 = vsel %vm875, %v1617, 0
        %1644 = vmatprep.subr.bf16.mxu0 0
        %1645 = vmatpush1.bf16.msra.mxu0 %v1637
        %1646 = vmatprep.subr.bf16.mxu0 0
        %1647 = vmatpush1.bf16.msra.mxu0 %v1638
        %1648 = vmatprep.subr.bf16.mxu0 0
        %1649 = vmatpush1.bf16.msra.mxu0 0
        %1650 = vmatprep.subr.bf16.mxu0 0
        %1651 = vmatpush1.bf16.msra.mxu0 0
        %1652 = vmatprep.subr.bf16.mxu0 0
        %1653 = vmatpush1.bf16.msra.mxu0 0
        %1654 = vmatprep.subr.bf16.mxu0 0
        %1655 = vmatpush1.bf16.msra.mxu0 0
        %1656 = vmatprep.subr.bf16.mxu0 0
        %1657 = vmatpush1.bf16.msra.mxu0 0
        %1658 = vmatprep.subr.bf16.mxu0 0
        %1659 = vmatpush1.bf16.msra.mxu0 0
        %1660 = vmatprep.subr.bf16.mxu0 0
        %1661 = vmatpush1.bf16.msra.mxu0 0
        %1662 = vmatprep.subr.bf16.mxu0 0
        %1663 = vmatpush1.bf16.msra.mxu0 0
        %1664 = vmatprep.subr.bf16.mxu0 0
        %1665 = vmatpush1.bf16.msra.mxu0 0
        %1666 = vmatprep.subr.bf16.mxu0 0
        %1667 = vmatpush1.bf16.msra.mxu0 0
        %1668 = vmatprep.subr.bf16.mxu0 0
        %1669 = vmatpush1.bf16.msra.mxu0 0
        %1670 = vmatprep.subr.bf16.mxu0 0
        %1671 = vmatpush1.bf16.msra.mxu0 0
        %1672 = vmatprep.subr.bf16.mxu0 0
        %1673 = vmatpush1.bf16.msra.mxu0 0
        %1674 = vmatprep.subr.bf16.mxu0 0
        %1675 = vmatpush1.bf16.msra.mxu0 0
        %1676 = vmatprep.mubr.bf16.mxu0 0
        %1677 = vmatmul.mubr.bf16.gmra.mrb[0].mxu0 %v1642
        %v1678 = vpop.f32.mrb[0].mxu0
        %v1679 = vadd.f32 %v1627, %v1678
        %v1680 = vpop.f32.mrb[0].mxu0
        %v1681 = vpop.f32.mrb[0].mxu0
        %v1682 = vadd.f32 %v1627, %v1681
        %v1683 = vpop.f32.mrb[0].mxu0
        %1684 = vdwg.mxu0
        %v1685 = vmul.f32 %v1612, 0.35355338
        %v1686 = vpack.c.bf16 %v1685, %v1685
        %v1687 = vpack.c.bf16 %v1682, %v1679
        %v1689 = vsel %vm985, %v1686, 0
        %v1692 = vsel %vm985, %v1687, 0
        %1694 = vmatprep.subr.bf16.mxu0 0
        %1695 = vmatpush1.bf16.xpose.msra.mxu0 %v1692
        %1696 = vmatprep.subr.bf16.mxu0 0
        %1697 = vmatpush1.bf16.xpose.msra.mxu0 0
        %1698 = vmatprep.subr.bf16.mxu0 0
        %1699 = vmatpush1.bf16.xpose.msra.mxu0 0
        %1700 = vmatprep.subr.bf16.mxu0 0
        %1701 = vmatpush1.bf16.xpose.msra.mxu0 0
        %1702 = vmatprep.subr.bf16.mxu0 0
        %1703 = vmatpush1.bf16.xpose.msra.mxu0 0
        %1704 = vmatprep.subr.bf16.mxu0 0
        %1705 = vmatpush1.bf16.xpose.msra.mxu0 0
        %1706 = vmatprep.subr.bf16.mxu0 0
        %1707 = vmatpush1.bf16.xpose.msra.mxu0 0
        %1708 = vmatprep.subr.bf16.mxu0 0
        %1709 = vmatpush1.bf16.xpose.msra.mxu0 0
        %1710 = vmatprep.subr.bf16.mxu0 0
        %1711 = vmatpush1.bf16.xpose.msra.mxu0 0
        %1712 = vmatprep.subr.bf16.mxu0 0
        %1713 = vmatpush1.bf16.xpose.msra.mxu0 0
        %1714 = vmatprep.subr.bf16.mxu0 0
        %1715 = vmatpush1.bf16.xpose.msra.mxu0 0
        %1716 = vmatprep.subr.bf16.mxu0 0
        %1717 = vmatpush1.bf16.xpose.msra.mxu0 0
        %1718 = vmatprep.subr.bf16.mxu0 0
        %1719 = vmatpush1.bf16.xpose.msra.mxu0 0
        %1720 = vmatprep.subr.bf16.mxu0 0
        %1721 = vmatpush1.bf16.xpose.msra.mxu0 0
        %1722 = vmatprep.subr.bf16.mxu0 0
        %1723 = vmatpush1.bf16.xpose.msra.mxu0 0
        %1724 = vmatprep.subr.bf16.mxu0 0
        %1725 = vmatpush1.bf16.xpose.msra.mxu0 0
        %1726 = vmatprep.mubr.bf16.mxu0 0
        %1727 = vmatmul.mubr.bf16.gmra.mrb[0].mxu0 %v1689
        %v1728 = vpop.f32.mrb[0].mxu0
        %v1729 = vadd.f32 0.0, %v1728
        %v1730 = vpop.f32.mrb[0].mxu0
        %v1731 = vpop.f32.mrb[0].mxu0
        %v1732 = vpop.f32.mrb[0].mxu0
        %1733 = vdwg.mxu0
        %vm1734 = vcmp.eq.f32.partialorder %v872, 0.0
        %v1735 = vsel %vm1734, 1, 0
        %v1736 = vlaneseq
        %v1737 = vshrl.u32 %v1736, 7
        %v1738 = vsub.s32 0, %v1737
        %v1739 = vrot.slane %v1735, %v1738
        %vm1740 = vcmp.eq.s32.totalorder %v1739, 1
        %v1741 = vsel %vm1740, -1e+09, %v1729
        %vm1742 = vcmask 80896
        %v1743 = vsel %vm1742, %v1741, -inf
        %1744 = vmax.xlane.f32.xlu0 %v1743
        %v1745 = vpop.xlane.xlu0 %1744
        %v1746 = vsub.f32 %v1741, %v1745
        %v1747 = vmul.f32 %v1746, 1.442695
        %v1748 = vpow.pop %v1747
        %v1749 = vsel %vm1742, %v1748, 0.0
        %1750 = vadd.xlane.f32.xlu0 %v1749
        %v1751 = vpop.xlane.xlu0 %1750
        %v1752 = vrcp.pop %v1751
        %v1753 = vmul.f32 %v1748, %v1752
        %v1754 = vpack.c.bf16 %v1753, %v1753
        %1756 = vrot.lane.b32.xlu0 %v1687, 96
        %v1757 = vpop.permute.xlu0 %1756
        %v1759 = vsel %vm1742, %v1754, 0
        %vm1761 = vcmask 1044480
        %v1763 = vsel %vm1761, %v1757, 0
        %1765 = vmatprep.subr.bf16.mxu0 0
        %1766 = vmatpush1.bf16.msra.mxu0 %v1763
        %1767 = vmatprep.subr.bf16.mxu0 0
        %1768 = vmatpush1.bf16.msra.mxu0 0
        %1769 = vmatprep.subr.bf16.mxu0 0
        %1770 = vmatpush1.bf16.msra.mxu0 0
        %1771 = vmatprep.subr.bf16.mxu0 0
        %1772 = vmatpush1.bf16.msra.mxu0 0
        %1773 = vmatprep.subr.bf16.mxu0 0
        %1774 = vmatpush1.bf16.msra.mxu0 0
        %1775 = vmatprep.subr.bf16.mxu0 0
        %1776 = vmatpush1.bf16.msra.mxu0 0
        %1777 = vmatprep.subr.bf16.mxu0 0
        %1778 = vmatpush1.bf16.msra.mxu0 0
        %1779 = vmatprep.subr.bf16.mxu0 0
        %1780 = vmatpush1.bf16.msra.mxu0 0
        %1781 = vmatprep.subr.bf16.mxu0 0
        %1782 = vmatpush1.bf16.msra.mxu0 0
        %1783 = vmatprep.subr.bf16.mxu0 0
        %1784 = vmatpush1.bf16.msra.mxu0 0
        %1785 = vmatprep.subr.bf16.mxu0 0
        %1786 = vmatpush1.bf16.msra.mxu0 0
        %1787 = vmatprep.subr.bf16.mxu0 0
        %1788 = vmatpush1.bf16.msra.mxu0 0
        %1789 = vmatprep.subr.bf16.mxu0 0
        %1790 = vmatpush1.bf16.msra.mxu0 0
        %1791 = vmatprep.subr.bf16.mxu0 0
        %1792 = vmatpush1.bf16.msra.mxu0 0
        %1793 = vmatprep.subr.bf16.mxu0 0
        %1794 = vmatpush1.bf16.msra.mxu0 0
        %1795 = vmatprep.subr.bf16.mxu0 0
        %1796 = vmatpush1.bf16.msra.mxu0 0
        %1797 = vmatprep.mubr.bf16.mxu0 0
        %1798 = vmatmul.mubr.bf16.gmra.mrb[0].mxu0 %v1759
        %v1799 = vpop.f32.mrb[0].mxu0
        %v1800 = vadd.f32 0.0, %v1799
        %v1801 = vpop.f32.mrb[0].mxu0
        %v1802 = vpop.f32.mrb[0].mxu0
        %v1803 = vpop.f32.mrb[0].mxu0
        %1804 = vdwg.mxu0
        %1806 = vrot.lane.b32.xlu0 %v1686, 120
        %v1807 = vpop.permute.xlu0 %1806
        %1808 = vrot.lane.b32.xlu0 %v1687, 120
        %v1809 = vpop.permute.xlu0 %1808
        %v1811 = vsel %vm985, %v1807, 0
        %v1814 = vsel %vm985, %v1809, 0
        %1816 = vmatprep.subr.bf16.mxu0 0
        %1817 = vmatpush1.bf16.xpose.msra.mxu0 %v1814
        %1818 = vmatprep.subr.bf16.mxu0 0
        %1819 = vmatpush1.bf16.xpose.msra.mxu0 0
        %1820 = vmatprep.subr.bf16.mxu0 0
        %1821 = vmatpush1.bf16.xpose.msra.mxu0 0
        %1822 = vmatprep.subr.bf16.mxu0 0
        %1823 = vmatpush1.bf16.xpose.msra.mxu0 0
        %1824 = vmatprep.subr.bf16.mxu0 0
        %1825 = vmatpush1.bf16.xpose.msra.mxu0 0
        %1826 = vmatprep.subr.bf16.mxu0 0
        %1827 = vmatpush1.bf16.xpose.msra.mxu0 0
        %1828 = vmatprep.subr.bf16.mxu0 0
        %1829 = vmatpush1.bf16.xpose.msra.mxu0 0
        %1830 = vmatprep.subr.bf16.mxu0 0
        %1831 = vmatpush1.bf16.xpose.msra.mxu0 0
        %1832 = vmatprep.subr.bf16.mxu0 0
        %1833 = vmatpush1.bf16.xpose.msra.mxu0 0
        %1834 = vmatprep.subr.bf16.mxu0 0
        %1835 = vmatpush1.bf16.xpose.msra.mxu0 0
        %1836 = vmatprep.subr.bf16.mxu0 0
        %1837 = vmatpush1.bf16.xpose.msra.mxu0 0
        %1838 = vmatprep.subr.bf16.mxu0 0
        %1839 = vmatpush1.bf16.xpose.msra.mxu0 0
        %1840 = vmatprep.subr.bf16.mxu0 0
        %1841 = vmatpush1.bf16.xpose.msra.mxu0 0
        %1842 = vmatprep.subr.bf16.mxu0 0
        %1843 = vmatpush1.bf16.xpose.msra.mxu0 0
        %1844 = vmatprep.subr.bf16.mxu0 0
        %1845 = vmatpush1.bf16.xpose.msra.mxu0 0
        %1846 = vmatprep.subr.bf16.mxu0 0
        %1847 = vmatpush1.bf16.xpose.msra.mxu0 0
        %1848 = vmatprep.mubr.bf16.mxu0 0
        %1849 = vmatmul.mubr.bf16.gmra.mrb[0].mxu0 %v1811
        %v1850 = vpop.f32.mrb[0].mxu0
        %v1851 = vadd.f32 0.0, %v1850
        %v1852 = vpop.f32.mrb[0].mxu0
        %v1853 = vpop.f32.mrb[0].mxu0
        %v1854 = vpop.f32.mrb[0].mxu0
        %1855 = vdwg.mxu0
        %v1856 = vsel %vm1740, -1e+09, %v1851
        %v1857 = vsel %vm1742, %v1856, -inf
        %1858 = vmax.xlane.f32.xlu0 %v1857
        %v1859 = vpop.xlane.xlu0 %1858
        %v1860 = vsub.f32 %v1856, %v1859
        %v1861 = vmul.f32 %v1860, 1.442695
        %v1862 = vpow.pop %v1861
        %v1863 = vsel %vm1742, %v1862, 0.0
        %1864 = vadd.xlane.f32.xlu0 %v1863
        %v1865 = vpop.xlane.xlu0 %1864
        %v1866 = vrcp.pop %v1865
        %v1867 = vmul.f32 %v1862, %v1866
        %v1868 = vpack.c.bf16 %v1867, %v1867
        %1869 = vrot.lane.b32.xlu0 %v1687, 88
        %v1870 = vpop.permute.xlu0 %1869
        %v1872 = vsel %vm1742, %v1868, 0
        %v1875 = vsel %vm1761, %v1870, 0
        %1877 = vmatprep.subr.bf16.mxu0 0
        %1878 = vmatpush1.bf16.msra.mxu0 %v1875
        %1879 = vmatprep.subr.bf16.mxu0 0
        %1880 = vmatpush1.bf16.msra.mxu0 0
        %1881 = vmatprep.subr.bf16.mxu0 0
        %1882 = vmatpush1.bf16.msra.mxu0 0
        %1883 = vmatprep.subr.bf16.mxu0 0
        %1884 = vmatpush1.bf16.msra.mxu0 0
        %1885 = vmatprep.subr.bf16.mxu0 0
        %1886 = vmatpush1.bf16.msra.mxu0 0
        %1887 = vmatprep.subr.bf16.mxu0 0
        %1888 = vmatpush1.bf16.msra.mxu0 0
        %1889 = vmatprep.subr.bf16.mxu0 0
        %1890 = vmatpush1.bf16.msra.mxu0 0
        %1891 = vmatprep.subr.bf16.mxu0 0
        %1892 = vmatpush1.bf16.msra.mxu0 0
        %1893 = vmatprep.subr.bf16.mxu0 0
        %1894 = vmatpush1.bf16.msra.mxu0 0
        %1895 = vmatprep.subr.bf16.mxu0 0
        %1896 = vmatpush1.bf16.msra.mxu0 0
        %1897 = vmatprep.subr.bf16.mxu0 0
        %1898 = vmatpush1.bf16.msra.mxu0 0
        %1899 = vmatprep.subr.bf16.mxu0 0
        %1900 = vmatpush1.bf16.msra.mxu0 0
        %1901 = vmatprep.subr.bf16.mxu0 0
        %1902 = vmatpush1.bf16.msra.mxu0 0
        %1903 = vmatprep.subr.bf16.mxu0 0
        %1904 = vmatpush1.bf16.msra.mxu0 0
        %1905 = vmatprep.subr.bf16.mxu0 0
        %1906 = vmatpush1.bf16.msra.mxu0 0
        %1907 = vmatprep.subr.bf16.mxu0 0
        %1908 = vmatpush1.bf16.msra.mxu0 0
        %1909 = vmatprep.mubr.bf16.mxu0 0
        %1910 = vmatmul.mubr.bf16.gmra.mrb[0].mxu0 %v1872
        %v1911 = vpop.f32.mrb[0].mxu0
        %v1912 = vadd.f32 0.0, %v1911
        %v1913 = vpop.f32.mrb[0].mxu0
        %v1914 = vpop.f32.mrb[0].mxu0
        %v1915 = vpop.f32.mrb[0].mxu0
        %1916 = vdwg.mxu0
        %1917 = vrot.lane.b32.xlu0 %v1686, 112
        %v1918 = vpop.permute.xlu0 %1917
        %1919 = vrot.lane.b32.xlu0 %v1687, 112
        %v1920 = vpop.permute.xlu0 %1919
        %v1922 = vsel %vm985, %v1918, 0
        %v1925 = vsel %vm985, %v1920, 0
        %1927 = vmatprep.subr.bf16.mxu0 0
        %1928 = vmatpush1.bf16.xpose.msra.mxu0 %v1925
        %1929 = vmatprep.subr.bf16.mxu0 0
        %1930 = vmatpush1.bf16.xpose.msra.mxu0 0
        %1931 = vmatprep.subr.bf16.mxu0 0
        %1932 = vmatpush1.bf16.xpose.msra.mxu0 0
        %1933 = vmatprep.subr.bf16.mxu0 0
        %1934 = vmatpush1.bf16.xpose.msra.mxu0 0
        %1935 = vmatprep.subr.bf16.mxu0 0
        %1936 = vmatpush1.bf16.xpose.msra.mxu0 0
        %1937 = vmatprep.subr.bf16.mxu0 0
        %1938 = vmatpush1.bf16.xpose.msra.mxu0 0
        %1939 = vmatprep.subr.bf16.mxu0 0
        %1940 = vmatpush1.bf16.xpose.msra.mxu0 0
        %1941 = vmatprep.subr.bf16.mxu0 0
        %1942 = vmatpush1.bf16.xpose.msra.mxu0 0
        %1943 = vmatprep.subr.bf16.mxu0 0
        %1944 = vmatpush1.bf16.xpose.msra.mxu0 0
        %1945 = vmatprep.subr.bf16.mxu0 0
        %1946 = vmatpush1.bf16.xpose.msra.mxu0 0
        %1947 = vmatprep.subr.bf16.mxu0 0
        %1948 = vmatpush1.bf16.xpose.msra.mxu0 0
        %1949 = vmatprep.subr.bf16.mxu0 0
        %1950 = vmatpush1.bf16.xpose.msra.mxu0 0
        %1951 = vmatprep.subr.bf16.mxu0 0
        %1952 = vmatpush1.bf16.xpose.msra.mxu0 0
        %1953 = vmatprep.subr.bf16.mxu0 0
        %1954 = vmatpush1.bf16.xpose.msra.mxu0 0
        %1955 = vmatprep.subr.bf16.mxu0 0
        %1956 = vmatpush1.bf16.xpose.msra.mxu0 0
        %1957 = vmatprep.subr.bf16.mxu0 0
        %1958 = vmatpush1.bf16.xpose.msra.mxu0 0
        %1959 = vmatprep.mubr.bf16.mxu0 0
        %1960 = vmatmul.mubr.bf16.gmra.mrb[0].mxu0 %v1922
        %v1961 = vpop.f32.mrb[0].mxu0
        %v1962 = vadd.f32 0.0, %v1961
        %v1963 = vpop.f32.mrb[0].mxu0
        %v1964 = vpop.f32.mrb[0].mxu0
        %v1965 = vpop.f32.mrb[0].mxu0
        %1966 = vdwg.mxu0
        %v1967 = vsel %vm1740, -1e+09, %v1962
        %v1968 = vsel %vm1742, %v1967, -inf
        %1969 = vmax.xlane.f32.xlu0 %v1968
        %v1970 = vpop.xlane.xlu0 %1969
        %v1971 = vsub.f32 %v1967, %v1970
        %v1972 = vmul.f32 %v1971, 1.442695
        %v1973 = vpow.pop %v1972
        %v1974 = vsel %vm1742, %v1973, 0.0
        %1975 = vadd.xlane.f32.xlu0 %v1974
        %v1976 = vpop.xlane.xlu0 %1975
        %v1977 = vrcp.pop %v1976
        %v1978 = vmul.f32 %v1973, %v1977
        %v1979 = vpack.c.bf16 %v1978, %v1978
        %1980 = vrot.lane.b32.xlu0 %v1687, 80
        %v1981 = vpop.permute.xlu0 %1980
        %v1983 = vsel %vm1742, %v1979, 0
        %v1986 = vsel %vm1761, %v1981, 0
        %1988 = vmatprep.subr.bf16.mxu0 0
        %1989 = vmatpush1.bf16.msra.mxu0 %v1986
        %1990 = vmatprep.subr.bf16.mxu0 0
        %1991 = vmatpush1.bf16.msra.mxu0 0
        %1992 = vmatprep.subr.bf16.mxu0 0
        %1993 = vmatpush1.bf16.msra.mxu0 0
        %1994 = vmatprep.subr.bf16.mxu0 0
        %1995 = vmatpush1.bf16.msra.mxu0 0
        %1996 = vmatprep.subr.bf16.mxu0 0
        %1997 = vmatpush1.bf16.msra.mxu0 0
        %1998 = vmatprep.subr.bf16.mxu0 0
        %1999 = vmatpush1.bf16.msra.mxu0 0
        %2000 = vmatprep.subr.bf16.mxu0 0
        %2001 = vmatpush1.bf16.msra.mxu0 0
        %2002 = vmatprep.subr.bf16.mxu0 0
        %2003 = vmatpush1.bf16.msra.mxu0 0
        %2004 = vmatprep.subr.bf16.mxu0 0
        %2005 = vmatpush1.bf16.msra.mxu0 0
        %2006 = vmatprep.subr.bf16.mxu0 0
        %2007 = vmatpush1.bf16.msra.mxu0 0
        %2008 = vmatprep.subr.bf16.mxu0 0
        %2009 = vmatpush1.bf16.msra.mxu0 0
        %2010 = vmatprep.subr.bf16.mxu0 0
        %2011 = vmatpush1.bf16.msra.mxu0 0
        %2012 = vmatprep.subr.bf16.mxu0 0
        %2013 = vmatpush1.bf16.msra.mxu0 0
        %2014 = vmatprep.subr.bf16.mxu0 0
        %2015 = vmatpush1.bf16.msra.mxu0 0
        %2016 = vmatprep.subr.bf16.mxu0 0
        %2017 = vmatpush1.bf16.msra.mxu0 0
        %2018 = vmatprep.subr.bf16.mxu0 0
        %2019 = vmatpush1.bf16.msra.mxu0 0
        %2020 = vmatprep.mubr.bf16.mxu0 0
        %2021 = vmatmul.mubr.bf16.gmra.mrb[0].mxu0 %v1983
        %v2022 = vpop.f32.mrb[0].mxu0
        %v2023 = vadd.f32 0.0, %v2022
        %v2024 = vpop.f32.mrb[0].mxu0
        %v2025 = vpop.f32.mrb[0].mxu0
        %v2026 = vpop.f32.mrb[0].mxu0
        %2027 = vdwg.mxu0
        %2028 = vrot.lane.b32.xlu0 %v1686, 104
        %v2029 = vpop.permute.xlu0 %2028
        %2030 = vrot.lane.b32.xlu0 %v1687, 104
        %v2031 = vpop.permute.xlu0 %2030
        %v2033 = vsel %vm985, %v2029, 0
        %v2036 = vsel %vm985, %v2031, 0
        %2038 = vmatprep.subr.bf16.mxu0 0
        %2039 = vmatpush1.bf16.xpose.msra.mxu0 %v2036
        %2040 = vmatprep.subr.bf16.mxu0 0
        %2041 = vmatpush1.bf16.xpose.msra.mxu0 0
        %2042 = vmatprep.subr.bf16.mxu0 0
        %2043 = vmatpush1.bf16.xpose.msra.mxu0 0
        %2044 = vmatprep.subr.bf16.mxu0 0
        %2045 = vmatpush1.bf16.xpose.msra.mxu0 0
        %2046 = vmatprep.subr.bf16.mxu0 0
        %2047 = vmatpush1.bf16.xpose.msra.mxu0 0
        %2048 = vmatprep.subr.bf16.mxu0 0
        %2049 = vmatpush1.bf16.xpose.msra.mxu0 0
        %2050 = vmatprep.subr.bf16.mxu0 0
        %2051 = vmatpush1.bf16.xpose.msra.mxu0 0
        %2052 = vmatprep.subr.bf16.mxu0 0
        %2053 = vmatpush1.bf16.xpose.msra.mxu0 0
        %2054 = vmatprep.subr.bf16.mxu0 0
        %2055 = vmatpush1.bf16.xpose.msra.mxu0 0
        %2056 = vmatprep.subr.bf16.mxu0 0
        %2057 = vmatpush1.bf16.xpose.msra.mxu0 0
        %2058 = vmatprep.subr.bf16.mxu0 0
        %2059 = vmatpush1.bf16.xpose.msra.mxu0 0
        %2060 = vmatprep.subr.bf16.mxu0 0
        %2061 = vmatpush1.bf16.xpose.msra.mxu0 0
        %2062 = vmatprep.subr.bf16.mxu0 0
        %2063 = vmatpush1.bf16.xpose.msra.mxu0 0
        %2064 = vmatprep.subr.bf16.mxu0 0
        %2065 = vmatpush1.bf16.xpose.msra.mxu0 0
        %2066 = vmatprep.subr.bf16.mxu0 0
        %2067 = vmatpush1.bf16.xpose.msra.mxu0 0
        %2068 = vmatprep.subr.bf16.mxu0 0
        %2069 = vmatpush1.bf16.xpose.msra.mxu0 0
        %2070 = vmatprep.mubr.bf16.mxu0 0
        %2071 = vmatmul.mubr.bf16.gmra.mrb[0].mxu0 %v2033
        %v2072 = vpop.f32.mrb[0].mxu0
        %v2073 = vadd.f32 0.0, %v2072
        %v2074 = vpop.f32.mrb[0].mxu0
        %v2075 = vpop.f32.mrb[0].mxu0
        %v2076 = vpop.f32.mrb[0].mxu0
        %2077 = vdwg.mxu0
        %v2078 = vsel %vm1740, -1e+09, %v2073
        %v2079 = vsel %vm1742, %v2078, -inf
        %2080 = vmax.xlane.f32.xlu0 %v2079
        %v2081 = vpop.xlane.xlu0 %2080
        %v2082 = vsub.f32 %v2078, %v2081
        %v2083 = vmul.f32 %v2082, 1.442695
        %v2084 = vpow.pop %v2083
        %v2085 = vsel %vm1742, %v2084, 0.0
        %2086 = vadd.xlane.f32.xlu0 %v2085
        %v2087 = vpop.xlane.xlu0 %2086
        %v2088 = vrcp.pop %v2087
        %v2089 = vmul.f32 %v2084, %v2088
        %v2090 = vpack.c.bf16 %v2089, %v2089
        %2091 = vrot.lane.b32.xlu0 %v1687, 72
        %v2092 = vpop.permute.xlu0 %2091
        %v2094 = vsel %vm1742, %v2090, 0
        %v2097 = vsel %vm1761, %v2092, 0
        %2099 = vmatprep.subr.bf16.mxu0 0
        %2100 = vmatpush1.bf16.msra.mxu0 %v2097
        %2101 = vmatprep.subr.bf16.mxu0 0
        %2102 = vmatpush1.bf16.msra.mxu0 0
        %2103 = vmatprep.subr.bf16.mxu0 0
        %2104 = vmatpush1.bf16.msra.mxu0 0
        %2105 = vmatprep.subr.bf16.mxu0 0
        %2106 = vmatpush1.bf16.msra.mxu0 0
        %2107 = vmatprep.subr.bf16.mxu0 0
        %2108 = vmatpush1.bf16.msra.mxu0 0
        %2109 = vmatprep.subr.bf16.mxu0 0
        %2110 = vmatpush1.bf16.msra.mxu0 0
        %2111 = vmatprep.subr.bf16.mxu0 0
        %2112 = vmatpush1.bf16.msra.mxu0 0
        %2113 = vmatprep.subr.bf16.mxu0 0
        %2114 = vmatpush1.bf16.msra.mxu0 0
        %2115 = vmatprep.subr.bf16.mxu0 0
        %2116 = vmatpush1.bf16.msra.mxu0 0
        %2117 = vmatprep.subr.bf16.mxu0 0
        %2118 = vmatpush1.bf16.msra.mxu0 0
        %2119 = vmatprep.subr.bf16.mxu0 0
        %2120 = vmatpush1.bf16.msra.mxu0 0
        %2121 = vmatprep.subr.bf16.mxu0 0
        %2122 = vmatpush1.bf16.msra.mxu0 0
        %2123 = vmatprep.subr.bf16.mxu0 0
        %2124 = vmatpush1.bf16.msra.mxu0 0
        %2125 = vmatprep.subr.bf16.mxu0 0
        %2126 = vmatpush1.bf16.msra.mxu0 0
        %2127 = vmatprep.subr.bf16.mxu0 0
        %2128 = vmatpush1.bf16.msra.mxu0 0
        %2129 = vmatprep.subr.bf16.mxu0 0
        %2130 = vmatpush1.bf16.msra.mxu0 0
        %2131 = vmatprep.mubr.bf16.mxu0 0
        %2132 = vmatmul.mubr.bf16.gmra.mrb[0].mxu0 %v2094
        %v2133 = vpop.f32.mrb[0].mxu0
        %v2134 = vadd.f32 0.0, %v2133
        %v2135 = vpop.f32.mrb[0].mxu0
        %v2136 = vpop.f32.mrb[0].mxu0
        %v2137 = vpop.f32.mrb[0].mxu0
        %2138 = vdwg.mxu0
        %2140 = vrot.lane.b32.xlu0 %v1912, 8
        %v2141 = vpop.permute.xlu0 %2140
        %2144 = vrot.lane.b32.xlu0 %v2023, 16
        %v2145 = vpop.permute.xlu0 %2144
        %2148 = vrot.lane.b32.xlu0 %v2134, 24
        %v2149 = vpop.permute.xlu0 %2148
        %v2151 = vsel %vm985, %v1800, %v2141
        %v2152 = vsel %vm1442, %v2151, %v2145
        %v2153 = vsel %vm1444, %v2152, %v2149
        %v2154 = vpack.c.bf16 %v2153, %v2153
        %v2155 = vld [vmem:[%s16] sm:$0xf]
        %v2156 = vld [vmem:[%s16 + $0x4] sm:$0xf]
        %v2157 = vld [vmem:[%s16 + $0x8] sm:$0xf]
        %v2158 = vld [vmem:[%s16 + $0xc] sm:$0xf]
        %v2159 = vld [vmem:[%s17] sm:$0x1]
        %v2161 = vlaneseq
        %v2162 = vshrl.u32 %v2161, 7
        %v2163 = vsub.s32 0, %v2162
        %v2164 = vrot.slane %v2159, %v2163
        %v2170 = vunpack.c.l.b16 %v2155
        %v2171 = vunpack.c.l.b16 %v2156
        %v2172 = vunpack.c.l.b16 %v2157
        %v2173 = vunpack.c.l.b16 %v2158
        %v2174 = vpack.c.b16 %v2171, %v2170
        %v2175 = vpack.c.b16 %v2173, %v2172
        %v2179 = vsel %vm875, %v2154, 0
        %2181 = vmatprep.subr.bf16.mxu0 0
        %2182 = vmatpush1.bf16.msra.mxu0 %v2174
        %2183 = vmatprep.subr.bf16.mxu0 0
        %2184 = vmatpush1.bf16.msra.mxu0 %v2175
        %2185 = vmatprep.subr.bf16.mxu0 0
        %2186 = vmatpush1.bf16.msra.mxu0 0
        %2187 = vmatprep.subr.bf16.mxu0 0
        %2188 = vmatpush1.bf16.msra.mxu0 0
        %2189 = vmatprep.subr.bf16.mxu0 0
        %2190 = vmatpush1.bf16.msra.mxu0 0
        %2191 = vmatprep.subr.bf16.mxu0 0
        %2192 = vmatpush1.bf16.msra.mxu0 0
        %2193 = vmatprep.subr.bf16.mxu0 0
        %2194 = vmatpush1.bf16.msra.mxu0 0
        %2195 = vmatprep.subr.bf16.mxu0 0
        %2196 = vmatpush1.bf16.msra.mxu0 0
        %2197 = vmatprep.subr.bf16.mxu0 0
        %2198 = vmatpush1.bf16.msra.mxu0 0
        %2199 = vmatprep.subr.bf16.mxu0 0
        %2200 = vmatpush1.bf16.msra.mxu0 0
        %2201 = vmatprep.subr.bf16.mxu0 0
        %2202 = vmatpush1.bf16.msra.mxu0 0
        %2203 = vmatprep.subr.bf16.mxu0 0
        %2204 = vmatpush1.bf16.msra.mxu0 0
        %2205 = vmatprep.subr.bf16.mxu0 0
        %2206 = vmatpush1.bf16.msra.mxu0 0
        %2207 = vmatprep.subr.bf16.mxu0 0
        %2208 = vmatpush1.bf16.msra.mxu0 0
        %2209 = vmatprep.subr.bf16.mxu0 0
        %2210 = vmatpush1.bf16.msra.mxu0 0
        %2211 = vmatprep.subr.bf16.mxu0 0
        %2212 = vmatpush1.bf16.msra.mxu0 0
        %2213 = vmatprep.mubr.bf16.mxu0 0
        %2214 = vmatmul.mubr.bf16.gmra.mrb[0].mxu0 %v2179
        %v2215 = vpop.f32.mrb[0].mxu0
        %v2216 = vadd.f32 %v2164, %v2215
        %v2217 = vpop.f32.mrb[0].mxu0
        %v2218 = vpop.f32.mrb[0].mxu0
        %v2219 = vpop.f32.mrb[0].mxu0
        %2220 = vdwg.mxu0
        %v2221 = vadd.f32 %v1513, %v2216
        %v2222 = vld [vmem:[%s18] sm:$0x1]
        %v2223 = vld [vmem:[%s19] sm:$0x1]
        %v2224 = vsel %vm875, %v2221, 0.0
        %2225 = vadd.xlane.f32.xlu0 %v2224
        %v2226 = vpop.xlane.xlu0 %2225
        %v2227 = vmul.f32 %v2226, %v879
        %v2228 = vsub.f32 %v2221, %v2227
        %v2229 = vmul.f32 %v2228, %v2228
        %v2230 = vsel %vm875, %v2229, 0.0
        %2231 = vadd.xlane.f32.xlu0 %v2230
        %v2232 = vpop.xlane.xlu0 %2231
        %v2233 = vmul.f32 %v2232, %v886
        %v2234 = vrsqrt.pop %v2233
        %v2235 = vmul.f32 %v2233, %v2234
        %vm2236 = vcmp.eq.f32.partialorder %v2233, inf
        %v2237 = vsel %vm2236, %v2233, %v2235
        %vm2238 = vcmp.eq.f32.partialorder %v2233, 0.0
        %v2239 = vand.u32 %v2233, 2147483648
        %v2240 = vsel %vm2238, %v2239, %v2237
        %v2242 = vlaneseq
        %v2243 = vshrl.u32 %v2242, 7
        %v2244 = vsub.s32 0, %v2243
        %v2245 = vrot.slane %v2222, %v2244
        %v2247 = vmul.f32 %v2245, %v2228
        %v2248 = vadd.f32 %v2240, 1e-06
        %v2249 = vrcp.pop %v2248
        %v2250 = vmul.f32 %v2247, %v2249
        %v2252 = vlaneseq
        %v2253 = vshrl.u32 %v2252, 7
        %v2254 = vsub.s32 0, %v2253
        %v2255 = vrot.slane %v2223, %v2254
        %v2257 = vadd.f32 %v2250, %v2255
        %v2258 = vpack.c.bf16 %v2257, %v2257
        %v2259 = vld [vmem:[%s20] sm:$0xf]
        %v2260 = vld [vmem:[%s20 + $0x4] sm:$0xf]
        %v2261 = vld [vmem:[%s20 + $0x8] sm:$0xf]
        %v2262 = vld [vmem:[%s20 + $0xc] sm:$0xf]
        %v2263 = vld [vmem:[%s21] sm:$0x1]
        %v2265 = vlaneseq
        %v2266 = vshrl.u32 %v2265, 7
        %v2267 = vsub.s32 0, %v2266
        %v2268 = vrot.slane %v2263, %v2267
        %v2274 = vunpack.c.l.b16 %v2259
        %v2275 = vunpack.c.l.b16 %v2260
        %v2276 = vunpack.c.l.b16 %v2261
        %v2277 = vunpack.c.l.b16 %v2262
        %v2278 = vpack.c.b16 %v2275, %v2274
        %v2279 = vpack.c.b16 %v2277, %v2276
        %v2283 = vsel %vm875, %v2258, 0
        %2285 = vmatprep.subr.bf16.mxu0 0
        %2286 = vmatpush1.bf16.msra.mxu0 %v2278
        %2287 = vmatprep.subr.bf16.mxu0 0
        %2288 = vmatpush1.bf16.msra.mxu0 %v2279
        %2289 = vmatprep.subr.bf16.mxu0 0
        %2290 = vmatpush1.bf16.msra.mxu0 0
        %2291 = vmatprep.subr.bf16.mxu0 0
        %2292 = vmatpush1.bf16.msra.mxu0 0
        %2293 = vmatprep.subr.bf16.mxu0 0
        %2294 = vmatpush1.bf16.msra.mxu0 0
        %2295 = vmatprep.subr.bf16.mxu0 0
        %2296 = vmatpush1.bf16.msra.mxu0 0
        %2297 = vmatprep.subr.bf16.mxu0 0
        %2298 = vmatpush1.bf16.msra.mxu0 0
        %2299 = vmatprep.subr.bf16.mxu0 0
        %2300 = vmatpush1.bf16.msra.mxu0 0
        %2301 = vmatprep.subr.bf16.mxu0 0
        %2302 = vmatpush1.bf16.msra.mxu0 0
        %2303 = vmatprep.subr.bf16.mxu0 0
        %2304 = vmatpush1.bf16.msra.mxu0 0
        %2305 = vmatprep.subr.bf16.mxu0 0
        %2306 = vmatpush1.bf16.msra.mxu0 0
        %2307 = vmatprep.subr.bf16.mxu0 0
        %2308 = vmatpush1.bf16.msra.mxu0 0
        %2309 = vmatprep.subr.bf16.mxu0 0
        %2310 = vmatpush1.bf16.msra.mxu0 0
        %2311 = vmatprep.subr.bf16.mxu0 0
        %2312 = vmatpush1.bf16.msra.mxu0 0
        %2313 = vmatprep.subr.bf16.mxu0 0
        %2314 = vmatpush1.bf16.msra.mxu0 0
        %2315 = vmatprep.subr.bf16.mxu0 0
        %2316 = vmatpush1.bf16.msra.mxu0 0
        %2317 = vmatprep.mubr.bf16.mxu0 0
        %2318 = vmatmul.mubr.bf16.gmra.mrb[0].mxu0 %v2283
        %v2319 = vpop.f32.mrb[0].mxu0
        %v2320 = vadd.f32 %v2268, %v2319
        %v2321 = vpop.f32.mrb[0].mxu0
        %v2322 = vpop.f32.mrb[0].mxu0
        %v2323 = vpop.f32.mrb[0].mxu0
        %2324 = vdwg.mxu0
        %v2325 = vmax.f32 %v2320, 0.0
        %v2326 = vpack.c.bf16 %v2325, %v2325
        %v2327 = vld [vmem:[%s22] sm:$0xf]
        %v2328 = vld [vmem:[%s22 + $0x4] sm:$0xf]
        %v2329 = vld [vmem:[%s22 + $0x8] sm:$0xf]
        %v2330 = vld [vmem:[%s22 + $0xc] sm:$0xf]
        %v2331 = vld [vmem:[%s22 + $0x10] sm:$0xf]
        %v2332 = vld [vmem:[%s22 + $0x14] sm:$0xf]
        %v2333 = vld [vmem:[%s22 + $0x18] sm:$0xf]
        %v2334 = vld [vmem:[%s22 + $0x1c] sm:$0xf]
        %v2335 = vld [vmem:[%s23] sm:$0x1]
        %v2337 = vlaneseq
        %v2338 = vshrl.u32 %v2337, 7
        %v2339 = vsub.s32 0, %v2338
        %v2340 = vrot.slane %v2335, %v2339
        %v2350 = vunpack.c.l.b16 %v2327
        %v2351 = vunpack.c.l.b16 %v2328
        %v2352 = vunpack.c.l.b16 %v2329
        %v2353 = vunpack.c.l.b16 %v2330
        %v2354 = vunpack.c.l.b16 %v2331
        %v2355 = vunpack.c.l.b16 %v2332
        %v2356 = vunpack.c.l.b16 %v2333
        %v2357 = vunpack.c.l.b16 %v2334
        %v2358 = vpack.c.b16 %v2351, %v2350
        %v2359 = vpack.c.b16 %v2353, %v2352
        %v2360 = vpack.c.b16 %v2355, %v2354
        %v2361 = vpack.c.b16 %v2357, %v2356
        %vm2366 = vcmask 523264
        %v2368 = vsel %vm2366, %v2326, 0
        %2370 = vmatprep.subr.bf16.mxu0 0
        %2371 = vmatpush1.bf16.msra.mxu0 %v2358
        %2372 = vmatprep.subr.bf16.mxu0 0
        %2373 = vmatpush1.bf16.msra.mxu0 %v2359
        %2374 = vmatprep.subr.bf16.mxu0 0
        %2375 = vmatpush1.bf16.msra.mxu0 %v2360
        %2376 = vmatprep.subr.bf16.mxu0 0
        %2377 = vmatpush1.bf16.msra.mxu0 %v2361
        %2378 = vmatprep.subr.bf16.mxu0 0
        %2379 = vmatpush1.bf16.msra.mxu0 0
        %2380 = vmatprep.subr.bf16.mxu0 0
        %2381 = vmatpush1.bf16.msra.mxu0 0
        %2382 = vmatprep.subr.bf16.mxu0 0
        %2383 = vmatpush1.bf16.msra.mxu0 0
        %2384 = vmatprep.subr.bf16.mxu0 0
        %2385 = vmatpush1.bf16.msra.mxu0 0
        %2386 = vmatprep.subr.bf16.mxu0 0
        %2387 = vmatpush1.bf16.msra.mxu0 0
        %2388 = vmatprep.subr.bf16.mxu0 0
        %2389 = vmatpush1.bf16.msra.mxu0 0
        %2390 = vmatprep.subr.bf16.mxu0 0
        %2391 = vmatpush1.bf16.msra.mxu0 0
        %2392 = vmatprep.subr.bf16.mxu0 0
        %2393 = vmatpush1.bf16.msra.mxu0 0
        %2394 = vmatprep.subr.bf16.mxu0 0
        %2395 = vmatpush1.bf16.msra.mxu0 0
        %2396 = vmatprep.subr.bf16.mxu0 0
        %2397 = vmatpush1.bf16.msra.mxu0 0
        %2398 = vmatprep.subr.bf16.mxu0 0
        %2399 = vmatpush1.bf16.msra.mxu0 0
        %2400 = vmatprep.subr.bf16.mxu0 0
        %2401 = vmatpush1.bf16.msra.mxu0 0
        %2402 = vmatprep.mubr.bf16.mxu0 0
        %2403 = vmatmul.mubr.bf16.gmra.mrb[0].mxu0 %v2368
        %v2404 = vpop.f32.mrb[0].mxu0
        %v2405 = vadd.f32 %v2340, %v2404
        %v2406 = vpop.f32.mrb[0].mxu0
        %v2407 = vpop.f32.mrb[0].mxu0
        %v2408 = vpop.f32.mrb[0].mxu0
        %2409 = vdwg.mxu0
        %v2410 = vadd.f32 %v2221, %v2405
        %2411 = vst.msk [vmem:[%s853] sm:$0xff] %vm875, %v2410
        %s2412 = sand.u32 %s576, 1
        %s2413 = scalar_lea.sflag [#allocation4], %s2412
        %s2414 = sand.u32 %s576, 1
        %s2415 = smul.addr %s2414, 8
        %s2416 = scalar_lea.vmem [#allocation13], %s2415
        // Predicated region
        $region141: #{tpu_custom_call.1} parent=115 // pred_check
          %p2417 = pneg %p586
        $region142: #{tpu_custom_call.1} parent=115 // pred_check_branch
          %2419 = sbr.rel (%p2417) target = $region144
        $region143: #{tpu_custom_call.1} parent=115 // pred_region
          %s2421 = ssub.s32 128, 128
          %2422 = vsyncadd %s2413, %s2421
          %s2423 = smul.addr %s44, 128
          %s2424 = scalar_lea.hbm %s24, %s2423
          %s2426 = sshll.u32 %s2416, 4
          %s2427 = int_to_ptr.vmem [resolvable:$true] %s2426
          %2429 = dma.vmem_to_hbm [thread:$0]  %s2427, 128, %s2424, %s2413
        $region144: #{tpu_custom_call.1} parent=115 // pred_fallthru
          _
      $region116: #{tpu_custom_call.1} parent=5 // pred_fallthru
        _
      %p2430 = scmp.le.s32.totalorder 2, %s39
      // Predicated region
      $region145: #{tpu_custom_call.1} parent=5 // pred_check
        %p2431 = pneg %p2430
      $region146: #{tpu_custom_call.1} parent=5 // pred_check_branch
        %2433 = sbr.rel (%p2431) target = $region148
      $region147: #{tpu_custom_call.1} parent=5 // pred_region
        %s2434 = ssub.s32 %s39, 2
        // Predicated region
        $region149: #{tpu_custom_call.1} parent=147 // pred_check
          %p2435 = pneg %p592
        $region150: #{tpu_custom_call.1} parent=147 // pred_check_branch
          %2437 = sbr.rel (%p2435) target = $region152
        $region151: #{tpu_custom_call.1} parent=147 // pred_region
          %s2438 = sand.u32 %s577, 1
          %s2439 = scalar_lea.sflag [#allocation4], %s2438
          %s2440 = sand.u32 %s577, 1
          %s2441 = smul.addr %s2440, 8
          %s2442 = scalar_lea.vmem [#allocation13], %s2441
          %2443 = dma.done %s2439, 128
        $region152: #{tpu_custom_call.1} parent=147 // pred_fallthru
          _
      $region148: #{tpu_custom_call.1} parent=5 // pred_fallthru
        _
    $region6: #{tpu_custom_call.1} parent=1 // loop_footer
      %s43 = sadd.s32 1, %s39
    $region7: #{tpu_custom_call.1} parent=1 // loop_footer_branch
      %38 = sbr.rel target = $region3
    $region8: #{tpu_custom_call.1} parent=1 // loop_exit
      _
    %2444 = vsyncpa [#allocation3], 1
    %s2445 = scalar_lea.sflag [#allocation3], 1
    %2446 = vsyncpa %s2445, 1
    %2447 = vsyncpa [#allocation6], 1
    %2448 = vsyncpa [#allocation9], 1
    %2449 = vsyncpa [#allocation12], 1
    %2450 = vsyncpa [#allocation4], 1
    %s2451 = scalar_lea.sflag [#allocation4], 1
    %2452 = vsyncpa %s2451, 1

</llo_original>
